<compile_context>
chip_gen: v5e
topology: v5e:2x2
jax: 0.10.0
libtpu: 0.0.40
codegen_flags: <defaults>
</compile_context>

<pallas_src>
import functools

import jax
import jax.numpy as jnp
from jax import lax
from jax.experimental import pallas as pl
from jax.experimental.pallas import tpu as pltpu


_LAYERS = ("b1_conv", "b2_conv", "b3_conv1", "b3_conv2", "b3_conv3",
           "b4_conv1", "b4_conv2", "head")


# ------------------------------- kernel -----------------------------------

def _iconv_kernel(*refs, H, W):
    """Fused IConv forward for one image.

    refs = (x_ref, [w_mat, scale, bias] * 8, o_ref)
      x_ref : (1, Cin, H*W)    input image, flat spatial on the lane axis
      w_mat : (Cout, K*K*Cin)  conv taps flattened in (dy, dx, cin) order
      scale : (Cout, 1)        folded BN scale
      bias  : (Cout, 1)        folded BN bias
      o_ref : (1, 4*Cout, H*W)
    """
    x_ref, o_ref = refs[0], refs[-1]
    layer_refs = refs[1:-1]
    HW = H * W

    x = x_ref[0]                                            # (Cin, HW) f32

    # Column index of every flat position (to zero W-boundary wraparound).
    xx = lax.broadcasted_iota(jnp.int32, (1, HW), 1) % W
    mask_cache = {}

    def col_mask(ox):
        m = mask_cache.get(ox)
        if m is None:
            m = ((xx + ox >= 0) & (xx + ox < W)).astype(jnp.float32)
            mask_cache[ox] = m
        return m

    def shifted_taps(a, K):
        """K*K views with v[dy,dx][:, y*W+x] == a[:, (y+oy)*W+(x+ox)], 0 outside."""
        p = (K - 1) // 2
        S = p * W + p                                       # max |flat shift|
        z = jnp.zeros((a.shape[0], S), jnp.float32)
        ap = jnp.concatenate([z, a, z], axis=1)             # (C, HW + 2S)
        taps = []
        for dy in range(K):
            for dx in range(K):
                s = (dy - p) * W + (dx - p)
                v = ap[:, S + s:S + s + HW]                 # static lane slice
                if dx != p:                                 # mask W wraparound
                    v = v * col_mask(dx - p)
                taps.append(v)
        return taps

    def conv_bn_relu(a, idx, K, relu=True):
        """'same' KxK conv + folded BN (+ReLU): (Cin, HW) -> (Cout, HW)."""
        w_ref, s_ref, b_ref = layer_refs[3 * idx:3 * idx + 3]
        if K == 1:
            patches = a
        else:
            patches = jnp.concatenate(shifted_taps(a, K), axis=0)
        y = jnp.dot(w_ref[...], patches,
                    preferred_element_type=jnp.float32)     # single MXU matmul
        y = y * s_ref[...] + b_ref[...]                     # lane-dense epilogue
        if relu:
            y = jnp.maximum(y, 0.0)
        return y

    # ----- Inception_A -----
    # branch1: AvgPool2d(3,1,1), count_include_pad=True -> 9 shifted VPU adds.
    taps = shifted_taps(x, 3)
    pool = taps[0]
    for t in taps[1:]:
        pool = pool + t
    pool = pool * (1.0 / 9.0)
    out1 = conv_bn_relu(pool, 0, 1)
    # branch2: 1x1
    out2 = conv_bn_relu(x, 1, 1)
    # branch3: 1x1 -> 3x3 -> 3x3
    t3 = conv_bn_relu(x, 2, 1)
    t3 = conv_bn_relu(t3, 3, 3)
    out3 = conv_bn_relu(t3, 4, 3)
    # branch4: 1x1 -> 5x5
    t4 = conv_bn_relu(x, 5, 1)
    out4 = conv_bn_relu(t4, 6, 5)

    cat = jnp.concatenate([out1, out2, out3, out4], axis=0)  # (4*Cout, HW)
    # F.relu(cat) of the reference is idempotent here (branches end in ReLU).

    # ----- trailing BN_Conv2d(4*Cout -> 4*Cout, 3x3) -----
    o_ref[0] = conv_bn_relu(cat, 7, 3).astype(o_ref.dtype)


# ------------------------------- wrapper -----------------------------------

def iconv_forward(x_nchw, params):
    """x_nchw: (N, Cin, H, W) float32 -> (N, 4*Cout, H, W) float32."""
    n, cin, h, w = x_nchw.shape
    hw = h * w
    x = x_nchw.reshape(n, cin, hw).astype(jnp.float32)       # free reshape

    flat = []
    for name in _LAYERS:
        pp = params[name]
        flat += [pp["w_mat"], pp["scale"], pp["bias"]]
    cout_total = params["head"]["w_mat"].shape[0]

    out = pl.pallas_call(
        functools.partial(_iconv_kernel, H=h, W=w),
        out_shape=jax.ShapeDtypeStruct((n, cout_total, hw), jnp.float32),
        grid=(n,),
        in_specs=([pl.BlockSpec((1, cin, hw), lambda i: (i, 0, 0))] +
                  [pl.BlockSpec(a.shape, lambda i: (0, 0)) for a in flat]),
        out_specs=pl.BlockSpec((1, cout_total, hw), lambda i: (i, 0, 0)),
        compiler_params=pltpu.CompilerParams(
            dimension_semantics=("parallel",)),
    )(x, *flat)
    return out.reshape(n, cout_total, h, w)


# ------------------------- parameter construction --------------------------

def make_bn_conv_params(key, cin, cout, k):
    kw, kg, kb, km, kv = jax.random.split(key, 5)
    w = 0.1 * jax.random.normal(kw, (k, k, cin, cout), jnp.float32)   # HWIO
    gamma = 1.0 + 0.1 * jax.random.normal(kg, (cout,), jnp.float32)
    beta = 0.1 * jax.random.normal(kb, (cout,), jnp.float32)
    mean = 0.1 * jax.random.normal(km, (cout,), jnp.float32)
    var = 1.0 + 0.1 * jax.random.uniform(kv, (cout,), jnp.float32)
    eps = 1e-5
    scale = gamma / jnp.sqrt(var + eps)
    bias = beta - mean * scale
    # Matmul-ready weight: (Cout, K*K*Cin), taps flattened in (dy, dx, cin).
    w_mat = jnp.transpose(w, (3, 0, 1, 2)).reshape(cout, k * k * cin)
    return {"w": w, "w_mat": w_mat,
            "scale": scale.reshape(cout, 1), "bias": bias.reshape(cout, 1)}


def make_iconv_params(key, in_channels, out_channels):
    keys = jax.random.split(key, 8)
    p = {}
    p["b1_conv"] = make_bn_conv_params(keys[0], in_channels, out_channels, 1)
    p["b2_conv"] = make_bn_conv_params(keys[1], in_channels, out_channels, 1)
    p["b3_conv1"] = make_bn_conv_params(keys[2], in_channels, in_channels, 1)
    p["b3_conv2"] = make_bn_conv_params(keys[3], in_channels, out_channels, 3)
    p["b3_conv3"] = make_bn_conv_params(keys[4], out_channels, out_channels, 3)
    p["b4_conv1"] = make_bn_conv_params(keys[5], in_channels, in_channels, 1)
    p["b4_conv2"] = make_bn_conv_params(keys[6], in_channels, out_channels, 5)
    p["head"] = make_bn_conv_params(keys[7], out_channels * 4,
                                    out_channels * 4, 3)
    return p


# -------------------------- pure-JAX reference -----------------------------

def _conv_bn_relu_ref(x, pp, relu=True):
    k = pp["w"].shape[0]
    pad = (k - 1) // 2
    y = lax.conv_general_dilated(
        x, pp["w"], window_strides=(1, 1),
        padding=((pad, pad), (pad, pad)),
        dimension_numbers=("NCHW", "HWIO", "NCHW"),
        precision=lax.Precision.HIGHEST)
    y = y * pp["scale"].reshape(1, -1, 1, 1) + pp["bias"].reshape(1, -1, 1, 1)
    return jnp.maximum(y, 0.0) if relu else y


def iconv_reference(x_nchw, params):
    x = x_nchw.astype(jnp.float32)
    pool = lax.reduce_window(x, 0.0, lax.add, (1, 1, 3, 3), (1, 1, 1, 1),
                             ((0, 0), (0, 0), (1, 1), (1, 1))) / 9.0
    out1 = _conv_bn_relu_ref(pool, params["b1_conv"])
    out2 = _conv_bn_relu_ref(x, params["b2_conv"])
    out3 = _conv_bn_relu_ref(
        _conv_bn_relu_ref(
            _conv_bn_relu_ref(x, params["b3_conv1"]), params["b3_conv2"]),
        params["b3_conv3"])
    out4 = _conv_bn_relu_ref(
        _conv_bn_relu_ref(x, params["b4_conv1"]), params["b4_conv2"])
    x1 = jnp.concatenate([out1, out2, out3, out4], axis=1)
    x2 = jnp.maximum(x1, 0.0)
    return _conv_bn_relu_ref(x2, params["head"])


# --------------------------------- main -------------------------------------

if __name__ == "__main__":
    key = jax.random.PRNGKey(0)
    k_x, k_p = jax.random.split(key)

    in_channels, out_channels = 4, 4
    x = jax.random.normal(k_x, (2, in_channels, 16, 16), jnp.float32)  # NCHW
    params = make_iconv_params(k_p, in_channels, out_channels)

    y = jax.jit(iconv_forward)(x, params)
    y = jax.block_until_ready(y)

    expected_shape = (2, out_channels * 4, 16, 16)
    assert y.shape == expected_shape, (y.shape, expected_shape)
    assert bool(jnp.all(jnp.isfinite(y)))

    # Cross-check against a pure-JAX/XLA reference of the same math
    # (tolerance allows for MXU bf16-pass matmul precision).
    y_ref = jax.jit(iconv_reference)(x, params)
    max_err = float(jnp.max(jnp.abs(y - y_ref)))
    assert max_err < 5e-2, max_err

    print("KERNEL_OK")
</pallas_src>

<mosaic_0001>
module attributes {stable_mosaic.version = 11 : i64} {
  func.func @_iconv_kernel(%arg0: i32, %arg1: memref<1x4x256xf32, #tpu.memory_space<vmem>>, %arg2: memref<4x4xf32, #tpu.memory_space<vmem>>, %arg3: memref<4x1xf32, #tpu.memory_space<vmem>>, %arg4: memref<4x1xf32, #tpu.memory_space<vmem>>, %arg5: memref<4x4xf32, #tpu.memory_space<vmem>>, %arg6: memref<4x1xf32, #tpu.memory_space<vmem>>, %arg7: memref<4x1xf32, #tpu.memory_space<vmem>>, %arg8: memref<4x4xf32, #tpu.memory_space<vmem>>, %arg9: memref<4x1xf32, #tpu.memory_space<vmem>>, %arg10: memref<4x1xf32, #tpu.memory_space<vmem>>, %arg11: memref<4x36xf32, #tpu.memory_space<vmem>>, %arg12: memref<4x1xf32, #tpu.memory_space<vmem>>, %arg13: memref<4x1xf32, #tpu.memory_space<vmem>>, %arg14: memref<4x36xf32, #tpu.memory_space<vmem>>, %arg15: memref<4x1xf32, #tpu.memory_space<vmem>>, %arg16: memref<4x1xf32, #tpu.memory_space<vmem>>, %arg17: memref<4x4xf32, #tpu.memory_space<vmem>>, %arg18: memref<4x1xf32, #tpu.memory_space<vmem>>, %arg19: memref<4x1xf32, #tpu.memory_space<vmem>>, %arg20: memref<4x100xf32, #tpu.memory_space<vmem>>, %arg21: memref<4x1xf32, #tpu.memory_space<vmem>>, %arg22: memref<4x1xf32, #tpu.memory_space<vmem>>, %arg23: memref<16x144xf32, #tpu.memory_space<vmem>>, %arg24: memref<16x1xf32, #tpu.memory_space<vmem>>, %arg25: memref<16x1xf32, #tpu.memory_space<vmem>>, %arg26: memref<1x16x256xf32, #tpu.memory_space<vmem>>) attributes {dimension_semantics = [#tpu.dimension_semantics<parallel>], iteration_bounds = array<i64: 2>, scalar_prefetch = 0 : i64, scratch_operands = 0 : i64, tpu.core_type = #tpu.core_type<tc>, window_params = [{transform_indices = @transform_0, window_bounds = array<i64: 1, 4, 256>}, {pipeline_mode = #tpu.pipeline_mode<synchronous>, transform_indices = @transform_1, window_bounds = array<i64: 4, 4>}, {pipeline_mode = #tpu.pipeline_mode<synchronous>, transform_indices = @transform_2, window_bounds = array<i64: 4, 1>}, {pipeline_mode = #tpu.pipeline_mode<synchronous>, transform_indices = @transform_3, window_bounds = array<i64: 4, 1>}, {pipeline_mode = #tpu.pipeline_mode<synchronous>, transform_indices = @transform_4, window_bounds = array<i64: 4, 4>}, {pipeline_mode = #tpu.pipeline_mode<synchronous>, transform_indices = @transform_5, window_bounds = array<i64: 4, 1>}, {pipeline_mode = #tpu.pipeline_mode<synchronous>, transform_indices = @transform_6, window_bounds = array<i64: 4, 1>}, {pipeline_mode = #tpu.pipeline_mode<synchronous>, transform_indices = @transform_7, window_bounds = array<i64: 4, 4>}, {pipeline_mode = #tpu.pipeline_mode<synchronous>, transform_indices = @transform_8, window_bounds = array<i64: 4, 1>}, {pipeline_mode = #tpu.pipeline_mode<synchronous>, transform_indices = @transform_9, window_bounds = array<i64: 4, 1>}, {pipeline_mode = #tpu.pipeline_mode<synchronous>, transform_indices = @transform_10, window_bounds = array<i64: 4, 36>}, {pipeline_mode = #tpu.pipeline_mode<synchronous>, transform_indices = @transform_11, window_bounds = array<i64: 4, 1>}, {pipeline_mode = #tpu.pipeline_mode<synchronous>, transform_indices = @transform_12, window_bounds = array<i64: 4, 1>}, {pipeline_mode = #tpu.pipeline_mode<synchronous>, transform_indices = @transform_13, window_bounds = array<i64: 4, 36>}, {pipeline_mode = #tpu.pipeline_mode<synchronous>, transform_indices = @transform_14, window_bounds = array<i64: 4, 1>}, {pipeline_mode = #tpu.pipeline_mode<synchronous>, transform_indices = @transform_15, window_bounds = array<i64: 4, 1>}, {pipeline_mode = #tpu.pipeline_mode<synchronous>, transform_indices = @transform_16, window_bounds = array<i64: 4, 4>}, {pipeline_mode = #tpu.pipeline_mode<synchronous>, transform_indices = @transform_17, window_bounds = array<i64: 4, 1>}, {pipeline_mode = #tpu.pipeline_mode<synchronous>, transform_indices = @transform_18, window_bounds = array<i64: 4, 1>}, {pipeline_mode = #tpu.pipeline_mode<synchronous>, transform_indices = @transform_19, window_bounds = array<i64: 4, 100>}, {pipeline_mode = #tpu.pipeline_mode<synchronous>, transform_indices = @transform_20, window_bounds = array<i64: 4, 1>}, {pipeline_mode = #tpu.pipeline_mode<synchronous>, transform_indices = @transform_21, window_bounds = array<i64: 4, 1>}, {pipeline_mode = #tpu.pipeline_mode<synchronous>, transform_indices = @transform_22, window_bounds = array<i64: 16, 144>}, {pipeline_mode = #tpu.pipeline_mode<synchronous>, transform_indices = @transform_23, window_bounds = array<i64: 16, 1>}, {pipeline_mode = #tpu.pipeline_mode<synchronous>, transform_indices = @transform_24, window_bounds = array<i64: 16, 1>}, {transform_indices = @transform_25, window_bounds = array<i64: 1, 16, 256>}]} {
    %c0 = arith.constant 0 : index
    %c0_0 = arith.constant 0 : index
    %c0_1 = arith.constant 0 : index
    %0 = vector.load %arg1[%c0, %c0_0, %c0_1] : memref<1x4x256xf32, #tpu.memory_space<vmem>>, vector<1x4x256xf32>
    %1 = vector.shape_cast %0 : vector<1x4x256xf32> to vector<4x256xf32>
    %2 = tpu.iota {dimensions = array<i32: 1>} : vector<1x256xi32>
    %c16_i32 = arith.constant 16 : i32
    %c0_i32 = arith.constant 0 : i32
    %3 = arith.cmpi eq, %c16_i32, %c0_i32 : i32
    %c1_i32 = arith.constant 1 : i32
    %4 = arith.select %3, %c1_i32, %c16_i32 : i32
    %5 = vector.broadcast %4 : i32 to vector<1x256xi32>
    %6 = arith.remsi %2, %5 : vector<1x256xi32>
    %c0_i32_2 = arith.constant 0 : i32
    %7 = vector.broadcast %c0_i32_2 : i32 to vector<1x256xi32>
    %8 = arith.cmpi ne, %6, %7 : vector<1x256xi32>
    %c0_i32_3 = arith.constant 0 : i32
    %9 = vector.broadcast %c0_i32_3 : i32 to vector<1x256xi32>
    %10 = arith.cmpi slt, %6, %9 : vector<1x256xi32>
    %c0_i32_4 = arith.constant 0 : i32
    %11 = arith.cmpi slt, %4, %c0_i32_4 : i32
    %12 = vector.broadcast %11 : i1 to vector<1x256xi1>
    %13 = vector.broadcast %12 : vector<1x256xi1> to vector<1x256xi1>
    %14 = arith.xori %10, %13 : vector<1x256xi1>
    %15 = arith.andi %14, %8 : vector<1x256xi1>
    %16 = vector.broadcast %4 : i32 to vector<1x256xi32>
    %17 = arith.addi %6, %16 : vector<1x256xi32>
    %18 = arith.select %15, %17, %6 : vector<1x256xi1>, vector<1x256xi32>
    %cst = arith.constant 0.000000e+00 : f32
    %19 = vector.broadcast %cst : f32 to vector<4x17xf32>
    %20 = tpu.concatenate %19, %1, %19 in 1 : vector<4x17xf32>, vector<4x256xf32>, vector<4x17xf32> -> vector<4x290xf32>
    %21 = vector.extract_strided_slice %20 {offsets = [0, 0], sizes = [4, 256], strides = [1, 1]} : vector<4x290xf32> to vector<4x256xf32>
    %c-1_i32 = arith.constant -1 : i32
    %22 = vector.broadcast %c-1_i32 : i32 to vector<1x256xi32>
    %23 = arith.addi %18, %22 : vector<1x256xi32>
    %c0_i32_5 = arith.constant 0 : i32
    %24 = vector.broadcast %c0_i32_5 : i32 to vector<1x256xi32>
    %25 = arith.cmpi sge, %23, %24 : vector<1x256xi32>
    %c-1_i32_6 = arith.constant -1 : i32
    %26 = vector.broadcast %c-1_i32_6 : i32 to vector<1x256xi32>
    %27 = arith.addi %18, %26 : vector<1x256xi32>
    %c16_i32_7 = arith.constant 16 : i32
    %28 = vector.broadcast %c16_i32_7 : i32 to vector<1x256xi32>
    %29 = arith.cmpi slt, %27, %28 : vector<1x256xi32>
    %30 = arith.andi %25, %29 : vector<1x256xi1>
    %31 = arith.extui %30 : vector<1x256xi1> to vector<1x256xi32>
    %32 = arith.sitofp %31 : vector<1x256xi32> to vector<1x256xf32>
    %33 = vector.broadcast %32 : vector<1x256xf32> to vector<4x256xf32>
    %34 = arith.mulf %21, %33 : vector<4x256xf32>
    %35 = vector.extract_strided_slice %20 {offsets = [0, 1], sizes = [4, 256], strides = [1, 1]} : vector<4x290xf32> to vector<4x256xf32>
    %36 = vector.extract_strided_slice %20 {offsets = [0, 2], sizes = [4, 256], strides = [1, 1]} : vector<4x290xf32> to vector<4x256xf32>
    %c1_i32_8 = arith.constant 1 : i32
    %37 = vector.broadcast %c1_i32_8 : i32 to vector<1x256xi32>
    %38 = arith.addi %18, %37 : vector<1x256xi32>
    %c0_i32_9 = arith.constant 0 : i32
    %39 = vector.broadcast %c0_i32_9 : i32 to vector<1x256xi32>
    %40 = arith.cmpi sge, %38, %39 : vector<1x256xi32>
    %c1_i32_10 = arith.constant 1 : i32
    %41 = vector.broadcast %c1_i32_10 : i32 to vector<1x256xi32>
    %42 = arith.addi %18, %41 : vector<1x256xi32>
    %c16_i32_11 = arith.constant 16 : i32
    %43 = vector.broadcast %c16_i32_11 : i32 to vector<1x256xi32>
    %44 = arith.cmpi slt, %42, %43 : vector<1x256xi32>
    %45 = arith.andi %40, %44 : vector<1x256xi1>
    %46 = arith.extui %45 : vector<1x256xi1> to vector<1x256xi32>
    %47 = arith.sitofp %46 : vector<1x256xi32> to vector<1x256xf32>
    %48 = vector.broadcast %47 : vector<1x256xf32> to vector<4x256xf32>
    %49 = arith.mulf %36, %48 : vector<4x256xf32>
    %50 = vector.extract_strided_slice %20 {offsets = [0, 16], sizes = [4, 256], strides = [1, 1]} : vector<4x290xf32> to vector<4x256xf32>
    %51 = vector.broadcast %32 : vector<1x256xf32> to vector<4x256xf32>
    %52 = arith.mulf %50, %51 : vector<4x256xf32>
    %53 = vector.extract_strided_slice %20 {offsets = [0, 17], sizes = [4, 256], strides = [1, 1]} : vector<4x290xf32> to vector<4x256xf32>
    %54 = vector.extract_strided_slice %20 {offsets = [0, 18], sizes = [4, 256], strides = [1, 1]} : vector<4x290xf32> to vector<4x256xf32>
    %55 = vector.broadcast %47 : vector<1x256xf32> to vector<4x256xf32>
    %56 = arith.mulf %54, %55 : vector<4x256xf32>
    %57 = vector.extract_strided_slice %20 {offsets = [0, 32], sizes = [4, 256], strides = [1, 1]} : vector<4x290xf32> to vector<4x256xf32>
    %58 = vector.broadcast %32 : vector<1x256xf32> to vector<4x256xf32>
    %59 = arith.mulf %57, %58 : vector<4x256xf32>
    %60 = vector.extract_strided_slice %20 {offsets = [0, 33], sizes = [4, 256], strides = [1, 1]} : vector<4x290xf32> to vector<4x256xf32>
    %61 = vector.extract_strided_slice %20 {offsets = [0, 34], sizes = [4, 256], strides = [1, 1]} : vector<4x290xf32> to vector<4x256xf32>
    %62 = vector.broadcast %47 : vector<1x256xf32> to vector<4x256xf32>
    %63 = arith.mulf %61, %62 : vector<4x256xf32>
    %64 = arith.addf %34, %35 : vector<4x256xf32>
    %65 = arith.addf %64, %49 : vector<4x256xf32>
    %66 = arith.addf %65, %52 : vector<4x256xf32>
    %67 = arith.addf %66, %53 : vector<4x256xf32>
    %68 = arith.addf %67, %56 : vector<4x256xf32>
    %69 = arith.addf %68, %59 : vector<4x256xf32>
    %70 = arith.addf %69, %60 : vector<4x256xf32>
    %71 = arith.addf %70, %63 : vector<4x256xf32>
    %cst_12 = arith.constant 0.111111112 : f32
    %72 = vector.broadcast %cst_12 : f32 to vector<4x256xf32>
    %73 = arith.mulf %71, %72 : vector<4x256xf32>
    %c0_13 = arith.constant 0 : index
    %c0_14 = arith.constant 0 : index
    %74 = vector.load %arg2[%c0_13, %c0_14] : memref<4x4xf32, #tpu.memory_space<vmem>>, vector<4x4xf32>
    %cst_15 = arith.constant dense<0.000000e+00> : vector<4x256xf32>
    %75 = tpu.matmul %74, %73, %cst_15 {dimension_numbers = #tpu.dot_dimension_numbers<[1], [0], [0], [1], [0, 0, 1, 1], [], []>} : vector<4x4xf32>, vector<4x256xf32>, vector<4x256xf32> -> vector<4x256xf32>
    %c0_16 = arith.constant 0 : index
    %c0_17 = arith.constant 0 : index
    %76 = vector.load %arg3[%c0_16, %c0_17] : memref<4x1xf32, #tpu.memory_space<vmem>>, vector<4x1xf32>
    %77 = vector.broadcast %76 : vector<4x1xf32> to vector<4x256xf32>
    %78 = arith.mulf %75, %77 : vector<4x256xf32>
    %c0_18 = arith.constant 0 : index
    %c0_19 = arith.constant 0 : index
    %79 = vector.load %arg4[%c0_18, %c0_19] : memref<4x1xf32, #tpu.memory_space<vmem>>, vector<4x1xf32>
    %80 = vector.broadcast %79 : vector<4x1xf32> to vector<4x256xf32>
    %81 = arith.addf %78, %80 : vector<4x256xf32>
    %cst_20 = arith.constant 0.000000e+00 : f32
    %82 = vector.broadcast %cst_20 : f32 to vector<4x256xf32>
    %83 = arith.maximumf %81, %82 : vector<4x256xf32>
    %c0_21 = arith.constant 0 : index
    %c0_22 = arith.constant 0 : index
    %84 = vector.load %arg5[%c0_21, %c0_22] : memref<4x4xf32, #tpu.memory_space<vmem>>, vector<4x4xf32>
    %cst_23 = arith.constant dense<0.000000e+00> : vector<4x256xf32>
    %85 = tpu.matmul %84, %1, %cst_23 {dimension_numbers = #tpu.dot_dimension_numbers<[1], [0], [0], [1], [0, 0, 1, 1], [], []>} : vector<4x4xf32>, vector<4x256xf32>, vector<4x256xf32> -> vector<4x256xf32>
    %c0_24 = arith.constant 0 : index
    %c0_25 = arith.constant 0 : index
    %86 = vector.load %arg6[%c0_24, %c0_25] : memref<4x1xf32, #tpu.memory_space<vmem>>, vector<4x1xf32>
    %87 = vector.broadcast %86 : vector<4x1xf32> to vector<4x256xf32>
    %88 = arith.mulf %85, %87 : vector<4x256xf32>
    %c0_26 = arith.constant 0 : index
    %c0_27 = arith.constant 0 : index
    %89 = vector.load %arg7[%c0_26, %c0_27] : memref<4x1xf32, #tpu.memory_space<vmem>>, vector<4x1xf32>
    %90 = vector.broadcast %89 : vector<4x1xf32> to vector<4x256xf32>
    %91 = arith.addf %88, %90 : vector<4x256xf32>
    %cst_28 = arith.constant 0.000000e+00 : f32
    %92 = vector.broadcast %cst_28 : f32 to vector<4x256xf32>
    %93 = arith.maximumf %91, %92 : vector<4x256xf32>
    %c0_29 = arith.constant 0 : index
    %c0_30 = arith.constant 0 : index
    %94 = vector.load %arg8[%c0_29, %c0_30] : memref<4x4xf32, #tpu.memory_space<vmem>>, vector<4x4xf32>
    %cst_31 = arith.constant dense<0.000000e+00> : vector<4x256xf32>
    %95 = tpu.matmul %94, %1, %cst_31 {dimension_numbers = #tpu.dot_dimension_numbers<[1], [0], [0], [1], [0, 0, 1, 1], [], []>} : vector<4x4xf32>, vector<4x256xf32>, vector<4x256xf32> -> vector<4x256xf32>
    %c0_32 = arith.constant 0 : index
    %c0_33 = arith.constant 0 : index
    %96 = vector.load %arg9[%c0_32, %c0_33] : memref<4x1xf32, #tpu.memory_space<vmem>>, vector<4x1xf32>
    %97 = vector.broadcast %96 : vector<4x1xf32> to vector<4x256xf32>
    %98 = arith.mulf %95, %97 : vector<4x256xf32>
    %c0_34 = arith.constant 0 : index
    %c0_35 = arith.constant 0 : index
    %99 = vector.load %arg10[%c0_34, %c0_35] : memref<4x1xf32, #tpu.memory_space<vmem>>, vector<4x1xf32>
    %100 = vector.broadcast %99 : vector<4x1xf32> to vector<4x256xf32>
    %101 = arith.addf %98, %100 : vector<4x256xf32>
    %cst_36 = arith.constant 0.000000e+00 : f32
    %102 = vector.broadcast %cst_36 : f32 to vector<4x256xf32>
    %103 = arith.maximumf %101, %102 : vector<4x256xf32>
    %cst_37 = arith.constant 0.000000e+00 : f32
    %104 = vector.broadcast %cst_37 : f32 to vector<4x17xf32>
    %105 = tpu.concatenate %104, %103, %104 in 1 : vector<4x17xf32>, vector<4x256xf32>, vector<4x17xf32> -> vector<4x290xf32>
    %106 = vector.extract_strided_slice %105 {offsets = [0, 0], sizes = [4, 256], strides = [1, 1]} : vector<4x290xf32> to vector<4x256xf32>
    %107 = vector.broadcast %32 : vector<1x256xf32> to vector<4x256xf32>
    %108 = arith.mulf %106, %107 : vector<4x256xf32>
    %109 = vector.extract_strided_slice %105 {offsets = [0, 1], sizes = [4, 256], strides = [1, 1]} : vector<4x290xf32> to vector<4x256xf32>
    %110 = vector.extract_strided_slice %105 {offsets = [0, 2], sizes = [4, 256], strides = [1, 1]} : vector<4x290xf32> to vector<4x256xf32>
    %111 = vector.broadcast %47 : vector<1x256xf32> to vector<4x256xf32>
    %112 = arith.mulf %110, %111 : vector<4x256xf32>
    %113 = vector.extract_strided_slice %105 {offsets = [0, 16], sizes = [4, 256], strides = [1, 1]} : vector<4x290xf32> to vector<4x256xf32>
    %114 = vector.broadcast %32 : vector<1x256xf32> to vector<4x256xf32>
    %115 = arith.mulf %113, %114 : vector<4x256xf32>
    %116 = vector.extract_strided_slice %105 {offsets = [0, 17], sizes = [4, 256], strides = [1, 1]} : vector<4x290xf32> to vector<4x256xf32>
    %117 = vector.extract_strided_slice %105 {offsets = [0, 18], sizes = [4, 256], strides = [1, 1]} : vector<4x290xf32> to vector<4x256xf32>
    %118 = vector.broadcast %47 : vector<1x256xf32> to vector<4x256xf32>
    %119 = arith.mulf %117, %118 : vector<4x256xf32>
    %120 = vector.extract_strided_slice %105 {offsets = [0, 32], sizes = [4, 256], strides = [1, 1]} : vector<4x290xf32> to vector<4x256xf32>
    %121 = vector.broadcast %32 : vector<1x256xf32> to vector<4x256xf32>
    %122 = arith.mulf %120, %121 : vector<4x256xf32>
    %123 = vector.extract_strided_slice %105 {offsets = [0, 33], sizes = [4, 256], strides = [1, 1]} : vector<4x290xf32> to vector<4x256xf32>
    %124 = vector.extract_strided_slice %105 {offsets = [0, 34], sizes = [4, 256], strides = [1, 1]} : vector<4x290xf32> to vector<4x256xf32>
    %125 = vector.broadcast %47 : vector<1x256xf32> to vector<4x256xf32>
    %126 = arith.mulf %124, %125 : vector<4x256xf32>
    %127 = tpu.concatenate %108, %109, %112, %115, %116, %119, %122, %123, %126 in 0 : vector<4x256xf32>, vector<4x256xf32>, vector<4x256xf32>, vector<4x256xf32>, vector<4x256xf32>, vector<4x256xf32>, vector<4x256xf32>, vector<4x256xf32>, vector<4x256xf32> -> vector<36x256xf32>
    %c0_38 = arith.constant 0 : index
    %c0_39 = arith.constant 0 : index
    %128 = vector.load %arg11[%c0_38, %c0_39] : memref<4x36xf32, #tpu.memory_space<vmem>>, vector<4x36xf32>
    %cst_40 = arith.constant dense<0.000000e+00> : vector<4x256xf32>
    %129 = tpu.matmul %128, %127, %cst_40 {dimension_numbers = #tpu.dot_dimension_numbers<[1], [0], [0], [1], [0, 0, 1, 1], [], []>} : vector<4x36xf32>, vector<36x256xf32>, vector<4x256xf32> -> vector<4x256xf32>
    %c0_41 = arith.constant 0 : index
    %c0_42 = arith.constant 0 : index
    %130 = vector.load %arg12[%c0_41, %c0_42] : memref<4x1xf32, #tpu.memory_space<vmem>>, vector<4x1xf32>
    %131 = vector.broadcast %130 : vector<4x1xf32> to vector<4x256xf32>
    %132 = arith.mulf %129, %131 : vector<4x256xf32>
    %c0_43 = arith.constant 0 : index
    %c0_44 = arith.constant 0 : index
    %133 = vector.load %arg13[%c0_43, %c0_44] : memref<4x1xf32, #tpu.memory_space<vmem>>, vector<4x1xf32>
    %134 = vector.broadcast %133 : vector<4x1xf32> to vector<4x256xf32>
    %135 = arith.addf %132, %134 : vector<4x256xf32>
    %cst_45 = arith.constant 0.000000e+00 : f32
    %136 = vector.broadcast %cst_45 : f32 to vector<4x256xf32>
    %137 = arith.maximumf %135, %136 : vector<4x256xf32>
    %cst_46 = arith.constant 0.000000e+00 : f32
    %138 = vector.broadcast %cst_46 : f32 to vector<4x17xf32>
    %139 = tpu.concatenate %138, %137, %138 in 1 : vector<4x17xf32>, vector<4x256xf32>, vector<4x17xf32> -> vector<4x290xf32>
    %140 = vector.extract_strided_slice %139 {offsets = [0, 0], sizes = [4, 256], strides = [1, 1]} : vector<4x290xf32> to vector<4x256xf32>
    %141 = vector.broadcast %32 : vector<1x256xf32> to vector<4x256xf32>
    %142 = arith.mulf %140, %141 : vector<4x256xf32>
    %143 = vector.extract_strided_slice %139 {offsets = [0, 1], sizes = [4, 256], strides = [1, 1]} : vector<4x290xf32> to vector<4x256xf32>
    %144 = vector.extract_strided_slice %139 {offsets = [0, 2], sizes = [4, 256], strides = [1, 1]} : vector<4x290xf32> to vector<4x256xf32>
    %145 = vector.broadcast %47 : vector<1x256xf32> to vector<4x256xf32>
    %146 = arith.mulf %144, %145 : vector<4x256xf32>
    %147 = vector.extract_strided_slice %139 {offsets = [0, 16], sizes = [4, 256], strides = [1, 1]} : vector<4x290xf32> to vector<4x256xf32>
    %148 = vector.broadcast %32 : vector<1x256xf32> to vector<4x256xf32>
    %149 = arith.mulf %147, %148 : vector<4x256xf32>
    %150 = vector.extract_strided_slice %139 {offsets = [0, 17], sizes = [4, 256], strides = [1, 1]} : vector<4x290xf32> to vector<4x256xf32>
    %151 = vector.extract_strided_slice %139 {offsets = [0, 18], sizes = [4, 256], strides = [1, 1]} : vector<4x290xf32> to vector<4x256xf32>
    %152 = vector.broadcast %47 : vector<1x256xf32> to vector<4x256xf32>
    %153 = arith.mulf %151, %152 : vector<4x256xf32>
    %154 = vector.extract_strided_slice %139 {offsets = [0, 32], sizes = [4, 256], strides = [1, 1]} : vector<4x290xf32> to vector<4x256xf32>
    %155 = vector.broadcast %32 : vector<1x256xf32> to vector<4x256xf32>
    %156 = arith.mulf %154, %155 : vector<4x256xf32>
    %157 = vector.extract_strided_slice %139 {offsets = [0, 33], sizes = [4, 256], strides = [1, 1]} : vector<4x290xf32> to vector<4x256xf32>
    %158 = vector.extract_strided_slice %139 {offsets = [0, 34], sizes = [4, 256], strides = [1, 1]} : vector<4x290xf32> to vector<4x256xf32>
    %159 = vector.broadcast %47 : vector<1x256xf32> to vector<4x256xf32>
    %160 = arith.mulf %158, %159 : vector<4x256xf32>
    %161 = tpu.concatenate %142, %143, %146, %149, %150, %153, %156, %157, %160 in 0 : vector<4x256xf32>, vector<4x256xf32>, vector<4x256xf32>, vector<4x256xf32>, vector<4x256xf32>, vector<4x256xf32>, vector<4x256xf32>, vector<4x256xf32>, vector<4x256xf32> -> vector<36x256xf32>
    %c0_47 = arith.constant 0 : index
    %c0_48 = arith.constant 0 : index
    %162 = vector.load %arg14[%c0_47, %c0_48] : memref<4x36xf32, #tpu.memory_space<vmem>>, vector<4x36xf32>
    %cst_49 = arith.constant dense<0.000000e+00> : vector<4x256xf32>
    %163 = tpu.matmul %162, %161, %cst_49 {dimension_numbers = #tpu.dot_dimension_numbers<[1], [0], [0], [1], [0, 0, 1, 1], [], []>} : vector<4x36xf32>, vector<36x256xf32>, vector<4x256xf32> -> vector<4x256xf32>
    %c0_50 = arith.constant 0 : index
    %c0_51 = arith.constant 0 : index
    %164 = vector.load %arg15[%c0_50, %c0_51] : memref<4x1xf32, #tpu.memory_space<vmem>>, vector<4x1xf32>
    %165 = vector.broadcast %164 : vector<4x1xf32> to vector<4x256xf32>
    %166 = arith.mulf %163, %165 : vector<4x256xf32>
    %c0_52 = arith.constant 0 : index
    %c0_53 = arith.constant 0 : index
    %167 = vector.load %arg16[%c0_52, %c0_53] : memref<4x1xf32, #tpu.memory_space<vmem>>, vector<4x1xf32>
    %168 = vector.broadcast %167 : vector<4x1xf32> to vector<4x256xf32>
    %169 = arith.addf %166, %168 : vector<4x256xf32>
    %cst_54 = arith.constant 0.000000e+00 : f32
    %170 = vector.broadcast %cst_54 : f32 to vector<4x256xf32>
    %171 = arith.maximumf %169, %170 : vector<4x256xf32>
    %c0_55 = arith.constant 0 : index
    %c0_56 = arith.constant 0 : index
    %172 = vector.load %arg17[%c0_55, %c0_56] : memref<4x4xf32, #tpu.memory_space<vmem>>, vector<4x4xf32>
    %cst_57 = arith.constant dense<0.000000e+00> : vector<4x256xf32>
    %173 = tpu.matmul %172, %1, %cst_57 {dimension_numbers = #tpu.dot_dimension_numbers<[1], [0], [0], [1], [0, 0, 1, 1], [], []>} : vector<4x4xf32>, vector<4x256xf32>, vector<4x256xf32> -> vector<4x256xf32>
    %c0_58 = arith.constant 0 : index
    %c0_59 = arith.constant 0 : index
    %174 = vector.load %arg18[%c0_58, %c0_59] : memref<4x1xf32, #tpu.memory_space<vmem>>, vector<4x1xf32>
    %175 = vector.broadcast %174 : vector<4x1xf32> to vector<4x256xf32>
    %176 = arith.mulf %173, %175 : vector<4x256xf32>
    %c0_60 = arith.constant 0 : index
    %c0_61 = arith.constant 0 : index
    %177 = vector.load %arg19[%c0_60, %c0_61] : memref<4x1xf32, #tpu.memory_space<vmem>>, vector<4x1xf32>
    %178 = vector.broadcast %177 : vector<4x1xf32> to vector<4x256xf32>
    %179 = arith.addf %176, %178 : vector<4x256xf32>
    %cst_62 = arith.constant 0.000000e+00 : f32
    %180 = vector.broadcast %cst_62 : f32 to vector<4x256xf32>
    %181 = arith.maximumf %179, %180 : vector<4x256xf32>
    %cst_63 = arith.constant 0.000000e+00 : f32
    %182 = vector.broadcast %cst_63 : f32 to vector<4x34xf32>
    %183 = tpu.concatenate %182, %181, %182 in 1 : vector<4x34xf32>, vector<4x256xf32>, vector<4x34xf32> -> vector<4x324xf32>
    %184 = vector.extract_strided_slice %183 {offsets = [0, 0], sizes = [4, 256], strides = [1, 1]} : vector<4x324xf32> to vector<4x256xf32>
    %c-2_i32 = arith.constant -2 : i32
    %185 = vector.broadcast %c-2_i32 : i32 to vector<1x256xi32>
    %186 = arith.addi %18, %185 : vector<1x256xi32>
    %c0_i32_64 = arith.constant 0 : i32
    %187 = vector.broadcast %c0_i32_64 : i32 to vector<1x256xi32>
    %188 = arith.cmpi sge, %186, %187 : vector<1x256xi32>
    %c-2_i32_65 = arith.constant -2 : i32
    %189 = vector.broadcast %c-2_i32_65 : i32 to vector<1x256xi32>
    %190 = arith.addi %18, %189 : vector<1x256xi32>
    %c16_i32_66 = arith.constant 16 : i32
    %191 = vector.broadcast %c16_i32_66 : i32 to vector<1x256xi32>
    %192 = arith.cmpi slt, %190, %191 : vector<1x256xi32>
    %193 = arith.andi %188, %192 : vector<1x256xi1>
    %194 = arith.extui %193 : vector<1x256xi1> to vector<1x256xi32>
    %195 = arith.sitofp %194 : vector<1x256xi32> to vector<1x256xf32>
    %196 = vector.broadcast %195 : vector<1x256xf32> to vector<4x256xf32>
    %197 = arith.mulf %184, %196 : vector<4x256xf32>
    %198 = vector.extract_strided_slice %183 {offsets = [0, 1], sizes = [4, 256], strides = [1, 1]} : vector<4x324xf32> to vector<4x256xf32>
    %199 = vector.broadcast %32 : vector<1x256xf32> to vector<4x256xf32>
    %200 = arith.mulf %198, %199 : vector<4x256xf32>
    %201 = vector.extract_strided_slice %183 {offsets = [0, 2], sizes = [4, 256], strides = [1, 1]} : vector<4x324xf32> to vector<4x256xf32>
    %202 = vector.extract_strided_slice %183 {offsets = [0, 3], sizes = [4, 256], strides = [1, 1]} : vector<4x324xf32> to vector<4x256xf32>
    %203 = vector.broadcast %47 : vector<1x256xf32> to vector<4x256xf32>
    %204 = arith.mulf %202, %203 : vector<4x256xf32>
    %205 = vector.extract_strided_slice %183 {offsets = [0, 4], sizes = [4, 256], strides = [1, 1]} : vector<4x324xf32> to vector<4x256xf32>
    %c2_i32 = arith.constant 2 : i32
    %206 = vector.broadcast %c2_i32 : i32 to vector<1x256xi32>
    %207 = arith.addi %18, %206 : vector<1x256xi32>
    %c0_i32_67 = arith.constant 0 : i32
    %208 = vector.broadcast %c0_i32_67 : i32 to vector<1x256xi32>
    %209 = arith.cmpi sge, %207, %208 : vector<1x256xi32>
    %c2_i32_68 = arith.constant 2 : i32
    %210 = vector.broadcast %c2_i32_68 : i32 to vector<1x256xi32>
    %211 = arith.addi %18, %210 : vector<1x256xi32>
    %c16_i32_69 = arith.constant 16 : i32
    %212 = vector.broadcast %c16_i32_69 : i32 to vector<1x256xi32>
    %213 = arith.cmpi slt, %211, %212 : vector<1x256xi32>
    %214 = arith.andi %209, %213 : vector<1x256xi1>
    %215 = arith.extui %214 : vector<1x256xi1> to vector<1x256xi32>
    %216 = arith.sitofp %215 : vector<1x256xi32> to vector<1x256xf32>
    %217 = vector.broadcast %216 : vector<1x256xf32> to vector<4x256xf32>
    %218 = arith.mulf %205, %217 : vector<4x256xf32>
    %219 = vector.extract_strided_slice %183 {offsets = [0, 16], sizes = [4, 256], strides = [1, 1]} : vector<4x324xf32> to vector<4x256xf32>
    %220 = vector.broadcast %195 : vector<1x256xf32> to vector<4x256xf32>
    %221 = arith.mulf %219, %220 : vector<4x256xf32>
    %222 = vector.extract_strided_slice %183 {offsets = [0, 17], sizes = [4, 256], strides = [1, 1]} : vector<4x324xf32> to vector<4x256xf32>
    %223 = vector.broadcast %32 : vector<1x256xf32> to vector<4x256xf32>
    %224 = arith.mulf %222, %223 : vector<4x256xf32>
    %225 = vector.extract_strided_slice %183 {offsets = [0, 18], sizes = [4, 256], strides = [1, 1]} : vector<4x324xf32> to vector<4x256xf32>
    %226 = vector.extract_strided_slice %183 {offsets = [0, 19], sizes = [4, 256], strides = [1, 1]} : vector<4x324xf32> to vector<4x256xf32>
    %227 = vector.broadcast %47 : vector<1x256xf32> to vector<4x256xf32>
    %228 = arith.mulf %226, %227 : vector<4x256xf32>
    %229 = vector.extract_strided_slice %183 {offsets = [0, 20], sizes = [4, 256], strides = [1, 1]} : vector<4x324xf32> to vector<4x256xf32>
    %230 = vector.broadcast %216 : vector<1x256xf32> to vector<4x256xf32>
    %231 = arith.mulf %229, %230 : vector<4x256xf32>
    %232 = vector.extract_strided_slice %183 {offsets = [0, 32], sizes = [4, 256], strides = [1, 1]} : vector<4x324xf32> to vector<4x256xf32>
    %233 = vector.broadcast %195 : vector<1x256xf32> to vector<4x256xf32>
    %234 = arith.mulf %232, %233 : vector<4x256xf32>
    %235 = vector.extract_strided_slice %183 {offsets = [0, 33], sizes = [4, 256], strides = [1, 1]} : vector<4x324xf32> to vector<4x256xf32>
    %236 = vector.broadcast %32 : vector<1x256xf32> to vector<4x256xf32>
    %237 = arith.mulf %235, %236 : vector<4x256xf32>
    %238 = vector.extract_strided_slice %183 {offsets = [0, 34], sizes = [4, 256], strides = [1, 1]} : vector<4x324xf32> to vector<4x256xf32>
    %239 = vector.extract_strided_slice %183 {offsets = [0, 35], sizes = [4, 256], strides = [1, 1]} : vector<4x324xf32> to vector<4x256xf32>
    %240 = vector.broadcast %47 : vector<1x256xf32> to vector<4x256xf32>
    %241 = arith.mulf %239, %240 : vector<4x256xf32>
    %242 = vector.extract_strided_slice %183 {offsets = [0, 36], sizes = [4, 256], strides = [1, 1]} : vector<4x324xf32> to vector<4x256xf32>
    %243 = vector.broadcast %216 : vector<1x256xf32> to vector<4x256xf32>
    %244 = arith.mulf %242, %243 : vector<4x256xf32>
    %245 = vector.extract_strided_slice %183 {offsets = [0, 48], sizes = [4, 256], strides = [1, 1]} : vector<4x324xf32> to vector<4x256xf32>
    %246 = vector.broadcast %195 : vector<1x256xf32> to vector<4x256xf32>
    %247 = arith.mulf %245, %246 : vector<4x256xf32>
    %248 = vector.extract_strided_slice %183 {offsets = [0, 49], sizes = [4, 256], strides = [1, 1]} : vector<4x324xf32> to vector<4x256xf32>
    %249 = vector.broadcast %32 : vector<1x256xf32> to vector<4x256xf32>
    %250 = arith.mulf %248, %249 : vector<4x256xf32>
    %251 = vector.extract_strided_slice %183 {offsets = [0, 50], sizes = [4, 256], strides = [1, 1]} : vector<4x324xf32> to vector<4x256xf32>
    %252 = vector.extract_strided_slice %183 {offsets = [0, 51], sizes = [4, 256], strides = [1, 1]} : vector<4x324xf32> to vector<4x256xf32>
    %253 = vector.broadcast %47 : vector<1x256xf32> to vector<4x256xf32>
    %254 = arith.mulf %252, %253 : vector<4x256xf32>
    %255 = vector.extract_strided_slice %183 {offsets = [0, 52], sizes = [4, 256], strides = [1, 1]} : vector<4x324xf32> to vector<4x256xf32>
    %256 = vector.broadcast %216 : vector<1x256xf32> to vector<4x256xf32>
    %257 = arith.mulf %255, %256 : vector<4x256xf32>
    %258 = vector.extract_strided_slice %183 {offsets = [0, 64], sizes = [4, 256], strides = [1, 1]} : vector<4x324xf32> to vector<4x256xf32>
    %259 = vector.broadcast %195 : vector<1x256xf32> to vector<4x256xf32>
    %260 = arith.mulf %258, %259 : vector<4x256xf32>
    %261 = vector.extract_strided_slice %183 {offsets = [0, 65], sizes = [4, 256], strides = [1, 1]} : vector<4x324xf32> to vector<4x256xf32>
    %262 = vector.broadcast %32 : vector<1x256xf32> to vector<4x256xf32>
    %263 = arith.mulf %261, %262 : vector<4x256xf32>
    %264 = vector.extract_strided_slice %183 {offsets = [0, 66], sizes = [4, 256], strides = [1, 1]} : vector<4x324xf32> to vector<4x256xf32>
    %265 = vector.extract_strided_slice %183 {offsets = [0, 67], sizes = [4, 256], strides = [1, 1]} : vector<4x324xf32> to vector<4x256xf32>
    %266 = vector.broadcast %47 : vector<1x256xf32> to vector<4x256xf32>
    %267 = arith.mulf %265, %266 : vector<4x256xf32>
    %268 = vector.extract_strided_slice %183 {offsets = [0, 68], sizes = [4, 256], strides = [1, 1]} : vector<4x324xf32> to vector<4x256xf32>
    %269 = vector.broadcast %216 : vector<1x256xf32> to vector<4x256xf32>
    %270 = arith.mulf %268, %269 : vector<4x256xf32>
    %271 = tpu.concatenate %197, %200, %201, %204, %218, %221, %224, %225, %228, %231, %234, %237, %238, %241, %244, %247 in 0 : vector<4x256xf32>, vector<4x256xf32>, vector<4x256xf32>, vector<4x256xf32>, vector<4x256xf32>, vector<4x256xf32>, vector<4x256xf32>, vector<4x256xf32>, vector<4x256xf32>, vector<4x256xf32>, vector<4x256xf32>, vector<4x256xf32>, vector<4x256xf32>, vector<4x256xf32>, vector<4x256xf32>, vector<4x256xf32> -> vector<64x256xf32>
    %272 = tpu.concatenate %250, %251, %254, %257, %260, %263, %264, %267, %270 in 0 : vector<4x256xf32>, vector<4x256xf32>, vector<4x256xf32>, vector<4x256xf32>, vector<4x256xf32>, vector<4x256xf32>, vector<4x256xf32>, vector<4x256xf32>, vector<4x256xf32> -> vector<36x256xf32>
    %273 = tpu.concatenate %271, %272 in 0 : vector<64x256xf32>, vector<36x256xf32> -> vector<100x256xf32>
    %c0_70 = arith.constant 0 : index
    %c0_71 = arith.constant 0 : index
    %274 = vector.load %arg20[%c0_70, %c0_71] : memref<4x100xf32, #tpu.memory_space<vmem>>, vector<4x100xf32>
    %cst_72 = arith.constant dense<0.000000e+00> : vector<4x256xf32>
    %275 = tpu.matmul %274, %273, %cst_72 {dimension_numbers = #tpu.dot_dimension_numbers<[1], [0], [0], [1], [0, 0, 1, 1], [], []>} : vector<4x100xf32>, vector<100x256xf32>, vector<4x256xf32> -> vector<4x256xf32>
    %c0_73 = arith.constant 0 : index
    %c0_74 = arith.constant 0 : index
    %276 = vector.load %arg21[%c0_73, %c0_74] : memref<4x1xf32, #tpu.memory_space<vmem>>, vector<4x1xf32>
    %277 = vector.broadcast %276 : vector<4x1xf32> to vector<4x256xf32>
    %278 = arith.mulf %275, %277 : vector<4x256xf32>
    %c0_75 = arith.constant 0 : index
    %c0_76 = arith.constant 0 : index
    %279 = vector.load %arg22[%c0_75, %c0_76] : memref<4x1xf32, #tpu.memory_space<vmem>>, vector<4x1xf32>
    %280 = vector.broadcast %279 : vector<4x1xf32> to vector<4x256xf32>
    %281 = arith.addf %278, %280 : vector<4x256xf32>
    %cst_77 = arith.constant 0.000000e+00 : f32
    %282 = vector.broadcast %cst_77 : f32 to vector<4x256xf32>
    %283 = arith.maximumf %281, %282 : vector<4x256xf32>
    %284 = tpu.concatenate %83, %93, %171, %283 in 0 : vector<4x256xf32>, vector<4x256xf32>, vector<4x256xf32>, vector<4x256xf32> -> vector<16x256xf32>
    %cst_78 = arith.constant 0.000000e+00 : f32
    %285 = vector.broadcast %cst_78 : f32 to vector<16x17xf32>
    %286 = tpu.concatenate %285, %284, %285 in 1 : vector<16x17xf32>, vector<16x256xf32>, vector<16x17xf32> -> vector<16x290xf32>
    %287 = vector.extract_strided_slice %286 {offsets = [0, 0], sizes = [16, 256], strides = [1, 1]} : vector<16x290xf32> to vector<16x256xf32>
    %288 = vector.broadcast %32 : vector<1x256xf32> to vector<16x256xf32>
    %289 = arith.mulf %287, %288 : vector<16x256xf32>
    %290 = vector.extract_strided_slice %286 {offsets = [0, 1], sizes = [16, 256], strides = [1, 1]} : vector<16x290xf32> to vector<16x256xf32>
    %291 = vector.extract_strided_slice %286 {offsets = [0, 2], sizes = [16, 256], strides = [1, 1]} : vector<16x290xf32> to vector<16x256xf32>
    %292 = vector.broadcast %47 : vector<1x256xf32> to vector<16x256xf32>
    %293 = arith.mulf %291, %292 : vector<16x256xf32>
    %294 = vector.extract_strided_slice %286 {offsets = [0, 16], sizes = [16, 256], strides = [1, 1]} : vector<16x290xf32> to vector<16x256xf32>
    %295 = vector.broadcast %32 : vector<1x256xf32> to vector<16x256xf32>
    %296 = arith.mulf %294, %295 : vector<16x256xf32>
    %297 = vector.extract_strided_slice %286 {offsets = [0, 17], sizes = [16, 256], strides = [1, 1]} : vector<16x290xf32> to vector<16x256xf32>
    %298 = vector.extract_strided_slice %286 {offsets = [0, 18], sizes = [16, 256], strides = [1, 1]} : vector<16x290xf32> to vector<16x256xf32>
    %299 = vector.broadcast %47 : vector<1x256xf32> to vector<16x256xf32>
    %300 = arith.mulf %298, %299 : vector<16x256xf32>
    %301 = vector.extract_strided_slice %286 {offsets = [0, 32], sizes = [16, 256], strides = [1, 1]} : vector<16x290xf32> to vector<16x256xf32>
    %302 = vector.broadcast %32 : vector<1x256xf32> to vector<16x256xf32>
    %303 = arith.mulf %301, %302 : vector<16x256xf32>
    %304 = vector.extract_strided_slice %286 {offsets = [0, 33], sizes = [16, 256], strides = [1, 1]} : vector<16x290xf32> to vector<16x256xf32>
    %305 = vector.extract_strided_slice %286 {offsets = [0, 34], sizes = [16, 256], strides = [1, 1]} : vector<16x290xf32> to vector<16x256xf32>
    %306 = vector.broadcast %47 : vector<1x256xf32> to vector<16x256xf32>
    %307 = arith.mulf %305, %306 : vector<16x256xf32>
    %308 = tpu.concatenate %289, %290, %293, %296, %297, %300, %303, %304, %307 in 0 : vector<16x256xf32>, vector<16x256xf32>, vector<16x256xf32>, vector<16x256xf32>, vector<16x256xf32>, vector<16x256xf32>, vector<16x256xf32>, vector<16x256xf32>, vector<16x256xf32> -> vector<144x256xf32>
    %c0_79 = arith.constant 0 : index
    %c0_80 = arith.constant 0 : index
    %309 = vector.load %arg23[%c0_79, %c0_80] : memref<16x144xf32, #tpu.memory_space<vmem>>, vector<16x144xf32>
    %cst_81 = arith.constant dense<0.000000e+00> : vector<16x256xf32>
    %310 = tpu.matmul %309, %308, %cst_81 {dimension_numbers = #tpu.dot_dimension_numbers<[1], [0], [0], [1], [0, 0, 1, 1], [], []>} : vector<16x144xf32>, vector<144x256xf32>, vector<16x256xf32> -> vector<16x256xf32>
    %c0_82 = arith.constant 0 : index
    %c0_83 = arith.constant 0 : index
    %311 = vector.load %arg24[%c0_82, %c0_83] : memref<16x1xf32, #tpu.memory_space<vmem>>, vector<16x1xf32>
    %312 = vector.broadcast %311 : vector<16x1xf32> to vector<16x256xf32>
    %313 = arith.mulf %310, %312 : vector<16x256xf32>
    %c0_84 = arith.constant 0 : index
    %c0_85 = arith.constant 0 : index
    %314 = vector.load %arg25[%c0_84, %c0_85] : memref<16x1xf32, #tpu.memory_space<vmem>>, vector<16x1xf32>
    %315 = vector.broadcast %314 : vector<16x1xf32> to vector<16x256xf32>
    %316 = arith.addf %313, %315 : vector<16x256xf32>
    %cst_86 = arith.constant 0.000000e+00 : f32
    %317 = vector.broadcast %cst_86 : f32 to vector<16x256xf32>
    %318 = arith.maximumf %316, %317 : vector<16x256xf32>
    %c0_87 = arith.constant 0 : index
    %c0_88 = arith.constant 0 : index
    %c0_89 = arith.constant 0 : index
    %319 = vector.load %arg26[%c0_87, %c0_88, %c0_89] : memref<1x16x256xf32, #tpu.memory_space<vmem>>, vector<1x16x256xf32>
    %320 = vector.shape_cast %319 : vector<1x16x256xf32> to vector<16x256xf32>
    %321 = vector.shape_cast %318 : vector<16x256xf32> to vector<1x16x256xf32>
    tpu.vector_store %arg26[%c0_87, %c0_88, %c0_89], %321 {strides = array<i32>} : memref<1x16x256xf32, #tpu.memory_space<vmem>>, vector<1x16x256xf32>,
    return
  }
  func.func @transform_0(%arg0: i32) -> (i32, i32, i32) {
    %c0_i32 = arith.constant 0 : i32
    %c0_i32_0 = arith.constant 0 : i32
    %c0_i32_1 = arith.constant 0 : i32
    return %arg0, %c0_i32, %c0_i32_0 : i32, i32, i32
  }
  func.func @transform_1(%arg0: i32) -> (i32, i32) {
    %c0_i32 = arith.constant 0 : i32
    %c0_i32_0 = arith.constant 0 : i32
    %c0_i32_1 = arith.constant 0 : i32
    return %c0_i32, %c0_i32_0 : i32, i32
  }
  func.func @transform_2(%arg0: i32) -> (i32, i32) {
    %c0_i32 = arith.constant 0 : i32
    %c0_i32_0 = arith.constant 0 : i32
    %c0_i32_1 = arith.constant 0 : i32
    return %c0_i32, %c0_i32_0 : i32, i32
  }
  func.func @transform_3(%arg0: i32) -> (i32, i32) {
    %c0_i32 = arith.constant 0 : i32
    %c0_i32_0 = arith.constant 0 : i32
    %c0_i32_1 = arith.constant 0 : i32
    return %c0_i32, %c0_i32_0 : i32, i32
  }
  func.func @transform_4(%arg0: i32) -> (i32, i32) {
    %c0_i32 = arith.constant 0 : i32
    %c0_i32_0 = arith.constant 0 : i32
    %c0_i32_1 = arith.constant 0 : i32
    return %c0_i32, %c0_i32_0 : i32, i32
  }
  func.func @transform_5(%arg0: i32) -> (i32, i32) {
    %c0_i32 = arith.constant 0 : i32
    %c0_i32_0 = arith.constant 0 : i32
    %c0_i32_1 = arith.constant 0 : i32
    return %c0_i32, %c0_i32_0 : i32, i32
  }
  func.func @transform_6(%arg0: i32) -> (i32, i32) {
    %c0_i32 = arith.constant 0 : i32
    %c0_i32_0 = arith.constant 0 : i32
    %c0_i32_1 = arith.constant 0 : i32
    return %c0_i32, %c0_i32_0 : i32, i32
  }
  func.func @transform_7(%arg0: i32) -> (i32, i32) {
    %c0_i32 = arith.constant 0 : i32
    %c0_i32_0 = arith.constant 0 : i32
    %c0_i32_1 = arith.constant 0 : i32
    return %c0_i32, %c0_i32_0 : i32, i32
  }
  func.func @transform_8(%arg0: i32) -> (i32, i32) {
    %c0_i32 = arith.constant 0 : i32
    %c0_i32_0 = arith.constant 0 : i32
    %c0_i32_1 = arith.constant 0 : i32
    return %c0_i32, %c0_i32_0 : i32, i32
  }
  func.func @transform_9(%arg0: i32) -> (i32, i32) {
    %c0_i32 = arith.constant 0 : i32
    %c0_i32_0 = arith.constant 0 : i32
    %c0_i32_1 = arith.constant 0 : i32
    return %c0_i32, %c0_i32_0 : i32, i32
  }
  func.func @transform_10(%arg0: i32) -> (i32, i32) {
    %c0_i32 = arith.constant 0 : i32
    %c0_i32_0 = arith.constant 0 : i32
    %c0_i32_1 = arith.constant 0 : i32
    return %c0_i32, %c0_i32_0 : i32, i32
  }
  func.func @transform_11(%arg0: i32) -> (i32, i32) {
    %c0_i32 = arith.constant 0 : i32
    %c0_i32_0 = arith.constant 0 : i32
    %c0_i32_1 = arith.constant 0 : i32
    return %c0_i32, %c0_i32_0 : i32, i32
  }
  func.func @transform_12(%arg0: i32) -> (i32, i32) {
    %c0_i32 = arith.constant 0 : i32
    %c0_i32_0 = arith.constant 0 : i32
    %c0_i32_1 = arith.constant 0 : i32
    return %c0_i32, %c0_i32_0 : i32, i32
  }
  func.func @transform_13(%arg0: i32) -> (i32, i32) {
    %c0_i32 = arith.constant 0 : i32
    %c0_i32_0 = arith.constant 0 : i32
    %c0_i32_1 = arith.constant 0 : i32
    return %c0_i32, %c0_i32_0 : i32, i32
  }
  func.func @transform_14(%arg0: i32) -> (i32, i32) {
    %c0_i32 = arith.constant 0 : i32
    %c0_i32_0 = arith.constant 0 : i32
    %c0_i32_1 = arith.constant 0 : i32
    return %c0_i32, %c0_i32_0 : i32, i32
  }
  func.func @transform_15(%arg0: i32) -> (i32, i32) {
    %c0_i32 = arith.constant 0 : i32
    %c0_i32_0 = arith.constant 0 : i32
    %c0_i32_1 = arith.constant 0 : i32
    return %c0_i32, %c0_i32_0 : i32, i32
  }
  func.func @transform_16(%arg0: i32) -> (i32, i32) {
    %c0_i32 = arith.constant 0 : i32
    %c0_i32_0 = arith.constant 0 : i32
    %c0_i32_1 = arith.constant 0 : i32
    return %c0_i32, %c0_i32_0 : i32, i32
  }
  func.func @transform_17(%arg0: i32) -> (i32, i32) {
    %c0_i32 = arith.constant 0 : i32
    %c0_i32_0 = arith.constant 0 : i32
    %c0_i32_1 = arith.constant 0 : i32
    return %c0_i32, %c0_i32_0 : i32, i32
  }
  func.func @transform_18(%arg0: i32) -> (i32, i32) {
    %c0_i32 = arith.constant 0 : i32
    %c0_i32_0 = arith.constant 0 : i32
    %c0_i32_1 = arith.constant 0 : i32
    return %c0_i32, %c0_i32_0 : i32, i32
  }
  func.func @transform_19(%arg0: i32) -> (i32, i32) {
    %c0_i32 = arith.constant 0 : i32
    %c0_i32_0 = arith.constant 0 : i32
    %c0_i32_1 = arith.constant 0 : i32
    return %c0_i32, %c0_i32_0 : i32, i32
  }
  func.func @transform_20(%arg0: i32) -> (i32, i32) {
    %c0_i32 = arith.constant 0 : i32
    %c0_i32_0 = arith.constant 0 : i32
    %c0_i32_1 = arith.constant 0 : i32
    return %c0_i32, %c0_i32_0 : i32, i32
  }
  func.func @transform_21(%arg0: i32) -> (i32, i32) {
    %c0_i32 = arith.constant 0 : i32
    %c0_i32_0 = arith.constant 0 : i32
    %c0_i32_1 = arith.constant 0 : i32
    return %c0_i32, %c0_i32_0 : i32, i32
  }
  func.func @transform_22(%arg0: i32) -> (i32, i32) {
    %c0_i32 = arith.constant 0 : i32
    %c0_i32_0 = arith.constant 0 : i32
    %c0_i32_1 = arith.constant 0 : i32
    return %c0_i32, %c0_i32_0 : i32, i32
  }
  func.func @transform_23(%arg0: i32) -> (i32, i32) {
    %c0_i32 = arith.constant 0 : i32
    %c0_i32_0 = arith.constant 0 : i32
    %c0_i32_1 = arith.constant 0 : i32
    return %c0_i32, %c0_i32_0 : i32, i32
  }
  func.func @transform_24(%arg0: i32) -> (i32, i32) {
    %c0_i32 = arith.constant 0 : i32
    %c0_i32_0 = arith.constant 0 : i32
    %c0_i32_1 = arith.constant 0 : i32
    return %c0_i32, %c0_i32_0 : i32, i32
  }
  func.func @transform_25(%arg0: i32) -> (i32, i32, i32) {
    %c0_i32 = arith.constant 0 : i32
    %c0_i32_0 = arith.constant 0 : i32
    %c0_i32_1 = arith.constant 0 : i32
    return %arg0, %c0_i32, %c0_i32_0 : i32, i32, i32
  }
}

</mosaic_0001>

<llo_original>
// kernel: iconv_forward.1
$region0: #{iconv_forward.1}
  #allocation0 [shape = 'u32[]', space=smem, size = 0x4, offset = 0x4, fixed_abs, tag = 'smem constant byte address 0x4 - core index']
  #allocation1 [shape = 'u32[72,128]{1,0:T(1,128)}', space=vmem, size = 0x9000, scoped, tag = 'internal scratch']
  %s0 = inlined_call_operand.vmem [shape: f32[2,4,256], index: 0, kind: input, shape index: {}]
  %s1 = inlined_call_operand.vmem [shape: f32[4,4], index: 1, kind: input, shape index: {}]
  %s2 = inlined_call_operand.vmem [shape: f32[4,1], index: 2, kind: input, shape index: {}]
  %s3 = inlined_call_operand.vmem [shape: f32[4,1], index: 3, kind: input, shape index: {}]
  %s4 = inlined_call_operand.vmem [shape: f32[4,4], index: 4, kind: input, shape index: {}]
  %s5 = inlined_call_operand.vmem [shape: f32[4,1], index: 5, kind: input, shape index: {}]
  %s6 = inlined_call_operand.vmem [shape: f32[4,1], index: 6, kind: input, shape index: {}]
  %s7 = inlined_call_operand.vmem [shape: f32[4,4], index: 7, kind: input, shape index: {}]
  %s8 = inlined_call_operand.vmem [shape: f32[4,1], index: 8, kind: input, shape index: {}]
  %s9 = inlined_call_operand.vmem [shape: f32[4,1], index: 9, kind: input, shape index: {}]
  %s10 = inlined_call_operand.vmem [shape: f32[4,36], index: 10, kind: input, shape index: {}]
  %s11 = inlined_call_operand.vmem [shape: f32[4,1], index: 11, kind: input, shape index: {}]
  %s12 = inlined_call_operand.vmem [shape: f32[4,1], index: 12, kind: input, shape index: {}]
  %s13 = inlined_call_operand.vmem [shape: f32[4,36], index: 13, kind: input, shape index: {}]
  %s14 = inlined_call_operand.vmem [shape: f32[4,1], index: 14, kind: input, shape index: {}]
  %s15 = inlined_call_operand.vmem [shape: f32[4,1], index: 15, kind: input, shape index: {}]
  %s16 = inlined_call_operand.vmem [shape: f32[4,4], index: 16, kind: input, shape index: {}]
  %s17 = inlined_call_operand.vmem [shape: f32[4,1], index: 17, kind: input, shape index: {}]
  %s18 = inlined_call_operand.vmem [shape: f32[4,1], index: 18, kind: input, shape index: {}]
  %s19 = inlined_call_operand.vmem [shape: f32[4,100], index: 19, kind: input, shape index: {}]
  %s20 = inlined_call_operand.vmem [shape: f32[4,1], index: 20, kind: input, shape index: {}]
  %s21 = inlined_call_operand.vmem [shape: f32[4,1], index: 21, kind: input, shape index: {}]
  %s22 = inlined_call_operand.vmem [shape: f32[16,144], index: 22, kind: input, shape index: {}]
  %s23 = inlined_call_operand.vmem [shape: f32[16,1], index: 23, kind: input, shape index: {}]
  %s24 = inlined_call_operand.vmem [shape: f32[16,1], index: 24, kind: input, shape index: {}]
  %s25 = inlined_call_operand.vmem [shape: f32[2,16,256], index: 25, kind: output, shape index: {}]
  %s26 = sld [smem:[#allocation0]]
  $region133: #{iconv_forward.1} parent=0
    _
  %s28 = ssub.s32 1, %s26
  %s29 = scalar_select 0, %s28, %s26
  loop: start=0, step=1, limit=4
  $region2: #{iconv_forward.1} parent=0 // loop_pre_header
    _
  $region3: #{iconv_forward.1} parent=0 // loop_header
    %s31 = sphi 0, %s35
    %p32 = scmp.ge.s32.totalorder %s31, 4
    %s41 = sphi 0, %s43
    %s44 = sphi 0, %s41
    %s45 = sphi 0, %s44
    %s61 = sphi 0, %s45
    %s65 = sphi 0, %s65
    %s67 = sphi 0, %s65
    %s68 = sphi 0, %s67
    %s82 = sphi 0, %s68
    %s86 = sphi 0, %s86
    %s88 = sphi 0, %s86
    %s89 = sphi 0, %s88
    %s103 = sphi 0, %s89
    %s107 = sphi 0, %s107
    %s109 = sphi 0, %s107
    %s110 = sphi 0, %s109
    %s124 = sphi 0, %s110
    %s128 = sphi 0, %s128
    %s130 = sphi 0, %s128
    %s131 = sphi 0, %s130
    %s145 = sphi 0, %s131
    %s149 = sphi 0, %s149
    %s151 = sphi 0, %s149
    %s152 = sphi 0, %s151
    %s166 = sphi 0, %s152
    %s170 = sphi 0, %s170
    %s172 = sphi 0, %s170
    %s173 = sphi 0, %s172
    %s187 = sphi 0, %s173
    %s191 = sphi 0, %s191
    %s193 = sphi 0, %s191
    %s194 = sphi 0, %s193
    %s208 = sphi 0, %s194
    %s212 = sphi 0, %s212
    %s214 = sphi 0, %s212
    %s215 = sphi 0, %s214
    %s229 = sphi 0, %s215
    %s233 = sphi 0, %s233
    %s235 = sphi 0, %s233
    %s236 = sphi 0, %s235
    %s250 = sphi 0, %s236
    %s254 = sphi 0, %s254
    %s256 = sphi 0, %s254
    %s257 = sphi 0, %s256
    %s271 = sphi 0, %s257
    %s275 = sphi 0, %s275
    %s277 = sphi 0, %s275
    %s278 = sphi 0, %s277
    %s292 = sphi 0, %s278
    %s296 = sphi 0, %s296
    %s298 = sphi 0, %s296
    %s299 = sphi 0, %s298
    %s313 = sphi 0, %s299
    %s317 = sphi 0, %s317
    %s319 = sphi 0, %s317
    %s320 = sphi 0, %s319
    %s334 = sphi 0, %s320
    %s338 = sphi 0, %s338
    %s340 = sphi 0, %s338
    %s341 = sphi 0, %s340
    %s355 = sphi 0, %s341
    %s359 = sphi 0, %s359
    %s361 = sphi 0, %s359
    %s362 = sphi 0, %s361
    %s376 = sphi 0, %s362
    %s380 = sphi 0, %s380
    %s382 = sphi 0, %s380
    %s383 = sphi 0, %s382
    %s397 = sphi 0, %s383
    %s401 = sphi 0, %s401
    %s403 = sphi 0, %s401
    %s404 = sphi 0, %s403
    %s418 = sphi 0, %s404
    %s422 = sphi 0, %s422
    %s424 = sphi 0, %s422
    %s425 = sphi 0, %s424
    %s439 = sphi 0, %s425
    %s443 = sphi 0, %s443
    %s445 = sphi 0, %s443
    %s446 = sphi 0, %s445
    %s460 = sphi 0, %s446
    %s464 = sphi 0, %s464
    %s466 = sphi 0, %s464
    %s467 = sphi 0, %s466
    %s481 = sphi 0, %s467
    %s485 = sphi 0, %s485
    %s487 = sphi 0, %s485
    %s488 = sphi 0, %s487
    %s502 = sphi 0, %s488
    %s506 = sphi 0, %s506
    %s508 = sphi 0, %s506
    %s509 = sphi 0, %s508
    %s523 = sphi 0, %s509
    %s527 = sphi 0, %s527
    %s529 = sphi 0, %s527
    %s530 = sphi 0, %s529
    %s544 = sphi 0, %s530
    %s548 = sphi 0, %s548
    %s550 = sphi 0, %s548
    %s551 = sphi 0, %s550
    %s565 = sphi 0, %s551
    %s571 = sphi 0, %s573
    %s574 = sphi 0, %s571
    %s575 = sphi 0, %s574
    %s591 = sphi 0, %s575
  $region4: #{iconv_forward.1} parent=0 // loop_header_branch
    %34 = sbr.rel (%p32) target = $region8
  $region5: #{iconv_forward.1} parent=0 // loop_body
    %s36 = ssub.s32 %s31, 1
    %s37 = ssub.s32 %s31, 2
    %s38 = sadd.s32 %s31, 1
    %s39 = ssub.s32 %s31, %s38
    %p40 = scmp.eq.s32.totalorder %s39, 0
    %s42 = sadd.s32 %s41, 1
    %s43 = scalar_select %p40, %s41, %s42
    %p46 = pneg %p40
    %p47 = scmp.eq.s32.totalorder %s31, 1
    %p48 = por %p46, %p47
    %p49 = scmp.ne.s32.totalorder %s41, %s44
    %p50 = scmp.eq.s32.totalorder %s31, 0
    %p51 = por %p49, %p50
    %p52 = scmp.ne.s32.totalorder %s41, %s44
    %p53 = scmp.eq.s32.totalorder %s36, 1
    %p54 = por %p52, %p53
    %p55 = scmp.ne.s32.totalorder %s44, %s45
    %p56 = scmp.eq.s32.totalorder %s36, 0
    %p57 = por %p55, %p56
    %p58 = scmp.ne.s32.totalorder %s44, %s45
    %p59 = scmp.eq.s32.totalorder %s37, 1
    %p60 = por %p58, %p59
    %p62 = scmp.ne.s32.totalorder %s45, %s61
    %p63 = scmp.eq.s32.totalorder %s37, 0
    %p64 = por %p62, %p63
    %s66 = sadd.s32 %s65, 1
    %p69 = scmp.eq.s32.totalorder %s31, 1
    %p70 = scmp.ne.s32.totalorder %s65, %s67
    %p71 = scmp.eq.s32.totalorder %s31, 0
    %p72 = por %p70, %p71
    %p73 = scmp.ne.s32.totalorder %s65, %s67
    %p74 = scmp.eq.s32.totalorder %s36, 1
    %p75 = por %p73, %p74
    %p76 = scmp.ne.s32.totalorder %s67, %s68
    %p77 = scmp.eq.s32.totalorder %s36, 0
    %p78 = por %p76, %p77
    %p79 = scmp.ne.s32.totalorder %s67, %s68
    %p80 = scmp.eq.s32.totalorder %s37, 1
    %p81 = por %p79, %p80
    %p83 = scmp.ne.s32.totalorder %s68, %s82
    %p84 = scmp.eq.s32.totalorder %s37, 0
    %p85 = por %p83, %p84
    %s87 = sadd.s32 %s86, 1
    %p90 = scmp.eq.s32.totalorder %s31, 1
    %p91 = scmp.ne.s32.totalorder %s86, %s88
    %p92 = scmp.eq.s32.totalorder %s31, 0
    %p93 = por %p91, %p92
    %p94 = scmp.ne.s32.totalorder %s86, %s88
    %p95 = scmp.eq.s32.totalorder %s36, 1
    %p96 = por %p94, %p95
    %p97 = scmp.ne.s32.totalorder %s88, %s89
    %p98 = scmp.eq.s32.totalorder %s36, 0
    %p99 = por %p97, %p98
    %p100 = scmp.ne.s32.totalorder %s88, %s89
    %p101 = scmp.eq.s32.totalorder %s37, 1
    %p102 = por %p100, %p101
    %p104 = scmp.ne.s32.totalorder %s89, %s103
    %p105 = scmp.eq.s32.totalorder %s37, 0
    %p106 = por %p104, %p105
    %s108 = sadd.s32 %s107, 1
    %p111 = scmp.eq.s32.totalorder %s31, 1
    %p112 = scmp.ne.s32.totalorder %s107, %s109
    %p113 = scmp.eq.s32.totalorder %s31, 0
    %p114 = por %p112, %p113
    %p115 = scmp.ne.s32.totalorder %s107, %s109
    %p116 = scmp.eq.s32.totalorder %s36, 1
    %p117 = por %p115, %p116
    %p118 = scmp.ne.s32.totalorder %s109, %s110
    %p119 = scmp.eq.s32.totalorder %s36, 0
    %p120 = por %p118, %p119
    %p121 = scmp.ne.s32.totalorder %s109, %s110
    %p122 = scmp.eq.s32.totalorder %s37, 1
    %p123 = por %p121, %p122
    %p125 = scmp.ne.s32.totalorder %s110, %s124
    %p126 = scmp.eq.s32.totalorder %s37, 0
    %p127 = por %p125, %p126
    %s129 = sadd.s32 %s128, 1
    %p132 = scmp.eq.s32.totalorder %s31, 1
    %p133 = scmp.ne.s32.totalorder %s128, %s130
    %p134 = scmp.eq.s32.totalorder %s31, 0
    %p135 = por %p133, %p134
    %p136 = scmp.ne.s32.totalorder %s128, %s130
    %p137 = scmp.eq.s32.totalorder %s36, 1
    %p138 = por %p136, %p137
    %p139 = scmp.ne.s32.totalorder %s130, %s131
    %p140 = scmp.eq.s32.totalorder %s36, 0
    %p141 = por %p139, %p140
    %p142 = scmp.ne.s32.totalorder %s130, %s131
    %p143 = scmp.eq.s32.totalorder %s37, 1
    %p144 = por %p142, %p143
    %p146 = scmp.ne.s32.totalorder %s131, %s145
    %p147 = scmp.eq.s32.totalorder %s37, 0
    %p148 = por %p146, %p147
    %s150 = sadd.s32 %s149, 1
    %p153 = scmp.eq.s32.totalorder %s31, 1
    %p154 = scmp.ne.s32.totalorder %s149, %s151
    %p155 = scmp.eq.s32.totalorder %s31, 0
    %p156 = por %p154, %p155
    %p157 = scmp.ne.s32.totalorder %s149, %s151
    %p158 = scmp.eq.s32.totalorder %s36, 1
    %p159 = por %p157, %p158
    %p160 = scmp.ne.s32.totalorder %s151, %s152
    %p161 = scmp.eq.s32.totalorder %s36, 0
    %p162 = por %p160, %p161
    %p163 = scmp.ne.s32.totalorder %s151, %s152
    %p164 = scmp.eq.s32.totalorder %s37, 1
    %p165 = por %p163, %p164
    %p167 = scmp.ne.s32.totalorder %s152, %s166
    %p168 = scmp.eq.s32.totalorder %s37, 0
    %p169 = por %p167, %p168
    %s171 = sadd.s32 %s170, 1
    %p174 = scmp.eq.s32.totalorder %s31, 1
    %p175 = scmp.ne.s32.totalorder %s170, %s172
    %p176 = scmp.eq.s32.totalorder %s31, 0
    %p177 = por %p175, %p176
    %p178 = scmp.ne.s32.totalorder %s170, %s172
    %p179 = scmp.eq.s32.totalorder %s36, 1
    %p180 = por %p178, %p179
    %p181 = scmp.ne.s32.totalorder %s172, %s173
    %p182 = scmp.eq.s32.totalorder %s36, 0
    %p183 = por %p181, %p182
    %p184 = scmp.ne.s32.totalorder %s172, %s173
    %p185 = scmp.eq.s32.totalorder %s37, 1
    %p186 = por %p184, %p185
    %p188 = scmp.ne.s32.totalorder %s173, %s187
    %p189 = scmp.eq.s32.totalorder %s37, 0
    %p190 = por %p188, %p189
    %s192 = sadd.s32 %s191, 1
    %p195 = scmp.eq.s32.totalorder %s31, 1
    %p196 = scmp.ne.s32.totalorder %s191, %s193
    %p197 = scmp.eq.s32.totalorder %s31, 0
    %p198 = por %p196, %p197
    %p199 = scmp.ne.s32.totalorder %s191, %s193
    %p200 = scmp.eq.s32.totalorder %s36, 1
    %p201 = por %p199, %p200
    %p202 = scmp.ne.s32.totalorder %s193, %s194
    %p203 = scmp.eq.s32.totalorder %s36, 0
    %p204 = por %p202, %p203
    %p205 = scmp.ne.s32.totalorder %s193, %s194
    %p206 = scmp.eq.s32.totalorder %s37, 1
    %p207 = por %p205, %p206
    %p209 = scmp.ne.s32.totalorder %s194, %s208
    %p210 = scmp.eq.s32.totalorder %s37, 0
    %p211 = por %p209, %p210
    %s213 = sadd.s32 %s212, 1
    %p216 = scmp.eq.s32.totalorder %s31, 1
    %p217 = scmp.ne.s32.totalorder %s212, %s214
    %p218 = scmp.eq.s32.totalorder %s31, 0
    %p219 = por %p217, %p218
    %p220 = scmp.ne.s32.totalorder %s212, %s214
    %p221 = scmp.eq.s32.totalorder %s36, 1
    %p222 = por %p220, %p221
    %p223 = scmp.ne.s32.totalorder %s214, %s215
    %p224 = scmp.eq.s32.totalorder %s36, 0
    %p225 = por %p223, %p224
    %p226 = scmp.ne.s32.totalorder %s214, %s215
    %p227 = scmp.eq.s32.totalorder %s37, 1
    %p228 = por %p226, %p227
    %p230 = scmp.ne.s32.totalorder %s215, %s229
    %p231 = scmp.eq.s32.totalorder %s37, 0
    %p232 = por %p230, %p231
    %s234 = sadd.s32 %s233, 1
    %p237 = scmp.eq.s32.totalorder %s31, 1
    %p238 = scmp.ne.s32.totalorder %s233, %s235
    %p239 = scmp.eq.s32.totalorder %s31, 0
    %p240 = por %p238, %p239
    %p241 = scmp.ne.s32.totalorder %s233, %s235
    %p242 = scmp.eq.s32.totalorder %s36, 1
    %p243 = por %p241, %p242
    %p244 = scmp.ne.s32.totalorder %s235, %s236
    %p245 = scmp.eq.s32.totalorder %s36, 0
    %p246 = por %p244, %p245
    %p247 = scmp.ne.s32.totalorder %s235, %s236
    %p248 = scmp.eq.s32.totalorder %s37, 1
    %p249 = por %p247, %p248
    %p251 = scmp.ne.s32.totalorder %s236, %s250
    %p252 = scmp.eq.s32.totalorder %s37, 0
    %p253 = por %p251, %p252
    %s255 = sadd.s32 %s254, 1
    %p258 = scmp.eq.s32.totalorder %s31, 1
    %p259 = scmp.ne.s32.totalorder %s254, %s256
    %p260 = scmp.eq.s32.totalorder %s31, 0
    %p261 = por %p259, %p260
    %p262 = scmp.ne.s32.totalorder %s254, %s256
    %p263 = scmp.eq.s32.totalorder %s36, 1
    %p264 = por %p262, %p263
    %p265 = scmp.ne.s32.totalorder %s256, %s257
    %p266 = scmp.eq.s32.totalorder %s36, 0
    %p267 = por %p265, %p266
    %p268 = scmp.ne.s32.totalorder %s256, %s257
    %p269 = scmp.eq.s32.totalorder %s37, 1
    %p270 = por %p268, %p269
    %p272 = scmp.ne.s32.totalorder %s257, %s271
    %p273 = scmp.eq.s32.totalorder %s37, 0
    %p274 = por %p272, %p273
    %s276 = sadd.s32 %s275, 1
    %p279 = scmp.eq.s32.totalorder %s31, 1
    %p280 = scmp.ne.s32.totalorder %s275, %s277
    %p281 = scmp.eq.s32.totalorder %s31, 0
    %p282 = por %p280, %p281
    %p283 = scmp.ne.s32.totalorder %s275, %s277
    %p284 = scmp.eq.s32.totalorder %s36, 1
    %p285 = por %p283, %p284
    %p286 = scmp.ne.s32.totalorder %s277, %s278
    %p287 = scmp.eq.s32.totalorder %s36, 0
    %p288 = por %p286, %p287
    %p289 = scmp.ne.s32.totalorder %s277, %s278
    %p290 = scmp.eq.s32.totalorder %s37, 1
    %p291 = por %p289, %p290
    %p293 = scmp.ne.s32.totalorder %s278, %s292
    %p294 = scmp.eq.s32.totalorder %s37, 0
    %p295 = por %p293, %p294
    %s297 = sadd.s32 %s296, 1
    %p300 = scmp.eq.s32.totalorder %s31, 1
    %p301 = scmp.ne.s32.totalorder %s296, %s298
    %p302 = scmp.eq.s32.totalorder %s31, 0
    %p303 = por %p301, %p302
    %p304 = scmp.ne.s32.totalorder %s296, %s298
    %p305 = scmp.eq.s32.totalorder %s36, 1
    %p306 = por %p304, %p305
    %p307 = scmp.ne.s32.totalorder %s298, %s299
    %p308 = scmp.eq.s32.totalorder %s36, 0
    %p309 = por %p307, %p308
    %p310 = scmp.ne.s32.totalorder %s298, %s299
    %p311 = scmp.eq.s32.totalorder %s37, 1
    %p312 = por %p310, %p311
    %p314 = scmp.ne.s32.totalorder %s299, %s313
    %p315 = scmp.eq.s32.totalorder %s37, 0
    %p316 = por %p314, %p315
    %s318 = sadd.s32 %s317, 1
    %p321 = scmp.eq.s32.totalorder %s31, 1
    %p322 = scmp.ne.s32.totalorder %s317, %s319
    %p323 = scmp.eq.s32.totalorder %s31, 0
    %p324 = por %p322, %p323
    %p325 = scmp.ne.s32.totalorder %s317, %s319
    %p326 = scmp.eq.s32.totalorder %s36, 1
    %p327 = por %p325, %p326
    %p328 = scmp.ne.s32.totalorder %s319, %s320
    %p329 = scmp.eq.s32.totalorder %s36, 0
    %p330 = por %p328, %p329
    %p331 = scmp.ne.s32.totalorder %s319, %s320
    %p332 = scmp.eq.s32.totalorder %s37, 1
    %p333 = por %p331, %p332
    %p335 = scmp.ne.s32.totalorder %s320, %s334
    %p336 = scmp.eq.s32.totalorder %s37, 0
    %p337 = por %p335, %p336
    %s339 = sadd.s32 %s338, 1
    %p342 = scmp.eq.s32.totalorder %s31, 1
    %p343 = scmp.ne.s32.totalorder %s338, %s340
    %p344 = scmp.eq.s32.totalorder %s31, 0
    %p345 = por %p343, %p344
    %p346 = scmp.ne.s32.totalorder %s338, %s340
    %p347 = scmp.eq.s32.totalorder %s36, 1
    %p348 = por %p346, %p347
    %p349 = scmp.ne.s32.totalorder %s340, %s341
    %p350 = scmp.eq.s32.totalorder %s36, 0
    %p351 = por %p349, %p350
    %p352 = scmp.ne.s32.totalorder %s340, %s341
    %p353 = scmp.eq.s32.totalorder %s37, 1
    %p354 = por %p352, %p353
    %p356 = scmp.ne.s32.totalorder %s341, %s355
    %p357 = scmp.eq.s32.totalorder %s37, 0
    %p358 = por %p356, %p357
    %s360 = sadd.s32 %s359, 1
    %p363 = scmp.eq.s32.totalorder %s31, 1
    %p364 = scmp.ne.s32.totalorder %s359, %s361
    %p365 = scmp.eq.s32.totalorder %s31, 0
    %p366 = por %p364, %p365
    %p367 = scmp.ne.s32.totalorder %s359, %s361
    %p368 = scmp.eq.s32.totalorder %s36, 1
    %p369 = por %p367, %p368
    %p370 = scmp.ne.s32.totalorder %s361, %s362
    %p371 = scmp.eq.s32.totalorder %s36, 0
    %p372 = por %p370, %p371
    %p373 = scmp.ne.s32.totalorder %s361, %s362
    %p374 = scmp.eq.s32.totalorder %s37, 1
    %p375 = por %p373, %p374
    %p377 = scmp.ne.s32.totalorder %s362, %s376
    %p378 = scmp.eq.s32.totalorder %s37, 0
    %p379 = por %p377, %p378
    %s381 = sadd.s32 %s380, 1
    %p384 = scmp.eq.s32.totalorder %s31, 1
    %p385 = scmp.ne.s32.totalorder %s380, %s382
    %p386 = scmp.eq.s32.totalorder %s31, 0
    %p387 = por %p385, %p386
    %p388 = scmp.ne.s32.totalorder %s380, %s382
    %p389 = scmp.eq.s32.totalorder %s36, 1
    %p390 = por %p388, %p389
    %p391 = scmp.ne.s32.totalorder %s382, %s383
    %p392 = scmp.eq.s32.totalorder %s36, 0
    %p393 = por %p391, %p392
    %p394 = scmp.ne.s32.totalorder %s382, %s383
    %p395 = scmp.eq.s32.totalorder %s37, 1
    %p396 = por %p394, %p395
    %p398 = scmp.ne.s32.totalorder %s383, %s397
    %p399 = scmp.eq.s32.totalorder %s37, 0
    %p400 = por %p398, %p399
    %s402 = sadd.s32 %s401, 1
    %p405 = scmp.eq.s32.totalorder %s31, 1
    %p406 = scmp.ne.s32.totalorder %s401, %s403
    %p407 = scmp.eq.s32.totalorder %s31, 0
    %p408 = por %p406, %p407
    %p409 = scmp.ne.s32.totalorder %s401, %s403
    %p410 = scmp.eq.s32.totalorder %s36, 1
    %p411 = por %p409, %p410
    %p412 = scmp.ne.s32.totalorder %s403, %s404
    %p413 = scmp.eq.s32.totalorder %s36, 0
    %p414 = por %p412, %p413
    %p415 = scmp.ne.s32.totalorder %s403, %s404
    %p416 = scmp.eq.s32.totalorder %s37, 1
    %p417 = por %p415, %p416
    %p419 = scmp.ne.s32.totalorder %s404, %s418
    %p420 = scmp.eq.s32.totalorder %s37, 0
    %p421 = por %p419, %p420
    %s423 = sadd.s32 %s422, 1
    %p426 = scmp.eq.s32.totalorder %s31, 1
    %p427 = scmp.ne.s32.totalorder %s422, %s424
    %p428 = scmp.eq.s32.totalorder %s31, 0
    %p429 = por %p427, %p428
    %p430 = scmp.ne.s32.totalorder %s422, %s424
    %p431 = scmp.eq.s32.totalorder %s36, 1
    %p432 = por %p430, %p431
    %p433 = scmp.ne.s32.totalorder %s424, %s425
    %p434 = scmp.eq.s32.totalorder %s36, 0
    %p435 = por %p433, %p434
    %p436 = scmp.ne.s32.totalorder %s424, %s425
    %p437 = scmp.eq.s32.totalorder %s37, 1
    %p438 = por %p436, %p437
    %p440 = scmp.ne.s32.totalorder %s425, %s439
    %p441 = scmp.eq.s32.totalorder %s37, 0
    %p442 = por %p440, %p441
    %s444 = sadd.s32 %s443, 1
    %p447 = scmp.eq.s32.totalorder %s31, 1
    %p448 = scmp.ne.s32.totalorder %s443, %s445
    %p449 = scmp.eq.s32.totalorder %s31, 0
    %p450 = por %p448, %p449
    %p451 = scmp.ne.s32.totalorder %s443, %s445
    %p452 = scmp.eq.s32.totalorder %s36, 1
    %p453 = por %p451, %p452
    %p454 = scmp.ne.s32.totalorder %s445, %s446
    %p455 = scmp.eq.s32.totalorder %s36, 0
    %p456 = por %p454, %p455
    %p457 = scmp.ne.s32.totalorder %s445, %s446
    %p458 = scmp.eq.s32.totalorder %s37, 1
    %p459 = por %p457, %p458
    %p461 = scmp.ne.s32.totalorder %s446, %s460
    %p462 = scmp.eq.s32.totalorder %s37, 0
    %p463 = por %p461, %p462
    %s465 = sadd.s32 %s464, 1
    %p468 = scmp.eq.s32.totalorder %s31, 1
    %p469 = scmp.ne.s32.totalorder %s464, %s466
    %p470 = scmp.eq.s32.totalorder %s31, 0
    %p471 = por %p469, %p470
    %p472 = scmp.ne.s32.totalorder %s464, %s466
    %p473 = scmp.eq.s32.totalorder %s36, 1
    %p474 = por %p472, %p473
    %p475 = scmp.ne.s32.totalorder %s466, %s467
    %p476 = scmp.eq.s32.totalorder %s36, 0
    %p477 = por %p475, %p476
    %p478 = scmp.ne.s32.totalorder %s466, %s467
    %p479 = scmp.eq.s32.totalorder %s37, 1
    %p480 = por %p478, %p479
    %p482 = scmp.ne.s32.totalorder %s467, %s481
    %p483 = scmp.eq.s32.totalorder %s37, 0
    %p484 = por %p482, %p483
    %s486 = sadd.s32 %s485, 1
    %p489 = scmp.eq.s32.totalorder %s31, 1
    %p490 = scmp.ne.s32.totalorder %s485, %s487
    %p491 = scmp.eq.s32.totalorder %s31, 0
    %p492 = por %p490, %p491
    %p493 = scmp.ne.s32.totalorder %s485, %s487
    %p494 = scmp.eq.s32.totalorder %s36, 1
    %p495 = por %p493, %p494
    %p496 = scmp.ne.s32.totalorder %s487, %s488
    %p497 = scmp.eq.s32.totalorder %s36, 0
    %p498 = por %p496, %p497
    %p499 = scmp.ne.s32.totalorder %s487, %s488
    %p500 = scmp.eq.s32.totalorder %s37, 1
    %p501 = por %p499, %p500
    %p503 = scmp.ne.s32.totalorder %s488, %s502
    %p504 = scmp.eq.s32.totalorder %s37, 0
    %p505 = por %p503, %p504
    %s507 = sadd.s32 %s506, 1
    %p510 = scmp.eq.s32.totalorder %s31, 1
    %p511 = scmp.ne.s32.totalorder %s506, %s508
    %p512 = scmp.eq.s32.totalorder %s31, 0
    %p513 = por %p511, %p512
    %p514 = scmp.ne.s32.totalorder %s506, %s508
    %p515 = scmp.eq.s32.totalorder %s36, 1
    %p516 = por %p514, %p515
    %p517 = scmp.ne.s32.totalorder %s508, %s509
    %p518 = scmp.eq.s32.totalorder %s36, 0
    %p519 = por %p517, %p518
    %p520 = scmp.ne.s32.totalorder %s508, %s509
    %p521 = scmp.eq.s32.totalorder %s37, 1
    %p522 = por %p520, %p521
    %p524 = scmp.ne.s32.totalorder %s509, %s523
    %p525 = scmp.eq.s32.totalorder %s37, 0
    %p526 = por %p524, %p525
    %s528 = sadd.s32 %s527, 1
    %p531 = scmp.eq.s32.totalorder %s31, 1
    %p532 = scmp.ne.s32.totalorder %s527, %s529
    %p533 = scmp.eq.s32.totalorder %s31, 0
    %p534 = por %p532, %p533
    %p535 = scmp.ne.s32.totalorder %s527, %s529
    %p536 = scmp.eq.s32.totalorder %s36, 1
    %p537 = por %p535, %p536
    %p538 = scmp.ne.s32.totalorder %s529, %s530
    %p539 = scmp.eq.s32.totalorder %s36, 0
    %p540 = por %p538, %p539
    %p541 = scmp.ne.s32.totalorder %s529, %s530
    %p542 = scmp.eq.s32.totalorder %s37, 1
    %p543 = por %p541, %p542
    %p545 = scmp.ne.s32.totalorder %s530, %s544
    %p546 = scmp.eq.s32.totalorder %s37, 0
    %p547 = por %p545, %p546
    %s549 = sadd.s32 %s548, 1
    %p552 = scmp.eq.s32.totalorder %s31, 1
    %p553 = scmp.ne.s32.totalorder %s548, %s550
    %p554 = scmp.eq.s32.totalorder %s31, 0
    %p555 = por %p553, %p554
    %p556 = scmp.ne.s32.totalorder %s548, %s550
    %p557 = scmp.eq.s32.totalorder %s36, 1
    %p558 = por %p556, %p557
    %p559 = scmp.ne.s32.totalorder %s550, %s551
    %p560 = scmp.eq.s32.totalorder %s36, 0
    %p561 = por %p559, %p560
    %p562 = scmp.ne.s32.totalorder %s550, %s551
    %p563 = scmp.eq.s32.totalorder %s37, 1
    %p564 = por %p562, %p563
    %p566 = scmp.ne.s32.totalorder %s551, %s565
    %p567 = scmp.eq.s32.totalorder %s37, 0
    %p568 = por %p566, %p567
    %s569 = ssub.s32 %s31, %s38
    %p570 = scmp.eq.s32.totalorder %s569, 0
    %s572 = sadd.s32 %s571, 1
    %s573 = scalar_select %p570, %s571, %s572
    %p576 = pneg %p570
    %p577 = scmp.eq.s32.totalorder %s31, 1
    %p578 = por %p576, %p577
    %p579 = scmp.ne.s32.totalorder %s571, %s574
    %p580 = scmp.eq.s32.totalorder %s31, 0
    %p581 = por %p579, %p580
    %p582 = scmp.ne.s32.totalorder %s571, %s574
    %p583 = scmp.eq.s32.totalorder %s36, 1
    %p584 = por %p582, %p583
    %p585 = scmp.ne.s32.totalorder %s574, %s575
    %p586 = scmp.eq.s32.totalorder %s36, 0
    %p587 = por %p585, %p586
    %p588 = scmp.ne.s32.totalorder %s574, %s575
    %p589 = scmp.eq.s32.totalorder %s37, 1
    %p590 = por %p588, %p589
    %p592 = scmp.ne.s32.totalorder %s575, %s591
    %p593 = scmp.eq.s32.totalorder %s37, 0
    %p594 = por %p592, %p593
    %p595 = scmp.le.s32.totalorder 1, %s31
    %p596 = scmp.lt.s32.totalorder %s31, 3
    %p597 = pnand %p595, %p596
    %p598 = pneg %p597
    // Predicated region
    $region9: #{iconv_forward.1} parent=5 // pred_check
      _
    $region10: #{iconv_forward.1} parent=5 // pred_check_branch
      %600 = sbr.rel (%p597) target = $region12
    $region11: #{iconv_forward.1} parent=5 // pred_region
      %s601 = ssub.s32 %s31, 1
      // Predicated region
      $region13: #{iconv_forward.1} parent=11 // pred_check
        %p602 = pneg %p78
      $region14: #{iconv_forward.1} parent=11 // pred_check_branch
        %604 = sbr.rel (%p602) target = $region16
      $region15: #{iconv_forward.1} parent=11 // pred_region
        _
      $region16: #{iconv_forward.1} parent=11 // pred_fallthru
        _
      // Predicated region
      $region17: #{iconv_forward.1} parent=11 // pred_check
        %p605 = pneg %p99
      $region18: #{iconv_forward.1} parent=11 // pred_check_branch
        %607 = sbr.rel (%p605) target = $region20
      $region19: #{iconv_forward.1} parent=11 // pred_region
        _
      $region20: #{iconv_forward.1} parent=11 // pred_fallthru
        _
      // Predicated region
      $region21: #{iconv_forward.1} parent=11 // pred_check
        %p608 = pneg %p120
      $region22: #{iconv_forward.1} parent=11 // pred_check_branch
        %610 = sbr.rel (%p608) target = $region24
      $region23: #{iconv_forward.1} parent=11 // pred_region
        _
      $region24: #{iconv_forward.1} parent=11 // pred_fallthru
        _
      // Predicated region
      $region25: #{iconv_forward.1} parent=11 // pred_check
        %p611 = pneg %p141
      $region26: #{iconv_forward.1} parent=11 // pred_check_branch
        %613 = sbr.rel (%p611) target = $region28
      $region27: #{iconv_forward.1} parent=11 // pred_region
        _
      $region28: #{iconv_forward.1} parent=11 // pred_fallthru
        _
      // Predicated region
      $region29: #{iconv_forward.1} parent=11 // pred_check
        %p614 = pneg %p162
      $region30: #{iconv_forward.1} parent=11 // pred_check_branch
        %616 = sbr.rel (%p614) target = $region32
      $region31: #{iconv_forward.1} parent=11 // pred_region
        _
      $region32: #{iconv_forward.1} parent=11 // pred_fallthru
        _
      // Predicated region
      $region33: #{iconv_forward.1} parent=11 // pred_check
        %p617 = pneg %p183
      $region34: #{iconv_forward.1} parent=11 // pred_check_branch
        %619 = sbr.rel (%p617) target = $region36
      $region35: #{iconv_forward.1} parent=11 // pred_region
        _
      $region36: #{iconv_forward.1} parent=11 // pred_fallthru
        _
      // Predicated region
      $region37: #{iconv_forward.1} parent=11 // pred_check
        %p620 = pneg %p204
      $region38: #{iconv_forward.1} parent=11 // pred_check_branch
        %622 = sbr.rel (%p620) target = $region40
      $region39: #{iconv_forward.1} parent=11 // pred_region
        _
      $region40: #{iconv_forward.1} parent=11 // pred_fallthru
        _
      // Predicated region
      $region41: #{iconv_forward.1} parent=11 // pred_check
        %p623 = pneg %p225
      $region42: #{iconv_forward.1} parent=11 // pred_check_branch
        %625 = sbr.rel (%p623) target = $region44
      $region43: #{iconv_forward.1} parent=11 // pred_region
        _
      $region44: #{iconv_forward.1} parent=11 // pred_fallthru
        _
      // Predicated region
      $region45: #{iconv_forward.1} parent=11 // pred_check
        %p626 = pneg %p246
      $region46: #{iconv_forward.1} parent=11 // pred_check_branch
        %628 = sbr.rel (%p626) target = $region48
      $region47: #{iconv_forward.1} parent=11 // pred_region
        _
      $region48: #{iconv_forward.1} parent=11 // pred_fallthru
        _
      // Predicated region
      $region49: #{iconv_forward.1} parent=11 // pred_check
        %p629 = pneg %p267
      $region50: #{iconv_forward.1} parent=11 // pred_check_branch
        %631 = sbr.rel (%p629) target = $region52
      $region51: #{iconv_forward.1} parent=11 // pred_region
        _
      $region52: #{iconv_forward.1} parent=11 // pred_fallthru
        _
      // Predicated region
      $region53: #{iconv_forward.1} parent=11 // pred_check
        %p632 = pneg %p288
      $region54: #{iconv_forward.1} parent=11 // pred_check_branch
        %634 = sbr.rel (%p632) target = $region56
      $region55: #{iconv_forward.1} parent=11 // pred_region
        _
      $region56: #{iconv_forward.1} parent=11 // pred_fallthru
        _
      // Predicated region
      $region57: #{iconv_forward.1} parent=11 // pred_check
        %p635 = pneg %p309
      $region58: #{iconv_forward.1} parent=11 // pred_check_branch
        %637 = sbr.rel (%p635) target = $region60
      $region59: #{iconv_forward.1} parent=11 // pred_region
        _
      $region60: #{iconv_forward.1} parent=11 // pred_fallthru
        _
      // Predicated region
      $region61: #{iconv_forward.1} parent=11 // pred_check
        %p638 = pneg %p330
      $region62: #{iconv_forward.1} parent=11 // pred_check_branch
        %640 = sbr.rel (%p638) target = $region64
      $region63: #{iconv_forward.1} parent=11 // pred_region
        _
      $region64: #{iconv_forward.1} parent=11 // pred_fallthru
        _
      // Predicated region
      $region65: #{iconv_forward.1} parent=11 // pred_check
        %p641 = pneg %p351
      $region66: #{iconv_forward.1} parent=11 // pred_check_branch
        %643 = sbr.rel (%p641) target = $region68
      $region67: #{iconv_forward.1} parent=11 // pred_region
        _
      $region68: #{iconv_forward.1} parent=11 // pred_fallthru
        _
      // Predicated region
      $region69: #{iconv_forward.1} parent=11 // pred_check
        %p644 = pneg %p372
      $region70: #{iconv_forward.1} parent=11 // pred_check_branch
        %646 = sbr.rel (%p644) target = $region72
      $region71: #{iconv_forward.1} parent=11 // pred_region
        _
      $region72: #{iconv_forward.1} parent=11 // pred_fallthru
        _
      // Predicated region
      $region73: #{iconv_forward.1} parent=11 // pred_check
        %p647 = pneg %p393
      $region74: #{iconv_forward.1} parent=11 // pred_check_branch
        %649 = sbr.rel (%p647) target = $region76
      $region75: #{iconv_forward.1} parent=11 // pred_region
        _
      $region76: #{iconv_forward.1} parent=11 // pred_fallthru
        _
      // Predicated region
      $region77: #{iconv_forward.1} parent=11 // pred_check
        %p650 = pneg %p414
      $region78: #{iconv_forward.1} parent=11 // pred_check_branch
        %652 = sbr.rel (%p650) target = $region80
      $region79: #{iconv_forward.1} parent=11 // pred_region
        _
      $region80: #{iconv_forward.1} parent=11 // pred_fallthru
        _
      // Predicated region
      $region81: #{iconv_forward.1} parent=11 // pred_check
        %p653 = pneg %p435
      $region82: #{iconv_forward.1} parent=11 // pred_check_branch
        %655 = sbr.rel (%p653) target = $region84
      $region83: #{iconv_forward.1} parent=11 // pred_region
        _
      $region84: #{iconv_forward.1} parent=11 // pred_fallthru
        _
      // Predicated region
      $region85: #{iconv_forward.1} parent=11 // pred_check
        %p656 = pneg %p456
      $region86: #{iconv_forward.1} parent=11 // pred_check_branch
        %658 = sbr.rel (%p656) target = $region88
      $region87: #{iconv_forward.1} parent=11 // pred_region
        _
      $region88: #{iconv_forward.1} parent=11 // pred_fallthru
        _
      // Predicated region
      $region89: #{iconv_forward.1} parent=11 // pred_check
        %p659 = pneg %p477
      $region90: #{iconv_forward.1} parent=11 // pred_check_branch
        %661 = sbr.rel (%p659) target = $region92
      $region91: #{iconv_forward.1} parent=11 // pred_region
        _
      $region92: #{iconv_forward.1} parent=11 // pred_fallthru
        _
      // Predicated region
      $region93: #{iconv_forward.1} parent=11 // pred_check
        %p662 = pneg %p498
      $region94: #{iconv_forward.1} parent=11 // pred_check_branch
        %664 = sbr.rel (%p662) target = $region96
      $region95: #{iconv_forward.1} parent=11 // pred_region
        _
      $region96: #{iconv_forward.1} parent=11 // pred_fallthru
        _
      // Predicated region
      $region97: #{iconv_forward.1} parent=11 // pred_check
        %p665 = pneg %p519
      $region98: #{iconv_forward.1} parent=11 // pred_check_branch
        %667 = sbr.rel (%p665) target = $region100
      $region99: #{iconv_forward.1} parent=11 // pred_region
        _
      $region100: #{iconv_forward.1} parent=11 // pred_fallthru
        _
      // Predicated region
      $region101: #{iconv_forward.1} parent=11 // pred_check
        %p668 = pneg %p540
      $region102: #{iconv_forward.1} parent=11 // pred_check_branch
        %670 = sbr.rel (%p668) target = $region104
      $region103: #{iconv_forward.1} parent=11 // pred_region
        _
      $region104: #{iconv_forward.1} parent=11 // pred_fallthru
        _
      // Predicated region
      $region105: #{iconv_forward.1} parent=11 // pred_check
        %p671 = pneg %p561
      $region106: #{iconv_forward.1} parent=11 // pred_check_branch
        %673 = sbr.rel (%p671) target = $region108
      $region107: #{iconv_forward.1} parent=11 // pred_region
        _
      $region108: #{iconv_forward.1} parent=11 // pred_fallthru
        _
    $region12: #{iconv_forward.1} parent=5 // pred_fallthru
      _
    %p674 = scmp.lt.s32.totalorder %s31, 2
    // Predicated region
    $region109: #{iconv_forward.1} parent=5 // pred_check
      %p675 = pneg %p674
    $region110: #{iconv_forward.1} parent=5 // pred_check_branch
      %677 = sbr.rel (%p675) target = $region112
    $region111: #{iconv_forward.1} parent=5 // pred_region
      // Predicated region
      $region113: #{iconv_forward.1} parent=111 // pred_check
        %p678 = pneg %p51
      $region114: #{iconv_forward.1} parent=111 // pred_check_branch
        %680 = sbr.rel (%p678) target = $region116
      $region115: #{iconv_forward.1} parent=111 // pred_region
        %p681 = scmp.lt.s32.totalorder %s31, 1
        %s682 = scalar_select %p681, %s31, 1
        %s683 = smul.addr %s682, 2
        %s684 = smul.addr %s683, 4
        %s685 = scalar_lea.vmem %s0, %s684
      $region116: #{iconv_forward.1} parent=111 // pred_fallthru
        _
    $region112: #{iconv_forward.1} parent=5 // pred_fallthru
      _
    %p686 = scmp.le.s32.totalorder 1, %s31
    %p687 = scmp.lt.s32.totalorder %s31, 3
    %p688 = pnand %p686, %p687
    %p689 = pneg %p688
    // Predicated region
    $region117: #{iconv_forward.1} parent=5 // pred_check
      _
    $region118: #{iconv_forward.1} parent=5 // pred_check_branch
      %691 = sbr.rel (%p688) target = $region120
    $region119: #{iconv_forward.1} parent=5 // pred_region
      %s692 = ssub.s32 %s31, 1
      %p693 = scmp.lt.s32.totalorder %s36, 1
      %s694 = scalar_select %p693, %s36, 1
      %s695 = smul.addr %s694, 2
      %s696 = smul.addr %s695, 4
      %s697 = scalar_lea.vmem %s0, %s696
      %p698 = pneg %p57
      %p699 = pneg %p54
      %p700 = pneg %p78
      %p701 = pneg %p75
      %p702 = pneg %p99
      %p703 = pneg %p96
      %p704 = pneg %p120
      %p705 = pneg %p117
      %p706 = pneg %p141
      %p707 = pneg %p138
      %p708 = pneg %p162
      %p709 = pneg %p159
      %p710 = pneg %p183
      %p711 = pneg %p180
      %p712 = pneg %p204
      %p713 = pneg %p201
      %p714 = pneg %p225
      %p715 = pneg %p222
      %p716 = pneg %p246
      %p717 = pneg %p243
      %p718 = pneg %p267
      %p719 = pneg %p264
      %p720 = pneg %p288
      %p721 = pneg %p285
      %p722 = pneg %p309
      %p723 = pneg %p306
      %p724 = pneg %p330
      %p725 = pneg %p327
      %p726 = pneg %p351
      %p727 = pneg %p348
      %p728 = pneg %p372
      %p729 = pneg %p369
      %p730 = pneg %p393
      %p731 = pneg %p390
      %p732 = pneg %p414
      %p733 = pneg %p411
      %p734 = pneg %p435
      %p735 = pneg %p432
      %p736 = pneg %p456
      %p737 = pneg %p453
      %p738 = pneg %p477
      %p739 = pneg %p474
      %p740 = pneg %p498
      %p741 = pneg %p495
      %p742 = pneg %p519
      %p743 = pneg %p516
      %p744 = pneg %p540
      %p745 = pneg %p537
      %p746 = pneg %p561
      %p747 = pneg %p558
      %p748 = pneg %p587
      %p749 = pneg %p584
      %p750 = scmp.lt.s32.totalorder %s36, 1
      %s751 = scalar_select %p750, %s36, 1
      %s752 = smul.addr %s751, 4
      %s753 = smul.addr %s752, 8
      %s754 = scalar_lea.vmem %s25, %s753
      %p755 = scmp.lt.s32.totalorder %s36, 1
      %s756 = scalar_select %p755, %s36, 1
      %s757 = smul.addr %s756, 2
      %s758 = smul.addr %s757, 4
      %s759 = scalar_lea.vmem %s0, %s758
      %p760 = scmp.lt.s32.totalorder %s36, 1
      %s761 = scalar_select %p760, %s36, 1
      %s762 = smul.addr %s761, 4
      %s763 = smul.addr %s762, 8
      %s764 = scalar_lea.vmem %s25, %s763
      %v765 = vld [vmem:[%s759] sm:$0xff]
      %v766 = vlaneseq
      %v767 = vand.u32 %v766, 127
      %v768 = vadd.s32 %v767, 128
      %vm769 = vcmp.lt.s32.totalorder %v767, 0
      %v770 = vsub.s32 0, %v767
      %v771 = vsel %vm769, %v770, %v767
      %v772 = vshrl.u32 %v771, 4
      %v773 = vand.u32 %v771, 15
      %v774 = vsub.s32 0, %v773
      %v775 = vsel %vm769, %v774, %v773
      %vm776 = vcmp.lt.s32.totalorder %v768, 0
      %v777 = vsub.s32 0, %v768
      %v778 = vsel %vm776, %v777, %v768
      %v779 = vshrl.u32 %v778, 4
      %v780 = vand.u32 %v778, 15
      %v781 = vsub.s32 0, %v780
      %v782 = vsel %vm776, %v781, %v780
      %vm783 = vcmp.ne.s32.totalorder %v775, 0
      %vm784 = vcmp.ne.s32.totalorder %v782, 0
      %vm785 = vcmp.lt.s32.totalorder %v775, 0
      %vm786 = vcmp.lt.s32.totalorder %v782, 0
      %vm787 = vmand %vm785, %vm783
      %vm788 = vmand %vm786, %vm784
      %v789 = vadd.s32 %v775, 16
      %v790 = vadd.s32 %v782, 16
      %v791 = vsel %vm787, %v789, %v775
      %v792 = vsel %vm788, %v790, %v782
      %794 = vst [vmem:[#allocation1] ss:$2 sm:$0xff] %v765
      %v795 = vld.sshfl [vmem:[#allocation1] sm:$0xff pattern:$0x75316420]
      %v796 = vld.sshfl [vmem:[#allocation1 + $0x8] sm:$0xff pattern:$0x75316420]
      %797 = vrot.lane.b32.xlu0 %v795, 17
      %v798 = vpop.permute.xlu0 %797
      %799 = vrot.lane.b32.xlu0 %v796, 17
      %v800 = vpop.permute.xlu0 %799
      %vm801 = vcmask 138240
      %v802 = vsel %vm801, %v798, %v800
      %v806 = vsel %vm801, 0.0, %v798
      %v807 = vsel %vm801, %v800, 0.0
      %v808 = vadd.s32 %v791, 4294967295
      %v809 = vadd.s32 %v792, 4294967295
      %vm810 = vcmp.ge.s32.totalorder %v808, 0
      %vm811 = vcmp.ge.s32.totalorder %v809, 0
      %vm812 = vcmp.lt.s32.totalorder %v808, 16
      %vm813 = vcmp.lt.s32.totalorder %v809, 16
      %vm814 = vmand %vm810, %vm812
      %vm815 = vmand %vm811, %vm813
      %v816 = vsel %vm814, 1, 0
      %v817 = vsel %vm815, 1, 0
      %v818 = vcvt.s32.f32 %v816
      %v819 = vcvt.s32.f32 %v817
      %v820 = vmul.f32 %v806, %v818
      %v821 = vmul.f32 %v802, %v819
      %v822 = vadd.s32 %v791, 1
      %v823 = vadd.s32 %v792, 1
      %vm824 = vcmp.ge.s32.totalorder %v822, 0
      %vm825 = vcmp.ge.s32.totalorder %v823, 0
      %vm826 = vcmp.lt.s32.totalorder %v822, 16
      %vm827 = vcmp.lt.s32.totalorder %v823, 16
      %vm828 = vmand %vm824, %vm826
      %vm829 = vmand %vm825, %vm827
      %v830 = vsel %vm828, 1, 0
      %v831 = vsel %vm829, 1, 0
      %v832 = vcvt.s32.f32 %v830
      %v833 = vcvt.s32.f32 %v831
      %836 = vrot.lane.b32.xlu0 %v832, 2
      %v837 = vpop.permute.xlu0 %836
      %838 = vrot.lane.b32.xlu0 %v833, 2
      %v839 = vpop.permute.xlu0 %838
      %vm840 = vcmask 15360
      %v841 = vsel %vm840, %v837, %v839
      %v845 = vmul.f32 %v806, %v837
      %v846 = vmul.f32 %v802, %v841
      %v847 = vmul.f32 %v807, %v839
      %850 = vrot.lane.b32.xlu0 %v818, 16
      %v851 = vpop.permute.xlu0 %850
      %852 = vrot.lane.b32.xlu0 %v819, 16
      %v853 = vpop.permute.xlu0 %852
      %vm854 = vcmask 130048
      %v855 = vsel %vm854, %v851, %v853
      %v859 = vmul.f32 %v806, %v851
      %v860 = vmul.f32 %v802, %v855
      %v861 = vmul.f32 %v807, %v853
      %862 = vrot.lane.b32.xlu0 %v832, 18
      %v863 = vpop.permute.xlu0 %862
      %864 = vrot.lane.b32.xlu0 %v833, 18
      %v865 = vpop.permute.xlu0 %864
      %vm866 = vcmask 146432
      %v867 = vsel %vm866, %v863, %v865
      %v871 = vmul.f32 %v806, %v863
      %v872 = vmul.f32 %v802, %v867
      %v873 = vmul.f32 %v807, %v865
      %874 = vrot.lane.b32.xlu0 %v818, 32
      %v875 = vpop.permute.xlu0 %874
      %876 = vrot.lane.b32.xlu0 %v819, 32
      %v877 = vpop.permute.xlu0 %876
      %vm878 = vcmask 261120
      %v879 = vsel %vm878, %v875, %v877
      %v883 = vmul.f32 %v806, %v875
      %v884 = vmul.f32 %v802, %v879
      %v885 = vmul.f32 %v807, %v877
      %886 = vrot.lane.b32.xlu0 %v832, 34
      %v887 = vpop.permute.xlu0 %886
      %888 = vrot.lane.b32.xlu0 %v833, 34
      %v889 = vpop.permute.xlu0 %888
      %vm890 = vcmask 277504
      %v891 = vsel %vm890, %v887, %v889
      %v895 = vmul.f32 %v806, %v887
      %v896 = vmul.f32 %v802, %v891
      %v897 = vmul.f32 %v807, %v889
      %900 = vrot.lane.b32.xlu0 %v806, 127
      %v901 = vpop.permute.xlu0 %900
      %902 = vrot.lane.b32.xlu0 %v802, 127
      %v903 = vpop.permute.xlu0 %902
      %904 = vrot.lane.b32.xlu0 %v807, 127
      %v905 = vpop.permute.xlu0 %904
      %vm906 = vcmask 1039360
      %v907 = vsel %vm906, %v901, %v903
      %v908 = vsel %vm906, %v903, %v905
      %v911 = vadd.f32 %v820, %v907
      %v912 = vadd.f32 %v821, %v908
      %916 = vrot.lane.b32.xlu0 %v845, 126
      %v917 = vpop.permute.xlu0 %916
      %918 = vrot.lane.b32.xlu0 %v846, 126
      %v919 = vpop.permute.xlu0 %918
      %920 = vrot.lane.b32.xlu0 %v847, 126
      %v921 = vpop.permute.xlu0 %920
      %vm922 = vcmask 1031168
      %v923 = vsel %vm922, %v917, %v919
      %v924 = vsel %vm922, %v919, %v921
      %v927 = vadd.f32 %v911, %v923
      %v928 = vadd.f32 %v912, %v924
      %932 = vrot.lane.b32.xlu0 %v859, 112
      %v933 = vpop.permute.xlu0 %932
      %934 = vrot.lane.b32.xlu0 %v860, 112
      %v935 = vpop.permute.xlu0 %934
      %936 = vrot.lane.b32.xlu0 %v861, 112
      %v937 = vpop.permute.xlu0 %936
      %vm938 = vcmask 916480
      %v939 = vsel %vm938, %v933, %v935
      %v940 = vsel %vm938, %v935, %v937
      %v943 = vadd.f32 %v927, %v939
      %v944 = vadd.f32 %v928, %v940
      %945 = vrot.lane.b32.xlu0 %v806, 111
      %v946 = vpop.permute.xlu0 %945
      %947 = vrot.lane.b32.xlu0 %v802, 111
      %v948 = vpop.permute.xlu0 %947
      %949 = vrot.lane.b32.xlu0 %v807, 111
      %v950 = vpop.permute.xlu0 %949
      %vm951 = vcmask 908288
      %v952 = vsel %vm951, %v946, %v948
      %v953 = vsel %vm951, %v948, %v950
      %v956 = vadd.f32 %v943, %v952
      %v957 = vadd.f32 %v944, %v953
      %961 = vrot.lane.b32.xlu0 %v871, 110
      %v962 = vpop.permute.xlu0 %961
      %963 = vrot.lane.b32.xlu0 %v872, 110
      %v964 = vpop.permute.xlu0 %963
      %965 = vrot.lane.b32.xlu0 %v873, 110
      %v966 = vpop.permute.xlu0 %965
      %vm967 = vcmask 900096
      %v968 = vsel %vm967, %v962, %v964
      %v969 = vsel %vm967, %v964, %v966
      %v972 = vadd.f32 %v956, %v968
      %v973 = vadd.f32 %v957, %v969
      %977 = vrot.lane.b32.xlu0 %v883, 96
      %v978 = vpop.permute.xlu0 %977
      %979 = vrot.lane.b32.xlu0 %v884, 96
      %v980 = vpop.permute.xlu0 %979
      %981 = vrot.lane.b32.xlu0 %v885, 96
      %v982 = vpop.permute.xlu0 %981
      %vm983 = vcmask 785408
      %v984 = vsel %vm983, %v978, %v980
      %v985 = vsel %vm983, %v980, %v982
      %v988 = vadd.f32 %v972, %v984
      %v989 = vadd.f32 %v973, %v985
      %990 = vrot.lane.b32.xlu0 %v806, 95
      %v991 = vpop.permute.xlu0 %990
      %992 = vrot.lane.b32.xlu0 %v802, 95
      %v993 = vpop.permute.xlu0 %992
      %994 = vrot.lane.b32.xlu0 %v807, 95
      %v995 = vpop.permute.xlu0 %994
      %vm996 = vcmask 777216
      %v997 = vsel %vm996, %v991, %v993
      %v998 = vsel %vm996, %v993, %v995
      %v1001 = vadd.f32 %v988, %v997
      %v1002 = vadd.f32 %v989, %v998
      %1006 = vrot.lane.b32.xlu0 %v895, 94
      %v1007 = vpop.permute.xlu0 %1006
      %1008 = vrot.lane.b32.xlu0 %v896, 94
      %v1009 = vpop.permute.xlu0 %1008
      %1010 = vrot.lane.b32.xlu0 %v897, 94
      %v1011 = vpop.permute.xlu0 %1010
      %vm1012 = vcmask 769024
      %v1013 = vsel %vm1012, %v1007, %v1009
      %v1014 = vsel %vm1012, %v1009, %v1011
      %v1017 = vadd.f32 %v1001, %v1013
      %v1018 = vadd.f32 %v1002, %v1014
      %v1019 = vmul.f32 %v1017, 0.11111111
      %v1020 = vmul.f32 %v1018, 0.11111111
      %v1021 = vld [vmem:[%s1] sm:$0xf]
      %vm1022 = vcmask 31744
      %v1024 = vsel %vm1022, %v1021, 0
      %vm1026 = vcmask 1043456
      %v1028 = vsel %vm1026, %v1019, 0
      %v1031 = vsel %vm1026, %v1020, 0
      %1033 = vmatpush.msra.mxu0 0.0
      %1034 = vmatpush.msra.mxu0 0.0
      %1035 = vmatpush.msra.mxu0 0.0
      %1036 = vmatpush.msra.mxu0 0.0
      %1037 = vmatpush.msra.mxu0 0.0
      %1038 = vmatpush.msra.mxu0 0.0
      %1039 = vmatpush.msra.mxu0 0.0
      %1040 = vmatpush.msra.mxu0 0.0
      %1041 = vmatpush.msra.mxu0 0.0
      %1042 = vmatpush.msra.mxu0 0.0
      %1043 = vmatpush.msra.mxu0 0.0
      %1044 = vmatpush.msra.mxu0 0.0
      %1045 = vmatpush.msra.mxu0 0.0
      %1046 = vmatpush.msra.mxu0 0.0
      %1047 = vmatpush.msra.mxu0 0.0
      %1048 = vmatpush.msra.mxu0 %v1028
      %1049 = vmatmul.f32.gmra.mxu0 %v1024
      %v1050 = vpop.f32.mrf.mxu0
      %v1051 = vadd.f32 0.0, %v1050
      %1052 = vdwg.mxu0
      %1053 = vmatpush.msra.mxu0 0.0
      %1054 = vmatpush.msra.mxu0 0.0
      %1055 = vmatpush.msra.mxu0 0.0
      %1056 = vmatpush.msra.mxu0 0.0
      %1057 = vmatpush.msra.mxu0 0.0
      %1058 = vmatpush.msra.mxu0 0.0
      %1059 = vmatpush.msra.mxu0 0.0
      %1060 = vmatpush.msra.mxu0 0.0
      %1061 = vmatpush.msra.mxu0 0.0
      %1062 = vmatpush.msra.mxu0 0.0
      %1063 = vmatpush.msra.mxu0 0.0
      %1064 = vmatpush.msra.mxu0 0.0
      %1065 = vmatpush.msra.mxu0 0.0
      %1066 = vmatpush.msra.mxu0 0.0
      %1067 = vmatpush.msra.mxu0 0.0
      %1068 = vmatpush.msra.mxu0 %v1031
      %1069 = vmatmul.f32.gmra.mxu0 %v1024
      %v1070 = vpop.f32.mrf.mxu0
      %v1071 = vadd.f32 0.0, %v1070
      %1072 = vdwg.mxu0
      %v1073 = vld [vmem:[%s2] sm:$0xf]
      %1075 = vset.pattern.permute.xlu0 0
      %1076 = vperm.xlu0 %1075, %v1073
      %v1077 = vpop.permute.xlu0 %1076
      %v1079 = vmul.f32 %v1051, %v1077
      %v1080 = vmul.f32 %v1071, %v1077
      %v1081 = vld [vmem:[%s3] sm:$0xf]
      %1083 = vset.pattern.permute.xlu0 0
      %1084 = vperm.xlu0 %1083, %v1081
      %v1085 = vpop.permute.xlu0 %1084
      %v1087 = vadd.f32 %v1079, %v1085
      %v1088 = vadd.f32 %v1080, %v1085
      %v1089 = vmax.f32 %v1087, 0.0
      %v1090 = vmax.f32 %v1088, 0.0
      %v1091 = vld [vmem:[%s4] sm:$0xf]
      %1092 = vst [vmem:[#allocation1] ss:$2 sm:$0xff] %v765
      %v1093 = vld.sshfl [vmem:[#allocation1] sm:$0xff pattern:$0x75316420]
      %v1094 = vld.sshfl [vmem:[#allocation1 + $0x8] sm:$0xff pattern:$0x75316420]
      %v1096 = vsel %vm1022, %v1091, 0
      %v1098 = vsel %vm1026, %v1093, 0
      %v1100 = vsel %vm1026, %v1094, 0
      %1102 = vmatpush.msra.mxu0 0.0
      %1103 = vmatpush.msra.mxu0 0.0
      %1104 = vmatpush.msra.mxu0 0.0
      %1105 = vmatpush.msra.mxu0 0.0
      %1106 = vmatpush.msra.mxu0 0.0
      %1107 = vmatpush.msra.mxu0 0.0
      %1108 = vmatpush.msra.mxu0 0.0
      %1109 = vmatpush.msra.mxu0 0.0
      %1110 = vmatpush.msra.mxu0 0.0
      %1111 = vmatpush.msra.mxu0 0.0
      %1112 = vmatpush.msra.mxu0 0.0
      %1113 = vmatpush.msra.mxu0 0.0
      %1114 = vmatpush.msra.mxu0 0.0
      %1115 = vmatpush.msra.mxu0 0.0
      %1116 = vmatpush.msra.mxu0 0.0
      %1117 = vmatpush.msra.mxu0 %v1098
      %1118 = vmatmul.f32.gmra.mxu0 %v1096
      %v1119 = vpop.f32.mrf.mxu0
      %v1120 = vadd.f32 0.0, %v1119
      %1121 = vdwg.mxu0
      %1122 = vmatpush.msra.mxu0 0.0
      %1123 = vmatpush.msra.mxu0 0.0
      %1124 = vmatpush.msra.mxu0 0.0
      %1125 = vmatpush.msra.mxu0 0.0
      %1126 = vmatpush.msra.mxu0 0.0
      %1127 = vmatpush.msra.mxu0 0.0
      %1128 = vmatpush.msra.mxu0 0.0
      %1129 = vmatpush.msra.mxu0 0.0
      %1130 = vmatpush.msra.mxu0 0.0
      %1131 = vmatpush.msra.mxu0 0.0
      %1132 = vmatpush.msra.mxu0 0.0
      %1133 = vmatpush.msra.mxu0 0.0
      %1134 = vmatpush.msra.mxu0 0.0
      %1135 = vmatpush.msra.mxu0 0.0
      %1136 = vmatpush.msra.mxu0 0.0
      %1137 = vmatpush.msra.mxu0 %v1100
      %1138 = vmatmul.f32.gmra.mxu0 %v1096
      %v1139 = vpop.f32.mrf.mxu0
      %v1140 = vadd.f32 0.0, %v1139
      %1141 = vdwg.mxu0
      %v1142 = vld [vmem:[%s5] sm:$0xf]
      %1144 = vset.pattern.permute.xlu0 0
      %1145 = vperm.xlu0 %1144, %v1142
      %v1146 = vpop.permute.xlu0 %1145
      %v1148 = vmul.f32 %v1120, %v1146
      %v1149 = vmul.f32 %v1140, %v1146
      %v1150 = vld [vmem:[%s6] sm:$0xf]
      %1152 = vset.pattern.permute.xlu0 0
      %1153 = vperm.xlu0 %1152, %v1150
      %v1154 = vpop.permute.xlu0 %1153
      %v1156 = vadd.f32 %v1148, %v1154
      %v1157 = vadd.f32 %v1149, %v1154
      %v1158 = vmax.f32 %v1156, 0.0
      %v1159 = vmax.f32 %v1157, 0.0
      %v1160 = vld [vmem:[%s7] sm:$0xf]
      %1161 = vst [vmem:[#allocation1] ss:$2 sm:$0xff] %v765
      %v1162 = vld.sshfl [vmem:[#allocation1] sm:$0xff pattern:$0x75316420]
      %v1163 = vld.sshfl [vmem:[#allocation1 + $0x8] sm:$0xff pattern:$0x75316420]
      %v1165 = vsel %vm1022, %v1160, 0
      %v1167 = vsel %vm1026, %v1162, 0
      %v1169 = vsel %vm1026, %v1163, 0
      %1171 = vmatpush.msra.mxu0 0.0
      %1172 = vmatpush.msra.mxu0 0.0
      %1173 = vmatpush.msra.mxu0 0.0
      %1174 = vmatpush.msra.mxu0 0.0
      %1175 = vmatpush.msra.mxu0 0.0
      %1176 = vmatpush.msra.mxu0 0.0
      %1177 = vmatpush.msra.mxu0 0.0
      %1178 = vmatpush.msra.mxu0 0.0
      %1179 = vmatpush.msra.mxu0 0.0
      %1180 = vmatpush.msra.mxu0 0.0
      %1181 = vmatpush.msra.mxu0 0.0
      %1182 = vmatpush.msra.mxu0 0.0
      %1183 = vmatpush.msra.mxu0 0.0
      %1184 = vmatpush.msra.mxu0 0.0
      %1185 = vmatpush.msra.mxu0 0.0
      %1186 = vmatpush.msra.mxu0 %v1167
      %1187 = vmatmul.f32.gmra.mxu0 %v1165
      %v1188 = vpop.f32.mrf.mxu0
      %v1189 = vadd.f32 0.0, %v1188
      %1190 = vdwg.mxu0
      %1191 = vmatpush.msra.mxu0 0.0
      %1192 = vmatpush.msra.mxu0 0.0
      %1193 = vmatpush.msra.mxu0 0.0
      %1194 = vmatpush.msra.mxu0 0.0
      %1195 = vmatpush.msra.mxu0 0.0
      %1196 = vmatpush.msra.mxu0 0.0
      %1197 = vmatpush.msra.mxu0 0.0
      %1198 = vmatpush.msra.mxu0 0.0
      %1199 = vmatpush.msra.mxu0 0.0
      %1200 = vmatpush.msra.mxu0 0.0
      %1201 = vmatpush.msra.mxu0 0.0
      %1202 = vmatpush.msra.mxu0 0.0
      %1203 = vmatpush.msra.mxu0 0.0
      %1204 = vmatpush.msra.mxu0 0.0
      %1205 = vmatpush.msra.mxu0 0.0
      %1206 = vmatpush.msra.mxu0 %v1169
      %1207 = vmatmul.f32.gmra.mxu0 %v1165
      %v1208 = vpop.f32.mrf.mxu0
      %v1209 = vadd.f32 0.0, %v1208
      %1210 = vdwg.mxu0
      %v1211 = vld [vmem:[%s8] sm:$0xf]
      %1213 = vset.pattern.permute.xlu0 0
      %1214 = vperm.xlu0 %1213, %v1211
      %v1215 = vpop.permute.xlu0 %1214
      %v1217 = vmul.f32 %v1189, %v1215
      %v1218 = vmul.f32 %v1209, %v1215
      %v1219 = vld [vmem:[%s9] sm:$0xf]
      %1221 = vset.pattern.permute.xlu0 0
      %1222 = vperm.xlu0 %1221, %v1219
      %v1223 = vpop.permute.xlu0 %1222
      %v1225 = vadd.f32 %v1217, %v1223
      %v1226 = vadd.f32 %v1218, %v1223
      %v1227 = vmax.f32 %v1225, 0.0
      %v1228 = vmax.f32 %v1226, 0.0
      %1231 = vrot.lane.b32.xlu0 %v1227, 17
      %v1232 = vpop.permute.xlu0 %1231
      %1233 = vrot.lane.b32.xlu0 %v1228, 17
      %v1234 = vpop.permute.xlu0 %1233
      %v1235 = vsel %vm801, %v1232, %v1234
      %v1239 = vsel %vm801, 0.0, %v1232
      %v1240 = vsel %vm801, %v1234, 0.0
      %v1241 = vmul.f32 %v1239, %v818
      %v1242 = vmul.f32 %v1235, %v819
      %v1243 = vmul.f32 %v1239, %v837
      %v1244 = vmul.f32 %v1235, %v841
      %v1245 = vmul.f32 %v1240, %v839
      %v1246 = vmul.f32 %v1239, %v851
      %v1247 = vmul.f32 %v1235, %v855
      %v1248 = vmul.f32 %v1240, %v853
      %v1249 = vmul.f32 %v1239, %v863
      %v1250 = vmul.f32 %v1235, %v867
      %v1251 = vmul.f32 %v1240, %v865
      %v1252 = vmul.f32 %v1239, %v875
      %v1253 = vmul.f32 %v1235, %v879
      %v1254 = vmul.f32 %v1240, %v877
      %v1255 = vmul.f32 %v1239, %v887
      %v1256 = vmul.f32 %v1235, %v891
      %v1257 = vmul.f32 %v1240, %v889
      %v1260 = vrot.slane %v1239, 4
      %v1261 = vrot.slane %v1235, 4
      %v1262 = vrot.slane %v1240, 4
      %1263 = vrot.lane.b32.xlu0 %v1260, 127
      %v1264 = vpop.permute.xlu0 %1263
      %1265 = vrot.lane.b32.xlu0 %v1261, 127
      %v1266 = vpop.permute.xlu0 %1265
      %1267 = vrot.lane.b32.xlu0 %v1262, 127
      %v1268 = vpop.permute.xlu0 %1267
      %v1269 = vsel %vm906, %v1264, %v1266
      %v1270 = vsel %vm906, %v1266, %v1268
      %1276 = vrot.lane.b32.xlu0 %v1243, 126
      %v1277 = vpop.permute.xlu0 %1276
      %1278 = vrot.lane.b32.xlu0 %v1244, 126
      %v1279 = vpop.permute.xlu0 %1278
      %1280 = vrot.lane.b32.xlu0 %v1245, 126
      %v1281 = vpop.permute.xlu0 %1280
      %v1282 = vsel %vm922, %v1277, %v1279
      %v1283 = vsel %vm922, %v1279, %v1281
      %v1289 = vrot.slane %v1246, 4
      %v1290 = vrot.slane %v1247, 4
      %v1291 = vrot.slane %v1248, 4
      %1292 = vrot.lane.b32.xlu0 %v1289, 112
      %v1293 = vpop.permute.xlu0 %1292
      %1294 = vrot.lane.b32.xlu0 %v1290, 112
      %v1295 = vpop.permute.xlu0 %1294
      %1296 = vrot.lane.b32.xlu0 %v1291, 112
      %v1297 = vpop.permute.xlu0 %1296
      %v1298 = vsel %vm938, %v1293, %v1295
      %v1299 = vsel %vm938, %v1295, %v1297
      %1302 = vrot.lane.b32.xlu0 %v1239, 111
      %v1303 = vpop.permute.xlu0 %1302
      %1304 = vrot.lane.b32.xlu0 %v1235, 111
      %v1305 = vpop.permute.xlu0 %1304
      %1306 = vrot.lane.b32.xlu0 %v1240, 111
      %v1307 = vpop.permute.xlu0 %1306
      %v1308 = vsel %vm951, %v1303, %v1305
      %v1309 = vsel %vm951, %v1305, %v1307
      %v1315 = vrot.slane %v1249, 4
      %v1316 = vrot.slane %v1250, 4
      %v1317 = vrot.slane %v1251, 4
      %1318 = vrot.lane.b32.xlu0 %v1315, 110
      %v1319 = vpop.permute.xlu0 %1318
      %1320 = vrot.lane.b32.xlu0 %v1316, 110
      %v1321 = vpop.permute.xlu0 %1320
      %1322 = vrot.lane.b32.xlu0 %v1317, 110
      %v1323 = vpop.permute.xlu0 %1322
      %v1324 = vsel %vm967, %v1319, %v1321
      %v1325 = vsel %vm967, %v1321, %v1323
      %1331 = vrot.lane.b32.xlu0 %v1252, 96
      %v1332 = vpop.permute.xlu0 %1331
      %1333 = vrot.lane.b32.xlu0 %v1253, 96
      %v1334 = vpop.permute.xlu0 %1333
      %1335 = vrot.lane.b32.xlu0 %v1254, 96
      %v1336 = vpop.permute.xlu0 %1335
      %v1337 = vsel %vm983, %v1332, %v1334
      %v1338 = vsel %vm983, %v1334, %v1336
      %1341 = vrot.lane.b32.xlu0 %v1260, 95
      %v1342 = vpop.permute.xlu0 %1341
      %1343 = vrot.lane.b32.xlu0 %v1261, 95
      %v1344 = vpop.permute.xlu0 %1343
      %1345 = vrot.lane.b32.xlu0 %v1262, 95
      %v1346 = vpop.permute.xlu0 %1345
      %v1347 = vsel %vm996, %v1342, %v1344
      %v1348 = vsel %vm996, %v1344, %v1346
      %1354 = vrot.lane.b32.xlu0 %v1255, 94
      %v1355 = vpop.permute.xlu0 %1354
      %1356 = vrot.lane.b32.xlu0 %v1256, 94
      %v1357 = vpop.permute.xlu0 %1356
      %1358 = vrot.lane.b32.xlu0 %v1257, 94
      %v1359 = vpop.permute.xlu0 %1358
      %v1360 = vsel %vm1012, %v1355, %v1357
      %v1361 = vsel %vm1012, %v1357, %v1359
      %v1362 = vsel %vm1026, %v1241, %v1269
      %v1363 = vsel %vm1026, %v1242, %v1270
      %v1364 = vsel %vm1026, %v1282, %v1298
      %v1365 = vsel %vm1026, %v1283, %v1299
      %v1366 = vsel %vm1026, %v1308, %v1324
      %v1367 = vsel %vm1026, %v1309, %v1325
      %v1368 = vsel %vm1026, %v1337, %v1347
      %v1369 = vsel %vm1026, %v1338, %v1348
      %v1370 = vld [vmem:[%s10] sm:$0xf]
      %vm1371 = vcmask 293888
      %v1373 = vsel %vm1371, %v1370, 0
      %v1375 = vsel %vm1026, %v1360, 0
      %v1377 = vsel %vm1026, %v1361, 0
      %1379 = vmatpush.msra.mxu0 0.0
      %1380 = vmatpush.msra.mxu0 0.0
      %1381 = vmatpush.msra.mxu0 0.0
      %1382 = vmatpush.msra.mxu0 0.0
      %1383 = vmatpush.msra.mxu0 0.0
      %1384 = vmatpush.msra.mxu0 0.0
      %1385 = vmatpush.msra.mxu0 0.0
      %1386 = vmatpush.msra.mxu0 0.0
      %1387 = vmatpush.msra.mxu0 0.0
      %1388 = vmatpush.msra.mxu0 0.0
      %1389 = vmatpush.msra.mxu0 0.0
      %1390 = vmatpush.msra.mxu0 %v1375
      %1391 = vmatpush.msra.mxu0 %v1368
      %1392 = vmatpush.msra.mxu0 %v1366
      %1393 = vmatpush.msra.mxu0 %v1364
      %1394 = vmatpush.msra.mxu0 %v1362
      %1395 = vmatmul.f32.gmra.mxu0 %v1373
      %v1396 = vpop.f32.mrf.mxu0
      %v1397 = vadd.f32 0.0, %v1396
      %1398 = vdwg.mxu0
      %1399 = vmatpush.msra.mxu0 0.0
      %1400 = vmatpush.msra.mxu0 0.0
      %1401 = vmatpush.msra.mxu0 0.0
      %1402 = vmatpush.msra.mxu0 0.0
      %1403 = vmatpush.msra.mxu0 0.0
      %1404 = vmatpush.msra.mxu0 0.0
      %1405 = vmatpush.msra.mxu0 0.0
      %1406 = vmatpush.msra.mxu0 0.0
      %1407 = vmatpush.msra.mxu0 0.0
      %1408 = vmatpush.msra.mxu0 0.0
      %1409 = vmatpush.msra.mxu0 0.0
      %1410 = vmatpush.msra.mxu0 %v1377
      %1411 = vmatpush.msra.mxu0 %v1369
      %1412 = vmatpush.msra.mxu0 %v1367
      %1413 = vmatpush.msra.mxu0 %v1365
      %1414 = vmatpush.msra.mxu0 %v1363
      %1415 = vmatmul.f32.gmra.mxu0 %v1373
      %v1416 = vpop.f32.mrf.mxu0
      %v1417 = vadd.f32 0.0, %v1416
      %1418 = vdwg.mxu0
      %v1419 = vld [vmem:[%s11] sm:$0xf]
      %1421 = vset.pattern.permute.xlu0 0
      %1422 = vperm.xlu0 %1421, %v1419
      %v1423 = vpop.permute.xlu0 %1422
      %v1425 = vmul.f32 %v1397, %v1423
      %v1426 = vmul.f32 %v1417, %v1423
      %v1427 = vld [vmem:[%s12] sm:$0xf]
      %1429 = vset.pattern.permute.xlu0 0
      %1430 = vperm.xlu0 %1429, %v1427
      %v1431 = vpop.permute.xlu0 %1430
      %v1433 = vadd.f32 %v1425, %v1431
      %v1434 = vadd.f32 %v1426, %v1431
      %v1435 = vmax.f32 %v1433, 0.0
      %v1436 = vmax.f32 %v1434, 0.0
      %1439 = vrot.lane.b32.xlu0 %v1435, 17
      %v1440 = vpop.permute.xlu0 %1439
      %1441 = vrot.lane.b32.xlu0 %v1436, 17
      %v1442 = vpop.permute.xlu0 %1441
      %v1443 = vsel %vm801, %v1440, %v1442
      %v1447 = vsel %vm801, 0.0, %v1440
      %v1448 = vsel %vm801, %v1442, 0.0
      %v1449 = vmul.f32 %v1447, %v818
      %v1450 = vmul.f32 %v1443, %v819
      %v1451 = vmul.f32 %v1447, %v837
      %v1452 = vmul.f32 %v1443, %v841
      %v1453 = vmul.f32 %v1448, %v839
      %v1454 = vmul.f32 %v1447, %v851
      %v1455 = vmul.f32 %v1443, %v855
      %v1456 = vmul.f32 %v1448, %v853
      %v1457 = vmul.f32 %v1447, %v863
      %v1458 = vmul.f32 %v1443, %v867
      %v1459 = vmul.f32 %v1448, %v865
      %v1460 = vmul.f32 %v1447, %v875
      %v1461 = vmul.f32 %v1443, %v879
      %v1462 = vmul.f32 %v1448, %v877
      %v1463 = vmul.f32 %v1447, %v887
      %v1464 = vmul.f32 %v1443, %v891
      %v1465 = vmul.f32 %v1448, %v889
      %v1468 = vrot.slane %v1447, 4
      %v1469 = vrot.slane %v1443, 4
      %v1470 = vrot.slane %v1448, 4
      %1471 = vrot.lane.b32.xlu0 %v1468, 127
      %v1472 = vpop.permute.xlu0 %1471
      %1473 = vrot.lane.b32.xlu0 %v1469, 127
      %v1474 = vpop.permute.xlu0 %1473
      %1475 = vrot.lane.b32.xlu0 %v1470, 127
      %v1476 = vpop.permute.xlu0 %1475
      %v1477 = vsel %vm906, %v1472, %v1474
      %v1478 = vsel %vm906, %v1474, %v1476
      %1484 = vrot.lane.b32.xlu0 %v1451, 126
      %v1485 = vpop.permute.xlu0 %1484
      %1486 = vrot.lane.b32.xlu0 %v1452, 126
      %v1487 = vpop.permute.xlu0 %1486
      %1488 = vrot.lane.b32.xlu0 %v1453, 126
      %v1489 = vpop.permute.xlu0 %1488
      %v1490 = vsel %vm922, %v1485, %v1487
      %v1491 = vsel %vm922, %v1487, %v1489
      %v1497 = vrot.slane %v1454, 4
      %v1498 = vrot.slane %v1455, 4
      %v1499 = vrot.slane %v1456, 4
      %1500 = vrot.lane.b32.xlu0 %v1497, 112
      %v1501 = vpop.permute.xlu0 %1500
      %1502 = vrot.lane.b32.xlu0 %v1498, 112
      %v1503 = vpop.permute.xlu0 %1502
      %1504 = vrot.lane.b32.xlu0 %v1499, 112
      %v1505 = vpop.permute.xlu0 %1504
      %v1506 = vsel %vm938, %v1501, %v1503
      %v1507 = vsel %vm938, %v1503, %v1505
      %1510 = vrot.lane.b32.xlu0 %v1447, 111
      %v1511 = vpop.permute.xlu0 %1510
      %1512 = vrot.lane.b32.xlu0 %v1443, 111
      %v1513 = vpop.permute.xlu0 %1512
      %1514 = vrot.lane.b32.xlu0 %v1448, 111
      %v1515 = vpop.permute.xlu0 %1514
      %v1516 = vsel %vm951, %v1511, %v1513
      %v1517 = vsel %vm951, %v1513, %v1515
      %v1523 = vrot.slane %v1457, 4
      %v1524 = vrot.slane %v1458, 4
      %v1525 = vrot.slane %v1459, 4
      %1526 = vrot.lane.b32.xlu0 %v1523, 110
      %v1527 = vpop.permute.xlu0 %1526
      %1528 = vrot.lane.b32.xlu0 %v1524, 110
      %v1529 = vpop.permute.xlu0 %1528
      %1530 = vrot.lane.b32.xlu0 %v1525, 110
      %v1531 = vpop.permute.xlu0 %1530
      %v1532 = vsel %vm967, %v1527, %v1529
      %v1533 = vsel %vm967, %v1529, %v1531
      %1539 = vrot.lane.b32.xlu0 %v1460, 96
      %v1540 = vpop.permute.xlu0 %1539
      %1541 = vrot.lane.b32.xlu0 %v1461, 96
      %v1542 = vpop.permute.xlu0 %1541
      %1543 = vrot.lane.b32.xlu0 %v1462, 96
      %v1544 = vpop.permute.xlu0 %1543
      %v1545 = vsel %vm983, %v1540, %v1542
      %v1546 = vsel %vm983, %v1542, %v1544
      %1549 = vrot.lane.b32.xlu0 %v1468, 95
      %v1550 = vpop.permute.xlu0 %1549
      %1551 = vrot.lane.b32.xlu0 %v1469, 95
      %v1552 = vpop.permute.xlu0 %1551
      %1553 = vrot.lane.b32.xlu0 %v1470, 95
      %v1554 = vpop.permute.xlu0 %1553
      %v1555 = vsel %vm996, %v1550, %v1552
      %v1556 = vsel %vm996, %v1552, %v1554
      %1562 = vrot.lane.b32.xlu0 %v1463, 94
      %v1563 = vpop.permute.xlu0 %1562
      %1564 = vrot.lane.b32.xlu0 %v1464, 94
      %v1565 = vpop.permute.xlu0 %1564
      %1566 = vrot.lane.b32.xlu0 %v1465, 94
      %v1567 = vpop.permute.xlu0 %1566
      %v1568 = vsel %vm1012, %v1563, %v1565
      %v1569 = vsel %vm1012, %v1565, %v1567
      %v1570 = vsel %vm1026, %v1449, %v1477
      %v1571 = vsel %vm1026, %v1450, %v1478
      %v1572 = vsel %vm1026, %v1490, %v1506
      %v1573 = vsel %vm1026, %v1491, %v1507
      %v1574 = vsel %vm1026, %v1516, %v1532
      %v1575 = vsel %vm1026, %v1517, %v1533
      %v1576 = vsel %vm1026, %v1545, %v1555
      %v1577 = vsel %vm1026, %v1546, %v1556
      %v1578 = vld [vmem:[%s13] sm:$0xf]
      %v1580 = vsel %vm1371, %v1578, 0
      %v1582 = vsel %vm1026, %v1568, 0
      %v1584 = vsel %vm1026, %v1569, 0
      %1586 = vmatpush.msra.mxu0 0.0
      %1587 = vmatpush.msra.mxu0 0.0
      %1588 = vmatpush.msra.mxu0 0.0
      %1589 = vmatpush.msra.mxu0 0.0
      %1590 = vmatpush.msra.mxu0 0.0
      %1591 = vmatpush.msra.mxu0 0.0
      %1592 = vmatpush.msra.mxu0 0.0
      %1593 = vmatpush.msra.mxu0 0.0
      %1594 = vmatpush.msra.mxu0 0.0
      %1595 = vmatpush.msra.mxu0 0.0
      %1596 = vmatpush.msra.mxu0 0.0
      %1597 = vmatpush.msra.mxu0 %v1582
      %1598 = vmatpush.msra.mxu0 %v1576
      %1599 = vmatpush.msra.mxu0 %v1574
      %1600 = vmatpush.msra.mxu0 %v1572
      %1601 = vmatpush.msra.mxu0 %v1570
      %1602 = vmatmul.f32.gmra.mxu0 %v1580
      %v1603 = vpop.f32.mrf.mxu0
      %v1604 = vadd.f32 0.0, %v1603
      %1605 = vdwg.mxu0
      %1606 = vmatpush.msra.mxu0 0.0
      %1607 = vmatpush.msra.mxu0 0.0
      %1608 = vmatpush.msra.mxu0 0.0
      %1609 = vmatpush.msra.mxu0 0.0
      %1610 = vmatpush.msra.mxu0 0.0
      %1611 = vmatpush.msra.mxu0 0.0
      %1612 = vmatpush.msra.mxu0 0.0
      %1613 = vmatpush.msra.mxu0 0.0
      %1614 = vmatpush.msra.mxu0 0.0
      %1615 = vmatpush.msra.mxu0 0.0
      %1616 = vmatpush.msra.mxu0 0.0
      %1617 = vmatpush.msra.mxu0 %v1584
      %1618 = vmatpush.msra.mxu0 %v1577
      %1619 = vmatpush.msra.mxu0 %v1575
      %1620 = vmatpush.msra.mxu0 %v1573
      %1621 = vmatpush.msra.mxu0 %v1571
      %1622 = vmatmul.f32.gmra.mxu0 %v1580
      %v1623 = vpop.f32.mrf.mxu0
      %v1624 = vadd.f32 0.0, %v1623
      %1625 = vdwg.mxu0
      %v1626 = vld [vmem:[%s14] sm:$0xf]
      %1628 = vset.pattern.permute.xlu0 0
      %1629 = vperm.xlu0 %1628, %v1626
      %v1630 = vpop.permute.xlu0 %1629
      %v1632 = vmul.f32 %v1604, %v1630
      %v1633 = vmul.f32 %v1624, %v1630
      %v1634 = vld [vmem:[%s15] sm:$0xf]
      %1636 = vset.pattern.permute.xlu0 0
      %1637 = vperm.xlu0 %1636, %v1634
      %v1638 = vpop.permute.xlu0 %1637
      %v1640 = vadd.f32 %v1632, %v1638
      %v1641 = vadd.f32 %v1633, %v1638
      %v1642 = vmax.f32 %v1640, 0.0
      %v1643 = vmax.f32 %v1641, 0.0
      %v1644 = vld [vmem:[%s16] sm:$0xf]
      %1645 = vst [vmem:[#allocation1] ss:$2 sm:$0xff] %v765
      %v1646 = vld.sshfl [vmem:[#allocation1] sm:$0xff pattern:$0x75316420]
      %v1647 = vld.sshfl [vmem:[#allocation1 + $0x8] sm:$0xff pattern:$0x75316420]
      %v1649 = vsel %vm1022, %v1644, 0
      %v1651 = vsel %vm1026, %v1646, 0
      %v1653 = vsel %vm1026, %v1647, 0
      %1655 = vmatpush.msra.mxu0 0.0
      %1656 = vmatpush.msra.mxu0 0.0
      %1657 = vmatpush.msra.mxu0 0.0
      %1658 = vmatpush.msra.mxu0 0.0
      %1659 = vmatpush.msra.mxu0 0.0
      %1660 = vmatpush.msra.mxu0 0.0
      %1661 = vmatpush.msra.mxu0 0.0
      %1662 = vmatpush.msra.mxu0 0.0
      %1663 = vmatpush.msra.mxu0 0.0
      %1664 = vmatpush.msra.mxu0 0.0
      %1665 = vmatpush.msra.mxu0 0.0
      %1666 = vmatpush.msra.mxu0 0.0
      %1667 = vmatpush.msra.mxu0 0.0
      %1668 = vmatpush.msra.mxu0 0.0
      %1669 = vmatpush.msra.mxu0 0.0
      %1670 = vmatpush.msra.mxu0 %v1651
      %1671 = vmatmul.f32.gmra.mxu0 %v1649
      %v1672 = vpop.f32.mrf.mxu0
      %v1673 = vadd.f32 0.0, %v1672
      %1674 = vdwg.mxu0
      %1675 = vmatpush.msra.mxu0 0.0
      %1676 = vmatpush.msra.mxu0 0.0
      %1677 = vmatpush.msra.mxu0 0.0
      %1678 = vmatpush.msra.mxu0 0.0
      %1679 = vmatpush.msra.mxu0 0.0
      %1680 = vmatpush.msra.mxu0 0.0
      %1681 = vmatpush.msra.mxu0 0.0
      %1682 = vmatpush.msra.mxu0 0.0
      %1683 = vmatpush.msra.mxu0 0.0
      %1684 = vmatpush.msra.mxu0 0.0
      %1685 = vmatpush.msra.mxu0 0.0
      %1686 = vmatpush.msra.mxu0 0.0
      %1687 = vmatpush.msra.mxu0 0.0
      %1688 = vmatpush.msra.mxu0 0.0
      %1689 = vmatpush.msra.mxu0 0.0
      %1690 = vmatpush.msra.mxu0 %v1653
      %1691 = vmatmul.f32.gmra.mxu0 %v1649
      %v1692 = vpop.f32.mrf.mxu0
      %v1693 = vadd.f32 0.0, %v1692
      %1694 = vdwg.mxu0
      %v1695 = vld [vmem:[%s17] sm:$0xf]
      %1697 = vset.pattern.permute.xlu0 0
      %1698 = vperm.xlu0 %1697, %v1695
      %v1699 = vpop.permute.xlu0 %1698
      %v1701 = vmul.f32 %v1673, %v1699
      %v1702 = vmul.f32 %v1693, %v1699
      %v1703 = vld [vmem:[%s18] sm:$0xf]
      %1705 = vset.pattern.permute.xlu0 0
      %1706 = vperm.xlu0 %1705, %v1703
      %v1707 = vpop.permute.xlu0 %1706
      %v1709 = vadd.f32 %v1701, %v1707
      %v1710 = vadd.f32 %v1702, %v1707
      %v1711 = vmax.f32 %v1709, 0.0
      %v1712 = vmax.f32 %v1710, 0.0
      %1715 = vrot.lane.b32.xlu0 %v1711, 34
      %v1716 = vpop.permute.xlu0 %1715
      %1717 = vrot.lane.b32.xlu0 %v1712, 34
      %v1718 = vpop.permute.xlu0 %1717
      %v1719 = vsel %vm890, %v1716, %v1718
      %v1723 = vsel %vm890, 0.0, %v1716
      %v1724 = vsel %vm890, %v1718, 0.0
      %v1725 = vadd.s32 %v791, 4294967294
      %v1726 = vadd.s32 %v792, 4294967294
      %vm1727 = vcmp.ge.s32.totalorder %v1725, 0
      %vm1728 = vcmp.ge.s32.totalorder %v1726, 0
      %vm1729 = vcmp.lt.s32.totalorder %v1725, 16
      %vm1730 = vcmp.lt.s32.totalorder %v1726, 16
      %vm1731 = vmand %vm1727, %vm1729
      %vm1732 = vmand %vm1728, %vm1730
      %v1733 = vsel %vm1731, 1, 0
      %v1734 = vsel %vm1732, 1, 0
      %v1735 = vcvt.s32.f32 %v1733
      %v1736 = vcvt.s32.f32 %v1734
      %v1737 = vmul.f32 %v1723, %v1735
      %v1738 = vmul.f32 %v1719, %v1736
      %1739 = vrot.lane.b32.xlu0 %v818, 1
      %v1740 = vpop.permute.xlu0 %1739
      %1741 = vrot.lane.b32.xlu0 %v819, 1
      %v1742 = vpop.permute.xlu0 %1741
      %vm1743 = vcmask 7168
      %v1744 = vsel %vm1743, %v1740, %v1742
      %v1748 = vmul.f32 %v1723, %v1740
      %v1749 = vmul.f32 %v1719, %v1744
      %v1750 = vmul.f32 %v1724, %v1742
      %1751 = vrot.lane.b32.xlu0 %v832, 3
      %v1752 = vpop.permute.xlu0 %1751
      %1753 = vrot.lane.b32.xlu0 %v833, 3
      %v1754 = vpop.permute.xlu0 %1753
      %vm1755 = vcmask 23552
      %v1756 = vsel %vm1755, %v1752, %v1754
      %v1760 = vmul.f32 %v1723, %v1752
      %v1761 = vmul.f32 %v1719, %v1756
      %v1762 = vmul.f32 %v1724, %v1754
      %v1763 = vadd.s32 %v791, 2
      %v1764 = vadd.s32 %v792, 2
      %vm1765 = vcmp.ge.s32.totalorder %v1763, 0
      %vm1766 = vcmp.ge.s32.totalorder %v1764, 0
      %vm1767 = vcmp.lt.s32.totalorder %v1763, 16
      %vm1768 = vcmp.lt.s32.totalorder %v1764, 16
      %vm1769 = vmand %vm1765, %vm1767
      %vm1770 = vmand %vm1766, %vm1768
      %v1771 = vsel %vm1769, 1, 0
      %v1772 = vsel %vm1770, 1, 0
      %v1773 = vcvt.s32.f32 %v1771
      %v1774 = vcvt.s32.f32 %v1772
      %1777 = vrot.lane.b32.xlu0 %v1773, 4
      %v1778 = vpop.permute.xlu0 %1777
      %1779 = vrot.lane.b32.xlu0 %v1774, 4
      %v1780 = vpop.permute.xlu0 %1779
      %v1781 = vsel %vm1022, %v1778, %v1780
      %v1785 = vmul.f32 %v1723, %v1778
      %v1786 = vmul.f32 %v1719, %v1781
      %v1787 = vmul.f32 %v1724, %v1780
      %1790 = vrot.lane.b32.xlu0 %v1735, 16
      %v1791 = vpop.permute.xlu0 %1790
      %1792 = vrot.lane.b32.xlu0 %v1736, 16
      %v1793 = vpop.permute.xlu0 %1792
      %v1794 = vsel %vm854, %v1791, %v1793
      %v1798 = vmul.f32 %v1723, %v1791
      %v1799 = vmul.f32 %v1719, %v1794
      %v1800 = vmul.f32 %v1724, %v1793
      %1801 = vrot.lane.b32.xlu0 %v818, 17
      %v1802 = vpop.permute.xlu0 %1801
      %1803 = vrot.lane.b32.xlu0 %v819, 17
      %v1804 = vpop.permute.xlu0 %1803
      %v1805 = vsel %vm801, %v1802, %v1804
      %v1809 = vmul.f32 %v1723, %v1802
      %v1810 = vmul.f32 %v1719, %v1805
      %v1811 = vmul.f32 %v1724, %v1804
      %1812 = vrot.lane.b32.xlu0 %v832, 19
      %v1813 = vpop.permute.xlu0 %1812
      %1814 = vrot.lane.b32.xlu0 %v833, 19
      %v1815 = vpop.permute.xlu0 %1814
      %vm1816 = vcmask 154624
      %v1817 = vsel %vm1816, %v1813, %v1815
      %v1821 = vmul.f32 %v1723, %v1813
      %v1822 = vmul.f32 %v1719, %v1817
      %v1823 = vmul.f32 %v1724, %v1815
      %1824 = vrot.lane.b32.xlu0 %v1773, 20
      %v1825 = vpop.permute.xlu0 %1824
      %1826 = vrot.lane.b32.xlu0 %v1774, 20
      %v1827 = vpop.permute.xlu0 %1826
      %vm1828 = vcmask 162816
      %v1829 = vsel %vm1828, %v1825, %v1827
      %v1833 = vmul.f32 %v1723, %v1825
      %v1834 = vmul.f32 %v1719, %v1829
      %v1835 = vmul.f32 %v1724, %v1827
      %1836 = vrot.lane.b32.xlu0 %v1735, 32
      %v1837 = vpop.permute.xlu0 %1836
      %1838 = vrot.lane.b32.xlu0 %v1736, 32
      %v1839 = vpop.permute.xlu0 %1838
      %v1840 = vsel %vm878, %v1837, %v1839
      %v1844 = vmul.f32 %v1723, %v1837
      %v1845 = vmul.f32 %v1719, %v1840
      %v1846 = vmul.f32 %v1724, %v1839
      %1847 = vrot.lane.b32.xlu0 %v818, 33
      %v1848 = vpop.permute.xlu0 %1847
      %1849 = vrot.lane.b32.xlu0 %v819, 33
      %v1850 = vpop.permute.xlu0 %1849
      %vm1851 = vcmask 269312
      %v1852 = vsel %vm1851, %v1848, %v1850
      %v1856 = vmul.f32 %v1723, %v1848
      %v1857 = vmul.f32 %v1719, %v1852
      %v1858 = vmul.f32 %v1724, %v1850
      %1859 = vrot.lane.b32.xlu0 %v832, 35
      %v1860 = vpop.permute.xlu0 %1859
      %1861 = vrot.lane.b32.xlu0 %v833, 35
      %v1862 = vpop.permute.xlu0 %1861
      %vm1863 = vcmask 285696
      %v1864 = vsel %vm1863, %v1860, %v1862
      %v1868 = vmul.f32 %v1723, %v1860
      %v1869 = vmul.f32 %v1719, %v1864
      %v1870 = vmul.f32 %v1724, %v1862
      %1871 = vrot.lane.b32.xlu0 %v1773, 36
      %v1872 = vpop.permute.xlu0 %1871
      %1873 = vrot.lane.b32.xlu0 %v1774, 36
      %v1874 = vpop.permute.xlu0 %1873
      %v1875 = vsel %vm1371, %v1872, %v1874
      %v1879 = vmul.f32 %v1723, %v1872
      %v1880 = vmul.f32 %v1719, %v1875
      %v1881 = vmul.f32 %v1724, %v1874
      %1882 = vrot.lane.b32.xlu0 %v1735, 48
      %v1883 = vpop.permute.xlu0 %1882
      %1884 = vrot.lane.b32.xlu0 %v1736, 48
      %v1885 = vpop.permute.xlu0 %1884
      %vm1886 = vcmask 392192
      %v1887 = vsel %vm1886, %v1883, %v1885
      %v1891 = vmul.f32 %v1723, %v1883
      %v1892 = vmul.f32 %v1719, %v1887
      %v1893 = vmul.f32 %v1724, %v1885
      %1894 = vrot.lane.b32.xlu0 %v818, 49
      %v1895 = vpop.permute.xlu0 %1894
      %1896 = vrot.lane.b32.xlu0 %v819, 49
      %v1897 = vpop.permute.xlu0 %1896
      %vm1898 = vcmask 400384
      %v1899 = vsel %vm1898, %v1895, %v1897
      %v1903 = vmul.f32 %v1723, %v1895
      %v1904 = vmul.f32 %v1719, %v1899
      %v1905 = vmul.f32 %v1724, %v1897
      %1906 = vrot.lane.b32.xlu0 %v832, 51
      %v1907 = vpop.permute.xlu0 %1906
      %1908 = vrot.lane.b32.xlu0 %v833, 51
      %v1909 = vpop.permute.xlu0 %1908
      %vm1910 = vcmask 416768
      %v1911 = vsel %vm1910, %v1907, %v1909
      %v1915 = vmul.f32 %v1723, %v1907
      %v1916 = vmul.f32 %v1719, %v1911
      %v1917 = vmul.f32 %v1724, %v1909
      %1918 = vrot.lane.b32.xlu0 %v1773, 52
      %v1919 = vpop.permute.xlu0 %1918
      %1920 = vrot.lane.b32.xlu0 %v1774, 52
      %v1921 = vpop.permute.xlu0 %1920
      %vm1922 = vcmask 424960
      %v1923 = vsel %vm1922, %v1919, %v1921
      %v1927 = vmul.f32 %v1723, %v1919
      %v1928 = vmul.f32 %v1719, %v1923
      %v1929 = vmul.f32 %v1724, %v1921
      %1930 = vrot.lane.b32.xlu0 %v1735, 64
      %v1931 = vpop.permute.xlu0 %1930
      %1932 = vrot.lane.b32.xlu0 %v1736, 64
      %v1933 = vpop.permute.xlu0 %1932
      %vm1934 = vcmask 523264
      %v1935 = vsel %vm1934, %v1931, %v1933
      %v1939 = vmul.f32 %v1723, %v1931
      %v1940 = vmul.f32 %v1719, %v1935
      %v1941 = vmul.f32 %v1724, %v1933
      %1942 = vrot.lane.b32.xlu0 %v818, 65
      %v1943 = vpop.permute.xlu0 %1942
      %1944 = vrot.lane.b32.xlu0 %v819, 65
      %v1945 = vpop.permute.xlu0 %1944
      %vm1946 = vcmask 531456
      %v1947 = vsel %vm1946, %v1943, %v1945
      %v1951 = vmul.f32 %v1723, %v1943
      %v1952 = vmul.f32 %v1719, %v1947
      %v1953 = vmul.f32 %v1724, %v1945
      %1954 = vrot.lane.b32.xlu0 %v832, 67
      %v1955 = vpop.permute.xlu0 %1954
      %1956 = vrot.lane.b32.xlu0 %v833, 67
      %v1957 = vpop.permute.xlu0 %1956
      %vm1958 = vcmask 547840
      %v1959 = vsel %vm1958, %v1955, %v1957
      %v1963 = vmul.f32 %v1723, %v1955
      %v1964 = vmul.f32 %v1719, %v1959
      %v1965 = vmul.f32 %v1724, %v1957
      %1966 = vrot.lane.b32.xlu0 %v1773, 68
      %v1967 = vpop.permute.xlu0 %1966
      %1968 = vrot.lane.b32.xlu0 %v1774, 68
      %v1969 = vpop.permute.xlu0 %1968
      %vm1970 = vcmask 556032
      %v1971 = vsel %vm1970, %v1967, %v1969
      %v1975 = vmul.f32 %v1723, %v1967
      %v1976 = vmul.f32 %v1719, %v1971
      %v1977 = vmul.f32 %v1724, %v1969
      %v1981 = vrot.slane %v1748, 4
      %v1982 = vrot.slane %v1749, 4
      %v1983 = vrot.slane %v1750, 4
      %1984 = vrot.lane.b32.xlu0 %v1981, 127
      %v1985 = vpop.permute.xlu0 %1984
      %1986 = vrot.lane.b32.xlu0 %v1982, 127
      %v1987 = vpop.permute.xlu0 %1986
      %1988 = vrot.lane.b32.xlu0 %v1983, 127
      %v1989 = vpop.permute.xlu0 %1988
      %v1990 = vsel %vm906, %v1985, %v1987
      %v1991 = vsel %vm906, %v1987, %v1989
      %1996 = vrot.lane.b32.xlu0 %v1723, 126
      %v1997 = vpop.permute.xlu0 %1996
      %1998 = vrot.lane.b32.xlu0 %v1719, 126
      %v1999 = vpop.permute.xlu0 %1998
      %2000 = vrot.lane.b32.xlu0 %v1724, 126
      %v2001 = vpop.permute.xlu0 %2000
      %v2002 = vsel %vm922, %v1997, %v1999
      %v2003 = vsel %vm922, %v1999, %v2001
      %v2009 = vrot.slane %v1760, 4
      %v2010 = vrot.slane %v1761, 4
      %v2011 = vrot.slane %v1762, 4
      %2012 = vrot.lane.b32.xlu0 %v2009, 125
      %v2013 = vpop.permute.xlu0 %2012
      %2014 = vrot.lane.b32.xlu0 %v2010, 125
      %v2015 = vpop.permute.xlu0 %2014
      %2016 = vrot.lane.b32.xlu0 %v2011, 125
      %v2017 = vpop.permute.xlu0 %2016
      %vm2018 = vcmask 1022976
      %v2019 = vsel %vm2018, %v2013, %v2015
      %v2020 = vsel %vm2018, %v2015, %v2017
      %2026 = vrot.lane.b32.xlu0 %v1785, 124
      %v2027 = vpop.permute.xlu0 %2026
      %2028 = vrot.lane.b32.xlu0 %v1786, 124
      %v2029 = vpop.permute.xlu0 %2028
      %2030 = vrot.lane.b32.xlu0 %v1787, 124
      %v2031 = vpop.permute.xlu0 %2030
      %vm2032 = vcmask 1014784
      %v2033 = vsel %vm2032, %v2027, %v2029
      %v2034 = vsel %vm2032, %v2029, %v2031
      %v2040 = vrot.slane %v1798, 4
      %v2041 = vrot.slane %v1799, 4
      %v2042 = vrot.slane %v1800, 4
      %2043 = vrot.lane.b32.xlu0 %v2040, 112
      %v2044 = vpop.permute.xlu0 %2043
      %2045 = vrot.lane.b32.xlu0 %v2041, 112
      %v2046 = vpop.permute.xlu0 %2045
      %2047 = vrot.lane.b32.xlu0 %v2042, 112
      %v2048 = vpop.permute.xlu0 %2047
      %v2049 = vsel %vm938, %v2044, %v2046
      %v2050 = vsel %vm938, %v2046, %v2048
      %2056 = vrot.lane.b32.xlu0 %v1809, 111
      %v2057 = vpop.permute.xlu0 %2056
      %2058 = vrot.lane.b32.xlu0 %v1810, 111
      %v2059 = vpop.permute.xlu0 %2058
      %2060 = vrot.lane.b32.xlu0 %v1811, 111
      %v2061 = vpop.permute.xlu0 %2060
      %v2062 = vsel %vm951, %v2057, %v2059
      %v2063 = vsel %vm951, %v2059, %v2061
      %v2066 = vrot.slane %v1723, 4
      %v2067 = vrot.slane %v1719, 4
      %v2068 = vrot.slane %v1724, 4
      %2069 = vrot.lane.b32.xlu0 %v2066, 110
      %v2070 = vpop.permute.xlu0 %2069
      %2071 = vrot.lane.b32.xlu0 %v2067, 110
      %v2072 = vpop.permute.xlu0 %2071
      %2073 = vrot.lane.b32.xlu0 %v2068, 110
      %v2074 = vpop.permute.xlu0 %2073
      %v2075 = vsel %vm967, %v2070, %v2072
      %v2076 = vsel %vm967, %v2072, %v2074
      %2082 = vrot.lane.b32.xlu0 %v1821, 109
      %v2083 = vpop.permute.xlu0 %2082
      %2084 = vrot.lane.b32.xlu0 %v1822, 109
      %v2085 = vpop.permute.xlu0 %2084
      %2086 = vrot.lane.b32.xlu0 %v1823, 109
      %v2087 = vpop.permute.xlu0 %2086
      %vm2088 = vcmask 891904
      %v2089 = vsel %vm2088, %v2083, %v2085
      %v2090 = vsel %vm2088, %v2085, %v2087
      %v2096 = vrot.slane %v1833, 4
      %v2097 = vrot.slane %v1834, 4
      %v2098 = vrot.slane %v1835, 4
      %2099 = vrot.lane.b32.xlu0 %v2096, 108
      %v2100 = vpop.permute.xlu0 %2099
      %2101 = vrot.lane.b32.xlu0 %v2097, 108
      %v2102 = vpop.permute.xlu0 %2101
      %2103 = vrot.lane.b32.xlu0 %v2098, 108
      %v2104 = vpop.permute.xlu0 %2103
      %vm2105 = vcmask 883712
      %v2106 = vsel %vm2105, %v2100, %v2102
      %v2107 = vsel %vm2105, %v2102, %v2104
      %2113 = vrot.lane.b32.xlu0 %v1844, 96
      %v2114 = vpop.permute.xlu0 %2113
      %2115 = vrot.lane.b32.xlu0 %v1845, 96
      %v2116 = vpop.permute.xlu0 %2115
      %2117 = vrot.lane.b32.xlu0 %v1846, 96
      %v2118 = vpop.permute.xlu0 %2117
      %v2119 = vsel %vm983, %v2114, %v2116
      %v2120 = vsel %vm983, %v2116, %v2118
      %v2126 = vrot.slane %v1856, 4
      %v2127 = vrot.slane %v1857, 4
      %v2128 = vrot.slane %v1858, 4
      %2129 = vrot.lane.b32.xlu0 %v2126, 95
      %v2130 = vpop.permute.xlu0 %2129
      %2131 = vrot.lane.b32.xlu0 %v2127, 95
      %v2132 = vpop.permute.xlu0 %2131
      %2133 = vrot.lane.b32.xlu0 %v2128, 95
      %v2134 = vpop.permute.xlu0 %2133
      %v2135 = vsel %vm996, %v2130, %v2132
      %v2136 = vsel %vm996, %v2132, %v2134
      %2139 = vrot.lane.b32.xlu0 %v1723, 94
      %v2140 = vpop.permute.xlu0 %2139
      %2141 = vrot.lane.b32.xlu0 %v1719, 94
      %v2142 = vpop.permute.xlu0 %2141
      %2143 = vrot.lane.b32.xlu0 %v1724, 94
      %v2144 = vpop.permute.xlu0 %2143
      %v2145 = vsel %vm1012, %v2140, %v2142
      %v2146 = vsel %vm1012, %v2142, %v2144
      %v2152 = vrot.slane %v1868, 4
      %v2153 = vrot.slane %v1869, 4
      %v2154 = vrot.slane %v1870, 4
      %2155 = vrot.lane.b32.xlu0 %v2152, 93
      %v2156 = vpop.permute.xlu0 %2155
      %2157 = vrot.lane.b32.xlu0 %v2153, 93
      %v2158 = vpop.permute.xlu0 %2157
      %2159 = vrot.lane.b32.xlu0 %v2154, 93
      %v2160 = vpop.permute.xlu0 %2159
      %vm2161 = vcmask 760832
      %v2162 = vsel %vm2161, %v2156, %v2158
      %v2163 = vsel %vm2161, %v2158, %v2160
      %2169 = vrot.lane.b32.xlu0 %v1879, 92
      %v2170 = vpop.permute.xlu0 %2169
      %2171 = vrot.lane.b32.xlu0 %v1880, 92
      %v2172 = vpop.permute.xlu0 %2171
      %2173 = vrot.lane.b32.xlu0 %v1881, 92
      %v2174 = vpop.permute.xlu0 %2173
      %vm2175 = vcmask 752640
      %v2176 = vsel %vm2175, %v2170, %v2172
      %v2177 = vsel %vm2175, %v2172, %v2174
      %v2183 = vrot.slane %v1891, 4
      %v2184 = vrot.slane %v1892, 4
      %v2185 = vrot.slane %v1893, 4
      %2186 = vrot.lane.b32.xlu0 %v2183, 80
      %v2187 = vpop.permute.xlu0 %2186
      %2188 = vrot.lane.b32.xlu0 %v2184, 80
      %v2189 = vpop.permute.xlu0 %2188
      %2190 = vrot.lane.b32.xlu0 %v2185, 80
      %v2191 = vpop.permute.xlu0 %2190
      %vm2192 = vcmask 654336
      %v2193 = vsel %vm2192, %v2187, %v2189
      %v2194 = vsel %vm2192, %v2189, %v2191
      %v2197 = vsel %vm1026, %v1737, %v1990
      %v2198 = vsel %vm1026, %v1738, %v1991
      %v2199 = vsel %vm1026, %v2002, %v2019
      %v2200 = vsel %vm1026, %v2003, %v2020
      %v2201 = vsel %vm1026, %v2033, %v2049
      %v2202 = vsel %vm1026, %v2034, %v2050
      %v2203 = vsel %vm1026, %v2062, %v2075
      %v2204 = vsel %vm1026, %v2063, %v2076
      %v2205 = vsel %vm1026, %v2089, %v2106
      %v2206 = vsel %vm1026, %v2090, %v2107
      %v2207 = vsel %vm1026, %v2119, %v2135
      %v2208 = vsel %vm1026, %v2120, %v2136
      %v2209 = vsel %vm1026, %v2145, %v2162
      %v2210 = vsel %vm1026, %v2146, %v2163
      %v2211 = vsel %vm1026, %v2176, %v2193
      %v2212 = vsel %vm1026, %v2177, %v2194
      %2213 = vrot.lane.b32.xlu0 %v2066, 127
      %v2214 = vpop.permute.xlu0 %2213
      %2215 = vrot.lane.b32.xlu0 %v2067, 127
      %v2216 = vpop.permute.xlu0 %2215
      %2217 = vrot.lane.b32.xlu0 %v2068, 127
      %v2218 = vpop.permute.xlu0 %2217
      %v2219 = vsel %vm906, %v2214, %v2216
      %v2220 = vsel %vm906, %v2216, %v2218
      %2227 = vrot.lane.b32.xlu0 %v1915, 126
      %v2228 = vpop.permute.xlu0 %2227
      %2229 = vrot.lane.b32.xlu0 %v1916, 126
      %v2230 = vpop.permute.xlu0 %2229
      %2231 = vrot.lane.b32.xlu0 %v1917, 126
      %v2232 = vpop.permute.xlu0 %2231
      %v2233 = vsel %vm922, %v2228, %v2230
      %v2234 = vsel %vm922, %v2230, %v2232
      %v2241 = vrot.slane %v1927, 4
      %v2242 = vrot.slane %v1928, 4
      %v2243 = vrot.slane %v1929, 4
      %2244 = vrot.lane.b32.xlu0 %v2241, 125
      %v2245 = vpop.permute.xlu0 %2244
      %2246 = vrot.lane.b32.xlu0 %v2242, 125
      %v2247 = vpop.permute.xlu0 %2246
      %2248 = vrot.lane.b32.xlu0 %v2243, 125
      %v2249 = vpop.permute.xlu0 %2248
      %v2250 = vsel %vm2018, %v2245, %v2247
      %v2251 = vsel %vm2018, %v2247, %v2249
      %2258 = vrot.lane.b32.xlu0 %v1939, 113
      %v2259 = vpop.permute.xlu0 %2258
      %2260 = vrot.lane.b32.xlu0 %v1940, 113
      %v2261 = vpop.permute.xlu0 %2260
      %2262 = vrot.lane.b32.xlu0 %v1941, 113
      %v2263 = vpop.permute.xlu0 %2262
      %vm2264 = vcmask 924672
      %v2265 = vsel %vm2264, %v2259, %v2261
      %v2266 = vsel %vm2264, %v2261, %v2263
      %v2273 = vrot.slane %v1951, 4
      %v2274 = vrot.slane %v1952, 4
      %v2275 = vrot.slane %v1953, 4
      %2276 = vrot.lane.b32.xlu0 %v2273, 112
      %v2277 = vpop.permute.xlu0 %2276
      %2278 = vrot.lane.b32.xlu0 %v2274, 112
      %v2279 = vpop.permute.xlu0 %2278
      %2280 = vrot.lane.b32.xlu0 %v2275, 112
      %v2281 = vpop.permute.xlu0 %2280
      %v2282 = vsel %vm938, %v2277, %v2279
      %v2283 = vsel %vm938, %v2279, %v2281
      %2287 = vrot.lane.b32.xlu0 %v1723, 111
      %v2288 = vpop.permute.xlu0 %2287
      %2289 = vrot.lane.b32.xlu0 %v1719, 111
      %v2290 = vpop.permute.xlu0 %2289
      %2291 = vrot.lane.b32.xlu0 %v1724, 111
      %v2292 = vpop.permute.xlu0 %2291
      %v2293 = vsel %vm951, %v2288, %v2290
      %v2294 = vsel %vm951, %v2290, %v2292
      %v2301 = vrot.slane %v1963, 4
      %v2302 = vrot.slane %v1964, 4
      %v2303 = vrot.slane %v1965, 4
      %2304 = vrot.lane.b32.xlu0 %v2301, 110
      %v2305 = vpop.permute.xlu0 %2304
      %2306 = vrot.lane.b32.xlu0 %v2302, 110
      %v2307 = vpop.permute.xlu0 %2306
      %2308 = vrot.lane.b32.xlu0 %v2303, 110
      %v2309 = vpop.permute.xlu0 %2308
      %v2310 = vsel %vm967, %v2305, %v2307
      %v2311 = vsel %vm967, %v2307, %v2309
      %2318 = vrot.lane.b32.xlu0 %v1975, 109
      %v2319 = vpop.permute.xlu0 %2318
      %2320 = vrot.lane.b32.xlu0 %v1976, 109
      %v2321 = vpop.permute.xlu0 %2320
      %2322 = vrot.lane.b32.xlu0 %v1977, 109
      %v2323 = vpop.permute.xlu0 %2322
      %v2324 = vsel %vm2088, %v2319, %v2321
      %v2325 = vsel %vm2088, %v2321, %v2323
      %v2326 = vsel %vm1026, %v1903, %v2219
      %v2327 = vsel %vm1026, %v1904, %v2220
      %v2328 = vsel %vm1026, %v1905, %v2218
      %v2329 = vsel %vm1026, %v2233, %v2250
      %v2330 = vsel %vm1026, %v2234, %v2251
      %v2331 = vsel %vm1026, %v2232, %v2249
      %v2332 = vsel %vm1026, %v2265, %v2282
      %v2333 = vsel %vm1026, %v2266, %v2283
      %v2334 = vsel %vm1026, %v2263, %v2281
      %v2335 = vsel %vm1026, %v2293, %v2310
      %v2336 = vsel %vm1026, %v2294, %v2311
      %v2337 = vsel %vm1026, %v2292, %v2309
      %2350 = vrot.lane.b32.xlu0 %v2326, 79
      %v2351 = vpop.permute.xlu0 %2350
      %2352 = vrot.lane.b32.xlu0 %v2327, 79
      %v2353 = vpop.permute.xlu0 %2352
      %2354 = vrot.lane.b32.xlu0 %v2328, 79
      %v2355 = vpop.permute.xlu0 %2354
      %2356 = vrot.lane.b32.xlu0 %v2329, 79
      %v2357 = vpop.permute.xlu0 %2356
      %2358 = vrot.lane.b32.xlu0 %v2330, 79
      %v2359 = vpop.permute.xlu0 %2358
      %2360 = vrot.lane.b32.xlu0 %v2331, 79
      %v2361 = vpop.permute.xlu0 %2360
      %2362 = vrot.lane.b32.xlu0 %v2332, 79
      %v2363 = vpop.permute.xlu0 %2362
      %2364 = vrot.lane.b32.xlu0 %v2333, 79
      %v2365 = vpop.permute.xlu0 %2364
      %2366 = vrot.lane.b32.xlu0 %v2334, 79
      %v2367 = vpop.permute.xlu0 %2366
      %2368 = vrot.lane.b32.xlu0 %v2335, 79
      %v2369 = vpop.permute.xlu0 %2368
      %2370 = vrot.lane.b32.xlu0 %v2336, 79
      %v2371 = vpop.permute.xlu0 %2370
      %2372 = vrot.lane.b32.xlu0 %v2337, 79
      %v2373 = vpop.permute.xlu0 %2372
      %2374 = vrot.lane.b32.xlu0 %v2324, 79
      %v2375 = vpop.permute.xlu0 %2374
      %2376 = vrot.lane.b32.xlu0 %v2325, 79
      %v2377 = vpop.permute.xlu0 %2376
      %2378 = vrot.lane.b32.xlu0 %v2323, 79
      %v2379 = vpop.permute.xlu0 %2378
      %vm2380 = vcmask 646144
      %v2381 = vsel %vm2380, %v2351, %v2353
      %v2382 = vsel %vm2380, %v2353, %v2355
      %v2383 = vsel %vm2380, %v2357, %v2359
      %v2384 = vsel %vm2380, %v2359, %v2361
      %v2385 = vsel %vm2380, %v2363, %v2365
      %v2386 = vsel %vm2380, %v2365, %v2367
      %v2387 = vsel %vm2380, %v2369, %v2371
      %v2388 = vsel %vm2380, %v2371, %v2373
      %v2389 = vsel %vm2380, %v2375, %v2377
      %v2390 = vsel %vm2380, %v2377, %v2379
      %v2399 = vld [vmem:[%s19] sm:$0xf]
      %vm2400 = vcmask 818176
      %v2402 = vsel %vm2400, %v2399, 0
      %v2404 = vsel %vm1026, %v2389, 0
      %v2406 = vsel %vm1026, %v2390, 0
      %2408 = vmatpush.msra.mxu0 0.0
      %2409 = vmatpush.msra.mxu0 0.0
      %2410 = vmatpush.msra.mxu0 0.0
      %2411 = vmatpush.msra.mxu0 %v2404
      %2412 = vmatpush.msra.mxu0 %v2387
      %2413 = vmatpush.msra.mxu0 %v2385
      %2414 = vmatpush.msra.mxu0 %v2383
      %2415 = vmatpush.msra.mxu0 %v2381
      %2416 = vmatpush.msra.mxu0 %v2211
      %2417 = vmatpush.msra.mxu0 %v2209
      %2418 = vmatpush.msra.mxu0 %v2207
      %2419 = vmatpush.msra.mxu0 %v2205
      %2420 = vmatpush.msra.mxu0 %v2203
      %2421 = vmatpush.msra.mxu0 %v2201
      %2422 = vmatpush.msra.mxu0 %v2199
      %2423 = vmatpush.msra.mxu0 %v2197
      %2424 = vmatmul.f32.gmra.mxu0 %v2402
      %v2425 = vpop.f32.mrf.mxu0
      %v2426 = vadd.f32 0.0, %v2425
      %2427 = vdwg.mxu0
      %2428 = vmatpush.msra.mxu0 0.0
      %2429 = vmatpush.msra.mxu0 0.0
      %2430 = vmatpush.msra.mxu0 0.0
      %2431 = vmatpush.msra.mxu0 %v2406
      %2432 = vmatpush.msra.mxu0 %v2388
      %2433 = vmatpush.msra.mxu0 %v2386
      %2434 = vmatpush.msra.mxu0 %v2384
      %2435 = vmatpush.msra.mxu0 %v2382
      %2436 = vmatpush.msra.mxu0 %v2212
      %2437 = vmatpush.msra.mxu0 %v2210
      %2438 = vmatpush.msra.mxu0 %v2208
      %2439 = vmatpush.msra.mxu0 %v2206
      %2440 = vmatpush.msra.mxu0 %v2204
      %2441 = vmatpush.msra.mxu0 %v2202
      %2442 = vmatpush.msra.mxu0 %v2200
      %2443 = vmatpush.msra.mxu0 %v2198
      %2444 = vmatmul.f32.gmra.mxu0 %v2402
      %v2445 = vpop.f32.mrf.mxu0
      %v2446 = vadd.f32 0.0, %v2445
      %2447 = vdwg.mxu0
      %v2448 = vld [vmem:[%s20] sm:$0xf]
      %2450 = vset.pattern.permute.xlu0 0
      %2451 = vperm.xlu0 %2450, %v2448
      %v2452 = vpop.permute.xlu0 %2451
      %v2454 = vmul.f32 %v2426, %v2452
      %v2455 = vmul.f32 %v2446, %v2452
      %v2456 = vld [vmem:[%s21] sm:$0xf]
      %2458 = vset.pattern.permute.xlu0 0
      %2459 = vperm.xlu0 %2458, %v2456
      %v2460 = vpop.permute.xlu0 %2459
      %v2462 = vadd.f32 %v2454, %v2460
      %v2463 = vadd.f32 %v2455, %v2460
      %v2464 = vmax.f32 %v2462, 0.0
      %v2465 = vmax.f32 %v2463, 0.0
      %v2468 = vrot.slane %v1158, 4
      %v2469 = vrot.slane %v1159, 4
      %v2474 = vrot.slane %v2464, 4
      %v2475 = vrot.slane %v2465, 4
      %v2478 = vsel %vm1026, %v1089, %v2468
      %v2479 = vsel %vm1026, %v1090, %v2469
      %v2480 = vsel %vm1026, %v1642, %v2474
      %v2481 = vsel %vm1026, %v1643, %v2475
      %2486 = vrot.lane.b32.xlu0 %v2478, 17
      %v2487 = vpop.permute.xlu0 %2486
      %2488 = vrot.lane.b32.xlu0 %v2479, 17
      %v2489 = vpop.permute.xlu0 %2488
      %2490 = vrot.lane.b32.xlu0 %v2480, 17
      %v2491 = vpop.permute.xlu0 %2490
      %2492 = vrot.lane.b32.xlu0 %v2481, 17
      %v2493 = vpop.permute.xlu0 %2492
      %v2494 = vsel %vm801, %v2487, %v2489
      %v2495 = vsel %vm801, %v2491, %v2493
      %v2502 = vsel %vm801, 0.0, %v2487
      %v2503 = vsel %vm801, 0.0, %v2491
      %v2504 = vsel %vm801, %v2489, 0.0
      %v2505 = vsel %vm801, %v2493, 0.0
      %v2506 = vmul.f32 %v2502, %v818
      %v2507 = vmul.f32 %v2494, %v819
      %v2508 = vmul.f32 %v2503, %v818
      %v2509 = vmul.f32 %v2495, %v819
      %v2510 = vmul.f32 %v2502, %v837
      %v2511 = vmul.f32 %v2494, %v841
      %v2512 = vmul.f32 %v2504, %v839
      %v2513 = vmul.f32 %v2503, %v837
      %v2514 = vmul.f32 %v2495, %v841
      %v2515 = vmul.f32 %v2505, %v839
      %v2516 = vmul.f32 %v2502, %v851
      %v2517 = vmul.f32 %v2494, %v855
      %v2518 = vmul.f32 %v2504, %v853
      %v2519 = vmul.f32 %v2503, %v851
      %v2520 = vmul.f32 %v2495, %v855
      %v2521 = vmul.f32 %v2505, %v853
      %v2522 = vmul.f32 %v2502, %v863
      %v2523 = vmul.f32 %v2494, %v867
      %v2524 = vmul.f32 %v2504, %v865
      %v2525 = vmul.f32 %v2503, %v863
      %v2526 = vmul.f32 %v2495, %v867
      %v2527 = vmul.f32 %v2505, %v865
      %v2528 = vmul.f32 %v2502, %v875
      %v2529 = vmul.f32 %v2494, %v879
      %v2530 = vmul.f32 %v2504, %v877
      %v2531 = vmul.f32 %v2503, %v875
      %v2532 = vmul.f32 %v2495, %v879
      %v2533 = vmul.f32 %v2505, %v877
      %v2534 = vmul.f32 %v2502, %v887
      %v2535 = vmul.f32 %v2494, %v891
      %v2536 = vmul.f32 %v2504, %v889
      %v2537 = vmul.f32 %v2503, %v887
      %v2538 = vmul.f32 %v2495, %v891
      %v2539 = vmul.f32 %v2505, %v889
      %2544 = vrot.lane.b32.xlu0 %v2502, 127
      %v2545 = vpop.permute.xlu0 %2544
      %2546 = vrot.lane.b32.xlu0 %v2494, 127
      %v2547 = vpop.permute.xlu0 %2546
      %2548 = vrot.lane.b32.xlu0 %v2504, 127
      %v2549 = vpop.permute.xlu0 %2548
      %2550 = vrot.lane.b32.xlu0 %v2503, 127
      %v2551 = vpop.permute.xlu0 %2550
      %2552 = vrot.lane.b32.xlu0 %v2495, 127
      %v2553 = vpop.permute.xlu0 %2552
      %2554 = vrot.lane.b32.xlu0 %v2505, 127
      %v2555 = vpop.permute.xlu0 %2554
      %v2556 = vsel %vm906, %v2545, %v2547
      %v2557 = vsel %vm906, %v2547, %v2549
      %v2558 = vsel %vm906, %v2551, %v2553
      %v2559 = vsel %vm906, %v2553, %v2555
      %2570 = vrot.lane.b32.xlu0 %v2510, 126
      %v2571 = vpop.permute.xlu0 %2570
      %2572 = vrot.lane.b32.xlu0 %v2511, 126
      %v2573 = vpop.permute.xlu0 %2572
      %2574 = vrot.lane.b32.xlu0 %v2512, 126
      %v2575 = vpop.permute.xlu0 %2574
      %2576 = vrot.lane.b32.xlu0 %v2513, 126
      %v2577 = vpop.permute.xlu0 %2576
      %2578 = vrot.lane.b32.xlu0 %v2514, 126
      %v2579 = vpop.permute.xlu0 %2578
      %2580 = vrot.lane.b32.xlu0 %v2515, 126
      %v2581 = vpop.permute.xlu0 %2580
      %v2582 = vsel %vm922, %v2571, %v2573
      %v2583 = vsel %vm922, %v2573, %v2575
      %v2584 = vsel %vm922, %v2577, %v2579
      %v2585 = vsel %vm922, %v2579, %v2581
      %2596 = vrot.lane.b32.xlu0 %v2516, 112
      %v2597 = vpop.permute.xlu0 %2596
      %2598 = vrot.lane.b32.xlu0 %v2517, 112
      %v2599 = vpop.permute.xlu0 %2598
      %2600 = vrot.lane.b32.xlu0 %v2518, 112
      %v2601 = vpop.permute.xlu0 %2600
      %2602 = vrot.lane.b32.xlu0 %v2519, 112
      %v2603 = vpop.permute.xlu0 %2602
      %2604 = vrot.lane.b32.xlu0 %v2520, 112
      %v2605 = vpop.permute.xlu0 %2604
      %2606 = vrot.lane.b32.xlu0 %v2521, 112
      %v2607 = vpop.permute.xlu0 %2606
      %v2608 = vsel %vm938, %v2597, %v2599
      %v2609 = vsel %vm938, %v2599, %v2601
      %v2610 = vsel %vm938, %v2603, %v2605
      %v2611 = vsel %vm938, %v2605, %v2607
      %2616 = vrot.lane.b32.xlu0 %v2502, 111
      %v2617 = vpop.permute.xlu0 %2616
      %2618 = vrot.lane.b32.xlu0 %v2494, 111
      %v2619 = vpop.permute.xlu0 %2618
      %2620 = vrot.lane.b32.xlu0 %v2504, 111
      %v2621 = vpop.permute.xlu0 %2620
      %2622 = vrot.lane.b32.xlu0 %v2503, 111
      %v2623 = vpop.permute.xlu0 %2622
      %2624 = vrot.lane.b32.xlu0 %v2495, 111
      %v2625 = vpop.permute.xlu0 %2624
      %2626 = vrot.lane.b32.xlu0 %v2505, 111
      %v2627 = vpop.permute.xlu0 %2626
      %v2628 = vsel %vm951, %v2617, %v2619
      %v2629 = vsel %vm951, %v2619, %v2621
      %v2630 = vsel %vm951, %v2623, %v2625
      %v2631 = vsel %vm951, %v2625, %v2627
      %2642 = vrot.lane.b32.xlu0 %v2522, 110
      %v2643 = vpop.permute.xlu0 %2642
      %2644 = vrot.lane.b32.xlu0 %v2523, 110
      %v2645 = vpop.permute.xlu0 %2644
      %2646 = vrot.lane.b32.xlu0 %v2524, 110
      %v2647 = vpop.permute.xlu0 %2646
      %2648 = vrot.lane.b32.xlu0 %v2525, 110
      %v2649 = vpop.permute.xlu0 %2648
      %2650 = vrot.lane.b32.xlu0 %v2526, 110
      %v2651 = vpop.permute.xlu0 %2650
      %2652 = vrot.lane.b32.xlu0 %v2527, 110
      %v2653 = vpop.permute.xlu0 %2652
      %v2654 = vsel %vm967, %v2643, %v2645
      %v2655 = vsel %vm967, %v2645, %v2647
      %v2656 = vsel %vm967, %v2649, %v2651
      %v2657 = vsel %vm967, %v2651, %v2653
      %2668 = vrot.lane.b32.xlu0 %v2528, 96
      %v2669 = vpop.permute.xlu0 %2668
      %2670 = vrot.lane.b32.xlu0 %v2529, 96
      %v2671 = vpop.permute.xlu0 %2670
      %2672 = vrot.lane.b32.xlu0 %v2530, 96
      %v2673 = vpop.permute.xlu0 %2672
      %2674 = vrot.lane.b32.xlu0 %v2531, 96
      %v2675 = vpop.permute.xlu0 %2674
      %2676 = vrot.lane.b32.xlu0 %v2532, 96
      %v2677 = vpop.permute.xlu0 %2676
      %2678 = vrot.lane.b32.xlu0 %v2533, 96
      %v2679 = vpop.permute.xlu0 %2678
      %v2680 = vsel %vm983, %v2669, %v2671
      %v2681 = vsel %vm983, %v2671, %v2673
      %v2682 = vsel %vm983, %v2675, %v2677
      %v2683 = vsel %vm983, %v2677, %v2679
      %2688 = vrot.lane.b32.xlu0 %v2502, 95
      %v2689 = vpop.permute.xlu0 %2688
      %2690 = vrot.lane.b32.xlu0 %v2494, 95
      %v2691 = vpop.permute.xlu0 %2690
      %2692 = vrot.lane.b32.xlu0 %v2504, 95
      %v2693 = vpop.permute.xlu0 %2692
      %2694 = vrot.lane.b32.xlu0 %v2503, 95
      %v2695 = vpop.permute.xlu0 %2694
      %2696 = vrot.lane.b32.xlu0 %v2495, 95
      %v2697 = vpop.permute.xlu0 %2696
      %2698 = vrot.lane.b32.xlu0 %v2505, 95
      %v2699 = vpop.permute.xlu0 %2698
      %v2700 = vsel %vm996, %v2689, %v2691
      %v2701 = vsel %vm996, %v2691, %v2693
      %v2702 = vsel %vm996, %v2695, %v2697
      %v2703 = vsel %vm996, %v2697, %v2699
      %2714 = vrot.lane.b32.xlu0 %v2534, 94
      %v2715 = vpop.permute.xlu0 %2714
      %2716 = vrot.lane.b32.xlu0 %v2535, 94
      %v2717 = vpop.permute.xlu0 %2716
      %2718 = vrot.lane.b32.xlu0 %v2536, 94
      %v2719 = vpop.permute.xlu0 %2718
      %2720 = vrot.lane.b32.xlu0 %v2537, 94
      %v2721 = vpop.permute.xlu0 %2720
      %2722 = vrot.lane.b32.xlu0 %v2538, 94
      %v2723 = vpop.permute.xlu0 %2722
      %2724 = vrot.lane.b32.xlu0 %v2539, 94
      %v2725 = vpop.permute.xlu0 %2724
      %v2726 = vsel %vm1012, %v2715, %v2717
      %v2727 = vsel %vm1012, %v2717, %v2719
      %v2728 = vsel %vm1012, %v2721, %v2723
      %v2729 = vsel %vm1012, %v2723, %v2725
      %v2734 = vld [vmem:[%s22] sm:$0xff]
      %v2735 = vld [vmem:[%s22 + $0x8] sm:$0xff]
      %v2736 = vld [vmem:[%s22 + $0x10] sm:$0xff]
      %v2737 = vld [vmem:[%s22 + $0x18] sm:$0xff]
      %v2739 = vsel %vm854, %v2735, 0
      %v2742 = vsel %vm854, %v2737, 0
      %2744 = vmatpush.msra.mxu0 %v2702
      %2745 = vmatpush.msra.mxu0 %v2700
      %2746 = vmatpush.msra.mxu0 %v2682
      %2747 = vmatpush.msra.mxu0 %v2680
      %2748 = vmatpush.msra.mxu0 %v2656
      %2749 = vmatpush.msra.mxu0 %v2654
      %2750 = vmatpush.msra.mxu0 %v2630
      %2751 = vmatpush.msra.mxu0 %v2628
      %2752 = vmatpush.msra.mxu0 %v2610
      %2753 = vmatpush.msra.mxu0 %v2608
      %2754 = vmatpush.msra.mxu0 %v2584
      %2755 = vmatpush.msra.mxu0 %v2582
      %2756 = vmatpush.msra.mxu0 %v2558
      %2757 = vmatpush.msra.mxu0 %v2556
      %2758 = vmatpush.msra.mxu0 %v2508
      %2759 = vmatpush.msra.mxu0 %v2506
      %2760 = vmatmul.f32.gmra.mxu0 %v2734
      %v2761 = vpop.f32.mrf.mxu0
      %v2762 = vadd.f32 0.0, %v2761
      %2763 = vmatmul.f32.gmra.mxu0 %v2736
      %v2764 = vpop.f32.mrf.mxu0
      %v2765 = vadd.f32 0.0, %v2764
      %2766 = vdwg.mxu0
      %2767 = vmatpush.msra.mxu0 0.0
      %2768 = vmatpush.msra.mxu0 0.0
      %2769 = vmatpush.msra.mxu0 0.0
      %2770 = vmatpush.msra.mxu0 0.0
      %2771 = vmatpush.msra.mxu0 0.0
      %2772 = vmatpush.msra.mxu0 0.0
      %2773 = vmatpush.msra.mxu0 0.0
      %2774 = vmatpush.msra.mxu0 0.0
      %2775 = vmatpush.msra.mxu0 0.0
      %2776 = vmatpush.msra.mxu0 0.0
      %2777 = vmatpush.msra.mxu0 0.0
      %2778 = vmatpush.msra.mxu0 0.0
      %2779 = vmatpush.msra.mxu0 0.0
      %2780 = vmatpush.msra.mxu0 0.0
      %2781 = vmatpush.msra.mxu0 %v2728
      %2782 = vmatpush.msra.mxu0 %v2726
      %2783 = vmatmul.f32.gmra.mxu0 %v2739
      %v2784 = vpop.f32.mrf.mxu0
      %v2785 = vadd.f32 %v2762, %v2784
      %2786 = vmatmul.f32.gmra.mxu0 %v2742
      %v2787 = vpop.f32.mrf.mxu0
      %v2788 = vadd.f32 %v2765, %v2787
      %2789 = vdwg.mxu0
      %2790 = vmatpush.msra.mxu0 %v2703
      %2791 = vmatpush.msra.mxu0 %v2701
      %2792 = vmatpush.msra.mxu0 %v2683
      %2793 = vmatpush.msra.mxu0 %v2681
      %2794 = vmatpush.msra.mxu0 %v2657
      %2795 = vmatpush.msra.mxu0 %v2655
      %2796 = vmatpush.msra.mxu0 %v2631
      %2797 = vmatpush.msra.mxu0 %v2629
      %2798 = vmatpush.msra.mxu0 %v2611
      %2799 = vmatpush.msra.mxu0 %v2609
      %2800 = vmatpush.msra.mxu0 %v2585
      %2801 = vmatpush.msra.mxu0 %v2583
      %2802 = vmatpush.msra.mxu0 %v2559
      %2803 = vmatpush.msra.mxu0 %v2557
      %2804 = vmatpush.msra.mxu0 %v2509
      %2805 = vmatpush.msra.mxu0 %v2507
      %2806 = vmatmul.f32.gmra.mxu0 %v2734
      %v2807 = vpop.f32.mrf.mxu0
      %v2808 = vadd.f32 0.0, %v2807
      %2809 = vmatmul.f32.gmra.mxu0 %v2736
      %v2810 = vpop.f32.mrf.mxu0
      %v2811 = vadd.f32 0.0, %v2810
      %2812 = vdwg.mxu0
      %2813 = vmatpush.msra.mxu0 0.0
      %2814 = vmatpush.msra.mxu0 0.0
      %2815 = vmatpush.msra.mxu0 0.0
      %2816 = vmatpush.msra.mxu0 0.0
      %2817 = vmatpush.msra.mxu0 0.0
      %2818 = vmatpush.msra.mxu0 0.0
      %2819 = vmatpush.msra.mxu0 0.0
      %2820 = vmatpush.msra.mxu0 0.0
      %2821 = vmatpush.msra.mxu0 0.0
      %2822 = vmatpush.msra.mxu0 0.0
      %2823 = vmatpush.msra.mxu0 0.0
      %2824 = vmatpush.msra.mxu0 0.0
      %2825 = vmatpush.msra.mxu0 0.0
      %2826 = vmatpush.msra.mxu0 0.0
      %2827 = vmatpush.msra.mxu0 %v2729
      %2828 = vmatpush.msra.mxu0 %v2727
      %2829 = vmatmul.f32.gmra.mxu0 %v2739
      %v2830 = vpop.f32.mrf.mxu0
      %v2831 = vadd.f32 %v2808, %v2830
      %2832 = vmatmul.f32.gmra.mxu0 %v2742
      %v2833 = vpop.f32.mrf.mxu0
      %v2834 = vadd.f32 %v2811, %v2833
      %2835 = vdwg.mxu0
      %v2836 = vld [vmem:[%s23] sm:$0xff]
      %v2837 = vld [vmem:[%s23 + $0x8] sm:$0xff]
      %2839 = vset.pattern.permute.xlu0 0
      %2840 = vperm.xlu0 %2839, %v2836
      %v2841 = vpop.permute.xlu0 %2840
      %2844 = vset.pattern.permute.xlu0 0
      %2845 = vperm.xlu0 %2844, %v2837
      %v2846 = vpop.permute.xlu0 %2845
      %v2848 = vmul.f32 %v2785, %v2841
      %v2849 = vmul.f32 %v2831, %v2841
      %v2850 = vmul.f32 %v2788, %v2846
      %v2851 = vmul.f32 %v2834, %v2846
      %v2852 = vld [vmem:[%s24] sm:$0xff]
      %v2853 = vld [vmem:[%s24 + $0x8] sm:$0xff]
      %2855 = vset.pattern.permute.xlu0 0
      %2856 = vperm.xlu0 %2855, %v2852
      %v2857 = vpop.permute.xlu0 %2856
      %2860 = vset.pattern.permute.xlu0 0
      %2861 = vperm.xlu0 %2860, %v2853
      %v2862 = vpop.permute.xlu0 %2861
      %v2864 = vadd.f32 %v2848, %v2857
      %v2865 = vadd.f32 %v2849, %v2857
      %v2866 = vadd.f32 %v2850, %v2862
      %v2867 = vadd.f32 %v2851, %v2862
      %v2868 = vmax.f32 %v2864, 0.0
      %v2869 = vmax.f32 %v2865, 0.0
      %v2870 = vmax.f32 %v2866, 0.0
      %v2871 = vmax.f32 %v2867, 0.0
      %2872 = vst [vmem:[%s764] sm:$0xff] %v2868
      %2873 = vst [vmem:[%s764 + $0x8] sm:$0xff] %v2869
      %2874 = vst [vmem:[%s764 + $0x10] sm:$0xff] %v2870
      %2875 = vst [vmem:[%s764 + $0x18] sm:$0xff] %v2871
      %p2876 = scmp.lt.s32.totalorder %s36, 1
      %s2877 = scalar_select %p2876, %s36, 1
      %s2878 = smul.addr %s2877, 4
      %s2879 = smul.addr %s2878, 8
      %s2880 = scalar_lea.vmem %s25, %s2879
      // Predicated region
      $region121: #{iconv_forward.1} parent=119 // pred_check
        %p2881 = pneg %p584
      $region122: #{iconv_forward.1} parent=119 // pred_check_branch
        %2883 = sbr.rel (%p2881) target = $region124
      $region123: #{iconv_forward.1} parent=119 // pred_region
        _
      $region124: #{iconv_forward.1} parent=119 // pred_fallthru
        _
    $region120: #{iconv_forward.1} parent=5 // pred_fallthru
      _
    %p2884 = scmp.le.s32.totalorder 2, %s31
    // Predicated region
    $region125: #{iconv_forward.1} parent=5 // pred_check
      %p2885 = pneg %p2884
    $region126: #{iconv_forward.1} parent=5 // pred_check_branch
      %2887 = sbr.rel (%p2885) target = $region128
    $region127: #{iconv_forward.1} parent=5 // pred_region
      %s2888 = ssub.s32 %s31, 2
      // Predicated region
      $region129: #{iconv_forward.1} parent=127 // pred_check
        %p2889 = pneg %p590
      $region130: #{iconv_forward.1} parent=127 // pred_check_branch
        %2891 = sbr.rel (%p2889) target = $region132
      $region131: #{iconv_forward.1} parent=127 // pred_region
        %p2892 = scmp.lt.s32.totalorder %s37, 1
        %s2893 = scalar_select %p2892, %s37, 1
        %s2894 = smul.addr %s2893, 4
        %s2895 = smul.addr %s2894, 8
        %s2896 = scalar_lea.vmem %s25, %s2895
      $region132: #{iconv_forward.1} parent=127 // pred_fallthru
        _
    $region128: #{iconv_forward.1} parent=5 // pred_fallthru
      _
  $region6: #{iconv_forward.1} parent=0 // loop_footer
    %s35 = sadd.s32 1, %s31
  $region7: #{iconv_forward.1} parent=0 // loop_footer_branch
    %30 = sbr.rel target = $region3
  $region8: #{iconv_forward.1} parent=0 // loop_exit
    _

</llo_original>
